<compile_context>
chip_gen: v5e
topology: v5e:2x2
jax: 0.10.0
libtpu: 0.0.40
codegen_flags: <defaults>
</compile_context>

<pallas_src>
import math
import functools

import jax
import jax.numpy as jnp
from jax.experimental import pallas as pl
from jax.experimental.pallas import tpu as pltpu


# ----------------------------------------------------------------------------
# Fused kernel: (one batch element per grid step)
#   embs*mask -> BiLSTM layer0 -> BiLSTM layer1 -> MHA -> LayerNorm -> classifier
# ----------------------------------------------------------------------------
def bilstm_attn_kernel(x_ref, mcol_ref, mrow_ref,
                       wih0_ref, whh0_ref, b0_ref,
                       wih1_ref, whh1_ref, b1_ref,
                       win_ref, bin_ref, wo_ref, bo_ref,
                       gamma_ref, beta_ref, wc_ref, bc_ref,
                       out_ref,
                       zin_ref, lf_ref, lb_ref,
                       *, num_heads):
    _, S, E = x_ref.shape
    H2 = whh0_ref.shape[0]          # 2H  (whh is the fused block-diagonal (2H, 8H))
    H = H2 // 2
    E2 = H2                          # hidden_size * 2
    Lp = out_ref.shape[2]            # lane-dense padded label count
    nh = num_heads
    hd = E2 // nh
    f32 = jnp.float32

    # PyTorch gate order: i, f, g, o  (z is (1, 4H), c is (1, H))
    def gates(z, c):
        i = jax.nn.sigmoid(z[:, 0:H])
        f = jax.nn.sigmoid(z[:, H:2 * H])
        g = jnp.tanh(z[:, 2 * H:3 * H])
        o = jax.nn.sigmoid(z[:, 3 * H:4 * H])
        c_new = f * c + i * g
        return o * jnp.tanh(c_new), c_new

    # Fused fwd+bwd recurrence.  zin_ref holds the hoisted input projection
    # (S, 8H) = [fwd gates | bwd gates] with the (b_ih + b_hh) bias folded in.
    # The carried state packs both directions: h_cat/c_cat = [h_f | h_b] (1, 2H),
    # so h_cat @ whh_bd is a single 256-lane MXU op per timestep.
    def run_recurrence(whh_bd):
        def step(tau, carry):
            h_cat, c_cat = carry
            rt = S - 1 - tau                                   # backward time index
            zr = jnp.dot(h_cat, whh_bd, preferred_element_type=f32)   # (1, 8H)
            z_f = zin_ref[pl.ds(tau, 1), 0:4 * H] + zr[:, 0:4 * H]
            z_b = zin_ref[pl.ds(rt, 1), 4 * H:8 * H] + zr[:, 4 * H:8 * H]
            h_f, c_f = gates(z_f, c_cat[:, 0:H])
            h_b, c_b = gates(z_b, c_cat[:, H:2 * H])
            lf_ref[pl.ds(tau, 1), :] = h_f                     # fwd output at time tau
            lb_ref[pl.ds(rt, 1), :] = h_b                      # bwd output at time rt
            return (jnp.concatenate([h_f, h_b], axis=-1),
                    jnp.concatenate([c_f, c_b], axis=-1))

        init = (jnp.zeros((1, E2), f32), jnp.zeros((1, E2), f32))
        jax.lax.fori_loop(0, S, step, init, unroll=True)

    # ---- embeddings * input_mask.float().unsqueeze(2) ----
    # TODO(synk): SpatialDropout(p=0.1) on the embeddings is train-only; eval identity.
    x = x_ref[0]                     # (S, E)
    mcol = mcol_ref[0]               # (S, 1) float mask
    xm = x * mcol

    # ---- BiLSTM layer 0: hoisted input projection (one big matmul), recurrence ----
    zin_ref[...] = jnp.dot(xm, wih0_ref[...], preferred_element_type=f32) + b0_ref[...]
    run_recurrence(whh0_ref[...])

    # TODO(synk): nn.LSTM inter-layer dropout (p=0.1) is train-only; eval identity.
    # ---- BiLSTM layer 1 ----
    l0 = jnp.concatenate([lf_ref[...], lb_ref[...]], axis=-1)          # (S, 2H)
    zin_ref[...] = jnp.dot(l0, wih1_ref[...], preferred_element_type=f32) + b1_ref[...]
    run_recurrence(whh1_ref[...])
    l1 = jnp.concatenate([lf_ref[...], lb_ref[...]], axis=-1)          # (S, 2H)

    # ---- MultiheadAttention (1/sqrt(hd) pre-folded into w_in/b_in q columns) ----
    qkv = jnp.dot(l1, win_ref[...], preferred_element_type=f32) + bin_ref[...]  # (S, 3*E2)
    q3 = jnp.stack([qkv[:, h * hd:(h + 1) * hd] for h in range(nh)], axis=0)            # (nh,S,hd)
    k3 = jnp.stack([qkv[:, E2 + h * hd:E2 + (h + 1) * hd] for h in range(nh)], axis=0)
    v3 = jnp.stack([qkv[:, 2 * E2 + h * hd:2 * E2 + (h + 1) * hd] for h in range(nh)], axis=0)

    # scores = q @ k^T, batched over heads: (nh, S, S)
    scores = jax.lax.dot_general(q3, k3, (((2,), (2,)), ((0,), (0,))),
                                 preferred_element_type=f32)
    # PyTorch float key_padding_mask semantics: the (0/1) float mask is added
    # verbatim to the attention logits (padding is NOT set to -inf).
    scores = scores + mrow_ref[...]                                     # (1,1,S) broadcast

    m = jnp.max(scores, axis=-1, keepdims=True)
    p = jnp.exp(scores - m)
    p = p * pl.reciprocal(jnp.sum(p, axis=-1, keepdims=True), approx=True)

    ctx3 = jax.lax.dot_general(p, v3, (((2,), (1,)), ((0,), (0,))),
                               preferred_element_type=f32)              # (nh, S, hd)
    ctx = jnp.concatenate([ctx3[h] for h in range(nh)], axis=-1)        # (S, E2)

    attn = jnp.dot(ctx, wo_ref[...], preferred_element_type=f32) + bo_ref[...]

    # ---- LayerNorm(hidden_size * 2), eps=1e-5, elementwise affine ----
    mu = jnp.mean(attn, axis=-1, keepdims=True)
    var = jnp.mean(jnp.square(attn - mu), axis=-1, keepdims=True)
    ln = (attn - mu) * jax.lax.rsqrt(var + 1e-5) * gamma_ref[...] + beta_ref[...]

    # ---- classifier, lane-dense padded output (Lp = 128 columns) ----
    logits = jnp.dot(ln, wc_ref[...], preferred_element_type=f32) + bc_ref[...]  # (S, Lp)
    out_ref[0] = logits


# ----------------------------------------------------------------------------
# Synthetic parameter init (per-direction, PyTorch-like) + packing into the
# fused layouts the kernel consumes.
# ----------------------------------------------------------------------------
def init_params(key, vocab_size, E, H, num_labels):
    E2 = 2 * H
    ks = jax.random.split(key, 16)
    u = lambda k, shape, s: jax.random.uniform(k, shape, jnp.float32, -s, s)
    kH = 1.0 / math.sqrt(H)
    kE2 = 1.0 / math.sqrt(E2)
    return dict(
        embedding=jax.random.normal(ks[0], (vocab_size, E), jnp.float32) * 0.1,
        # LSTM weights pre-transposed to (in_features, 4H); gate order i,f,g,o.
        wih0_f=u(ks[1], (E, 4 * H), kH),   wih0_b=u(ks[2], (E, 4 * H), kH),
        whh0_f=u(ks[3], (H, 4 * H), kH),   whh0_b=u(ks[4], (H, 4 * H), kH),
        b0_f=u(ks[5], (1, 4 * H), kH),     b0_b=u(ks[6], (1, 4 * H), kH),
        wih1_f=u(ks[7], (E2, 4 * H), kH),  wih1_b=u(ks[8], (E2, 4 * H), kH),
        whh1_f=u(ks[9], (H, 4 * H), kH),   whh1_b=u(ks[10], (H, 4 * H), kH),
        b1_f=u(ks[11], (1, 4 * H), kH),    b1_b=u(ks[12], (1, 4 * H), kH),
        # MultiheadAttention in/out projections, pre-transposed (in, out), cols [q|k|v].
        w_in=u(ks[13], (E2, 3 * E2), kE2), b_in=jnp.zeros((1, 3 * E2), jnp.float32),
        w_out=u(ks[14], (E2, E2), kE2),    b_out=jnp.zeros((1, E2), jnp.float32),
        gamma=jnp.ones((1, E2), jnp.float32), beta=jnp.zeros((1, E2), jnp.float32),
        w_cls=u(ks[15], (E2, num_labels), kE2),
        b_cls=jnp.zeros((1, num_labels), jnp.float32),
    )


def _block_diag2(a, b):
    ra, ca = a.shape
    rb, cb = b.shape
    top = jnp.concatenate([a, jnp.zeros((ra, cb), a.dtype)], axis=1)
    bot = jnp.concatenate([jnp.zeros((rb, ca), b.dtype), b], axis=1)
    return jnp.concatenate([top, bot], axis=0)


def pack_params(p, num_heads, l_pad=128):
    """Fuse fwd/bwd LSTM weights, fold the attention scale, pad the classifier."""
    E2 = p["w_out"].shape[0]
    hd = E2 // num_heads
    scale = 1.0 / math.sqrt(hd)
    L = p["w_cls"].shape[1]
    w_in = jnp.concatenate([p["w_in"][:, :E2] * scale, p["w_in"][:, E2:]], axis=1)
    b_in = jnp.concatenate([p["b_in"][:, :E2] * scale, p["b_in"][:, E2:]], axis=1)
    w_cls = jnp.zeros((E2, l_pad), jnp.float32).at[:, :L].set(p["w_cls"])
    b_cls = jnp.zeros((1, l_pad), jnp.float32).at[:, :L].set(p["b_cls"])
    return dict(
        embedding=p["embedding"],
        wih0=jnp.concatenate([p["wih0_f"], p["wih0_b"]], axis=1),          # (E, 8H)
        whh0_bd=_block_diag2(p["whh0_f"], p["whh0_b"]),                    # (2H, 8H)
        b0=jnp.concatenate([p["b0_f"], p["b0_b"]], axis=1),                # (1, 8H)
        wih1=jnp.concatenate([p["wih1_f"], p["wih1_b"]], axis=1),          # (2H, 8H)
        whh1_bd=_block_diag2(p["whh1_f"], p["whh1_b"]),                    # (2H, 8H)
        b1=jnp.concatenate([p["b1_f"], p["b1_b"]], axis=1),                # (1, 8H)
        w_in=w_in, b_in=b_in,
        w_out=p["w_out"], b_out=p["b_out"],
        gamma=p["gamma"], beta=p["beta"],
        w_cls=w_cls, b_cls=b_cls,
    )


# ----------------------------------------------------------------------------
# Wrapper
# ----------------------------------------------------------------------------
@functools.partial(jax.jit, static_argnames=("num_heads", "num_labels"))
def forward(packed, input_ids, input_mask, num_heads=8, num_labels=7):
    B, S = input_ids.shape
    E = packed["embedding"].shape[1]
    E2 = packed["whh0_bd"].shape[0]   # 2H
    H = E2 // 2
    Lp = packed["w_cls"].shape[1]

    # embedding gather kept as XLA glue
    embs = jnp.take(packed["embedding"], input_ids, axis=0)          # (B, S, E)
    maskf = input_mask.astype(jnp.float32)
    mask_col = maskf[:, :, None]                                      # (B, S, 1) for emb masking
    mask_row = maskf[:, None, :]                                      # (B, 1, S) additive attn mask

    def full(shape):
        n = len(shape)
        return pl.BlockSpec(shape, lambda b, _n=n: (0,) * _n)

    kernel = functools.partial(bilstm_attn_kernel, num_heads=num_heads)
    logits_pad = pl.pallas_call(
        kernel,
        out_shape=jax.ShapeDtypeStruct((B, S, Lp), jnp.float32),
        grid=(B,),
        in_specs=[
            pl.BlockSpec((1, S, E), lambda b: (b, 0, 0)),             # embeddings
            pl.BlockSpec((1, S, 1), lambda b: (b, 0, 0)),             # mask column form
            pl.BlockSpec((1, 1, S), lambda b: (b, 0, 0)),             # mask row form
            full((E, 8 * H)), full((E2, 8 * H)), full((1, 8 * H)),    # layer-0 LSTM
            full((E2, 8 * H)), full((E2, 8 * H)), full((1, 8 * H)),   # layer-1 LSTM
            full((E2, 3 * E2)), full((1, 3 * E2)),                    # MHA in_proj (q scaled)
            full((E2, E2)), full((1, E2)),                            # MHA out_proj
            full((1, E2)), full((1, E2)),                             # LayerNorm gamma/beta
            full((E2, Lp)), full((1, Lp)),                            # classifier (padded)
        ],
        out_specs=pl.BlockSpec((1, S, Lp), lambda b: (b, 0, 0)),
        scratch_shapes=[
            pltpu.VMEM((S, 8 * H), jnp.float32),   # hoisted gate pre-activations
            pltpu.VMEM((S, H), jnp.float32),       # forward-direction outputs
            pltpu.VMEM((S, H), jnp.float32),       # backward-direction outputs
        ],
        compiler_params=pltpu.CompilerParams(dimension_semantics=("parallel",)),
    )(embs, mask_col, mask_row,
      packed["wih0"], packed["whh0_bd"], packed["b0"],
      packed["wih1"], packed["whh1_bd"], packed["b1"],
      packed["w_in"], packed["b_in"], packed["w_out"], packed["b_out"],
      packed["gamma"], packed["beta"], packed["w_cls"], packed["b_cls"])

    return logits_pad[:, :, :num_labels]


if __name__ == "__main__":
    vocab_size, E, H = 50, 32, 32
    label2id = ["O", "B-PER", "I-PER", "B-LOC", "I-LOC", "B-ORG", "I-ORG"]
    L = len(label2id)
    B, S = 2, 8
    NH = 8

    key = jax.random.PRNGKey(0)
    kp, ki = jax.random.split(key)
    params = init_params(kp, vocab_size, E, H, L)
    packed = pack_params(params, NH)

    input_ids = jax.random.randint(ki, (B, S), 0, vocab_size, dtype=jnp.int32)
    input_mask = jnp.ones((B, S), jnp.int32).at[1, 6:].set(0)   # second sequence padded

    feats = forward(packed, input_ids, input_mask, num_heads=NH, num_labels=L)
    feats = jax.block_until_ready(feats)
    assert feats.shape == (B, S, L), feats.shape
    assert bool(jnp.all(jnp.isfinite(feats)))
    print("KERNEL_OK")
</pallas_src>

<mosaic_0001>
module attributes {stable_mosaic.version = 11 : i64} {
  func.func @bilstm_attn_kernel(%arg0: i32, %arg1: memref<1x8x32xf32, #tpu.memory_space<vmem>>, %arg2: memref<1x8x1xf32, #tpu.memory_space<vmem>>, %arg3: memref<1x1x8xf32, #tpu.memory_space<vmem>>, %arg4: memref<32x256xf32, #tpu.memory_space<vmem>>, %arg5: memref<64x256xf32, #tpu.memory_space<vmem>>, %arg6: memref<1x256xf32, #tpu.memory_space<vmem>>, %arg7: memref<64x256xf32, #tpu.memory_space<vmem>>, %arg8: memref<64x256xf32, #tpu.memory_space<vmem>>, %arg9: memref<1x256xf32, #tpu.memory_space<vmem>>, %arg10: memref<64x192xf32, #tpu.memory_space<vmem>>, %arg11: memref<1x192xf32, #tpu.memory_space<vmem>>, %arg12: memref<64x64xf32, #tpu.memory_space<vmem>>, %arg13: memref<1x64xf32, #tpu.memory_space<vmem>>, %arg14: memref<1x64xf32, #tpu.memory_space<vmem>>, %arg15: memref<1x64xf32, #tpu.memory_space<vmem>>, %arg16: memref<64x128xf32, #tpu.memory_space<vmem>>, %arg17: memref<1x128xf32, #tpu.memory_space<vmem>>, %arg18: memref<1x8x128xf32, #tpu.memory_space<vmem>>, %arg19: memref<8x256xf32, #tpu.memory_space<vmem>>, %arg20: memref<8x32xf32, #tpu.memory_space<vmem>>, %arg21: memref<8x32xf32, #tpu.memory_space<vmem>>) attributes {dimension_semantics = [#tpu.dimension_semantics<parallel>], iteration_bounds = array<i64: 2>, scalar_prefetch = 0 : i64, scratch_operands = 3 : i64, tpu.core_type = #tpu.core_type<tc>, window_params = [{transform_indices = @transform_0, window_bounds = array<i64: 1, 8, 32>}, {transform_indices = @transform_1, window_bounds = array<i64: 1, 8, 1>}, {transform_indices = @transform_2, window_bounds = array<i64: 1, 1, 8>}, {pipeline_mode = #tpu.pipeline_mode<synchronous>, transform_indices = @transform_3, window_bounds = array<i64: 32, 256>}, {pipeline_mode = #tpu.pipeline_mode<synchronous>, transform_indices = @transform_4, window_bounds = array<i64: 64, 256>}, {pipeline_mode = #tpu.pipeline_mode<synchronous>, transform_indices = @transform_5, window_bounds = array<i64: 1, 256>}, {pipeline_mode = #tpu.pipeline_mode<synchronous>, transform_indices = @transform_6, window_bounds = array<i64: 64, 256>}, {pipeline_mode = #tpu.pipeline_mode<synchronous>, transform_indices = @transform_7, window_bounds = array<i64: 64, 256>}, {pipeline_mode = #tpu.pipeline_mode<synchronous>, transform_indices = @transform_8, window_bounds = array<i64: 1, 256>}, {pipeline_mode = #tpu.pipeline_mode<synchronous>, transform_indices = @transform_9, window_bounds = array<i64: 64, 192>}, {pipeline_mode = #tpu.pipeline_mode<synchronous>, transform_indices = @transform_10, window_bounds = array<i64: 1, 192>}, {pipeline_mode = #tpu.pipeline_mode<synchronous>, transform_indices = @transform_11, window_bounds = array<i64: 64, 64>}, {pipeline_mode = #tpu.pipeline_mode<synchronous>, transform_indices = @transform_12, window_bounds = array<i64: 1, 64>}, {pipeline_mode = #tpu.pipeline_mode<synchronous>, transform_indices = @transform_13, window_bounds = array<i64: 1, 64>}, {pipeline_mode = #tpu.pipeline_mode<synchronous>, transform_indices = @transform_14, window_bounds = array<i64: 1, 64>}, {pipeline_mode = #tpu.pipeline_mode<synchronous>, transform_indices = @transform_15, window_bounds = array<i64: 64, 128>}, {pipeline_mode = #tpu.pipeline_mode<synchronous>, transform_indices = @transform_16, window_bounds = array<i64: 1, 128>}, {transform_indices = @transform_17, window_bounds = array<i64: 1, 8, 128>}]} {
    %c0 = arith.constant 0 : index
    %c0_0 = arith.constant 0 : index
    %c0_1 = arith.constant 0 : index
    %0 = vector.load %arg1[%c0, %c0_0, %c0_1] : memref<1x8x32xf32, #tpu.memory_space<vmem>>, vector<1x8x32xf32>
    %1 = vector.shape_cast %0 : vector<1x8x32xf32> to vector<8x32xf32>
    %c0_2 = arith.constant 0 : index
    %c0_3 = arith.constant 0 : index
    %c0_4 = arith.constant 0 : index
    %2 = vector.load %arg2[%c0_2, %c0_3, %c0_4] : memref<1x8x1xf32, #tpu.memory_space<vmem>>, vector<1x8x1xf32>
    %3 = vector.shape_cast %2 : vector<1x8x1xf32> to vector<8x1xf32>
    %4 = vector.broadcast %3 : vector<8x1xf32> to vector<8x32xf32>
    %5 = arith.mulf %1, %4 : vector<8x32xf32>
    %c0_5 = arith.constant 0 : index
    %c0_6 = arith.constant 0 : index
    %6 = vector.load %arg4[%c0_5, %c0_6] : memref<32x256xf32, #tpu.memory_space<vmem>>, vector<32x256xf32>
    %cst = arith.constant dense<0.000000e+00> : vector<8x256xf32>
    %7 = tpu.matmul %5, %6, %cst {dimension_numbers = #tpu.dot_dimension_numbers<[1], [0], [0], [1], [0, 0, 1, 1], [], []>} : vector<8x32xf32>, vector<32x256xf32>, vector<8x256xf32> -> vector<8x256xf32>
    %c0_7 = arith.constant 0 : index
    %c0_8 = arith.constant 0 : index
    %8 = vector.load %arg6[%c0_7, %c0_8] : memref<1x256xf32, #tpu.memory_space<vmem>>, vector<1x256xf32>
    %9 = vector.broadcast %8 : vector<1x256xf32> to vector<8x256xf32>
    %10 = arith.addf %7, %9 : vector<8x256xf32>
    %c0_9 = arith.constant 0 : index
    %c0_10 = arith.constant 0 : index
    %11 = vector.load %arg19[%c0_9, %c0_10] : memref<8x256xf32, #tpu.memory_space<vmem>>, vector<8x256xf32>
    tpu.vector_store %arg19[%c0_9, %c0_10], %10 {strides = array<i32>} : memref<8x256xf32, #tpu.memory_space<vmem>>, vector<8x256xf32>,
    %c0_11 = arith.constant 0 : index
    %c0_12 = arith.constant 0 : index
    %12 = vector.load %arg5[%c0_11, %c0_12] : memref<64x256xf32, #tpu.memory_space<vmem>>, vector<64x256xf32>
    %cst_13 = arith.constant 0.000000e+00 : f32
    %13 = vector.broadcast %cst_13 : f32 to vector<1x64xf32>
    %cst_14 = arith.constant 0.000000e+00 : f32
    %14 = vector.broadcast %cst_14 : f32 to vector<1x64xf32>
    %c0_i32 = arith.constant 0 : i32
    %c7_i32 = arith.constant 7 : i32
    %15 = arith.subi %c7_i32, %c0_i32 : i32
    %cst_15 = arith.constant dense<0.000000e+00> : vector<1x256xf32>
    %16 = tpu.matmul %13, %12, %cst_15 {dimension_numbers = #tpu.dot_dimension_numbers<[1], [0], [0], [1], [0, 0, 1, 1], [], []>} : vector<1x64xf32>, vector<64x256xf32>, vector<1x256xf32> -> vector<1x256xf32>
    %17 = arith.index_cast %c0_i32 : i32 to index
    %c0_16 = arith.constant 0 : index
    %18 = vector.load %arg19[%17, %c0_16] : memref<8x256xf32, #tpu.memory_space<vmem>>, vector<1x128xf32>
    %19 = vector.extract_strided_slice %16 {offsets = [0, 0], sizes = [1, 128], strides = [1, 1]} : vector<1x256xf32> to vector<1x128xf32>
    %20 = arith.addf %18, %19 : vector<1x128xf32>
    %21 = arith.index_cast %15 : i32 to index
    %c128 = arith.constant 128 : index
    %22 = vector.load %arg19[%21, %c128] : memref<8x256xf32, #tpu.memory_space<vmem>>, vector<1x128xf32>
    %23 = vector.extract_strided_slice %16 {offsets = [0, 128], sizes = [1, 128], strides = [1, 1]} : vector<1x256xf32> to vector<1x128xf32>
    %24 = arith.addf %22, %23 : vector<1x128xf32>
    %25 = vector.extract_strided_slice %14 {offsets = [0, 0], sizes = [1, 32], strides = [1, 1]} : vector<1x64xf32> to vector<1x32xf32>
    %26 = vector.extract_strided_slice %20 {offsets = [0, 0], sizes = [1, 32], strides = [1, 1]} : vector<1x128xf32> to vector<1x32xf32>
    %27 = arith.negf %26 : vector<1x32xf32>
    %28 = math.exp %27 : vector<1x32xf32>
    %cst_17 = arith.constant 1.000000e+00 : f32
    %29 = vector.broadcast %cst_17 : f32 to vector<1x32xf32>
    %30 = arith.addf %29, %28 : vector<1x32xf32>
    %31 = arith.divf %29, %30 : vector<1x32xf32>
    %32 = vector.extract_strided_slice %20 {offsets = [0, 32], sizes = [1, 32], strides = [1, 1]} : vector<1x128xf32> to vector<1x32xf32>
    %33 = arith.negf %32 : vector<1x32xf32>
    %34 = math.exp %33 : vector<1x32xf32>
    %cst_18 = arith.constant 1.000000e+00 : f32
    %35 = vector.broadcast %cst_18 : f32 to vector<1x32xf32>
    %36 = arith.addf %35, %34 : vector<1x32xf32>
    %37 = arith.divf %35, %36 : vector<1x32xf32>
    %38 = vector.extract_strided_slice %20 {offsets = [0, 64], sizes = [1, 32], strides = [1, 1]} : vector<1x128xf32> to vector<1x32xf32>
    %39 = math.tanh %38 : vector<1x32xf32>
    %40 = vector.extract_strided_slice %20 {offsets = [0, 96], sizes = [1, 32], strides = [1, 1]} : vector<1x128xf32> to vector<1x32xf32>
    %41 = arith.negf %40 : vector<1x32xf32>
    %42 = math.exp %41 : vector<1x32xf32>
    %cst_19 = arith.constant 1.000000e+00 : f32
    %43 = vector.broadcast %cst_19 : f32 to vector<1x32xf32>
    %44 = arith.addf %43, %42 : vector<1x32xf32>
    %45 = arith.divf %43, %44 : vector<1x32xf32>
    %46 = arith.mulf %37, %25 : vector<1x32xf32>
    %47 = arith.mulf %31, %39 : vector<1x32xf32>
    %48 = arith.addf %46, %47 : vector<1x32xf32>
    %49 = math.tanh %48 : vector<1x32xf32>
    %50 = arith.mulf %45, %49 : vector<1x32xf32>
    %51 = vector.extract_strided_slice %14 {offsets = [0, 32], sizes = [1, 32], strides = [1, 1]} : vector<1x64xf32> to vector<1x32xf32>
    %52 = vector.extract_strided_slice %24 {offsets = [0, 0], sizes = [1, 32], strides = [1, 1]} : vector<1x128xf32> to vector<1x32xf32>
    %53 = arith.negf %52 : vector<1x32xf32>
    %54 = math.exp %53 : vector<1x32xf32>
    %cst_20 = arith.constant 1.000000e+00 : f32
    %55 = vector.broadcast %cst_20 : f32 to vector<1x32xf32>
    %56 = arith.addf %55, %54 : vector<1x32xf32>
    %57 = arith.divf %55, %56 : vector<1x32xf32>
    %58 = vector.extract_strided_slice %24 {offsets = [0, 32], sizes = [1, 32], strides = [1, 1]} : vector<1x128xf32> to vector<1x32xf32>
    %59 = arith.negf %58 : vector<1x32xf32>
    %60 = math.exp %59 : vector<1x32xf32>
    %cst_21 = arith.constant 1.000000e+00 : f32
    %61 = vector.broadcast %cst_21 : f32 to vector<1x32xf32>
    %62 = arith.addf %61, %60 : vector<1x32xf32>
    %63 = arith.divf %61, %62 : vector<1x32xf32>
    %64 = vector.extract_strided_slice %24 {offsets = [0, 64], sizes = [1, 32], strides = [1, 1]} : vector<1x128xf32> to vector<1x32xf32>
    %65 = math.tanh %64 : vector<1x32xf32>
    %66 = vector.extract_strided_slice %24 {offsets = [0, 96], sizes = [1, 32], strides = [1, 1]} : vector<1x128xf32> to vector<1x32xf32>
    %67 = arith.negf %66 : vector<1x32xf32>
    %68 = math.exp %67 : vector<1x32xf32>
    %cst_22 = arith.constant 1.000000e+00 : f32
    %69 = vector.broadcast %cst_22 : f32 to vector<1x32xf32>
    %70 = arith.addf %69, %68 : vector<1x32xf32>
    %71 = arith.divf %69, %70 : vector<1x32xf32>
    %72 = arith.mulf %63, %51 : vector<1x32xf32>
    %73 = arith.mulf %57, %65 : vector<1x32xf32>
    %74 = arith.addf %72, %73 : vector<1x32xf32>
    %75 = math.tanh %74 : vector<1x32xf32>
    %76 = arith.mulf %71, %75 : vector<1x32xf32>
    %77 = arith.index_cast %c0_i32 : i32 to index
    %c0_23 = arith.constant 0 : index
    %78 = vector.load %arg20[%77, %c0_23] : memref<8x32xf32, #tpu.memory_space<vmem>>, vector<1x32xf32>
    tpu.vector_store %arg20[%77, %c0_23], %50 {strides = array<i32>} : memref<8x32xf32, #tpu.memory_space<vmem>>, vector<1x32xf32>,
    %79 = arith.index_cast %15 : i32 to index
    %c0_24 = arith.constant 0 : index
    %80 = vector.load %arg21[%79, %c0_24] : memref<8x32xf32, #tpu.memory_space<vmem>>, vector<1x32xf32>
    tpu.vector_store %arg21[%79, %c0_24], %76 {strides = array<i32>} : memref<8x32xf32, #tpu.memory_space<vmem>>, vector<1x32xf32>,
    %81 = tpu.concatenate %50, %76 in 1 : vector<1x32xf32>, vector<1x32xf32> -> vector<1x64xf32>
    %82 = tpu.concatenate %48, %74 in 1 : vector<1x32xf32>, vector<1x32xf32> -> vector<1x64xf32>
    %c1_i32 = arith.constant 1 : i32
    %c7_i32_25 = arith.constant 7 : i32
    %83 = arith.subi %c7_i32_25, %c1_i32 : i32
    %cst_26 = arith.constant dense<0.000000e+00> : vector<1x256xf32>
    %84 = tpu.matmul %81, %12, %cst_26 {dimension_numbers = #tpu.dot_dimension_numbers<[1], [0], [0], [1], [0, 0, 1, 1], [], []>} : vector<1x64xf32>, vector<64x256xf32>, vector<1x256xf32> -> vector<1x256xf32>
    %85 = arith.index_cast %c1_i32 : i32 to index
    %c0_27 = arith.constant 0 : index
    %86 = vector.load %arg19[%85, %c0_27] : memref<8x256xf32, #tpu.memory_space<vmem>>, vector<1x128xf32>
    %87 = vector.extract_strided_slice %84 {offsets = [0, 0], sizes = [1, 128], strides = [1, 1]} : vector<1x256xf32> to vector<1x128xf32>
    %88 = arith.addf %86, %87 : vector<1x128xf32>
    %89 = arith.index_cast %83 : i32 to index
    %c128_28 = arith.constant 128 : index
    %90 = vector.load %arg19[%89, %c128_28] : memref<8x256xf32, #tpu.memory_space<vmem>>, vector<1x128xf32>
    %91 = vector.extract_strided_slice %84 {offsets = [0, 128], sizes = [1, 128], strides = [1, 1]} : vector<1x256xf32> to vector<1x128xf32>
    %92 = arith.addf %90, %91 : vector<1x128xf32>
    %93 = vector.extract_strided_slice %82 {offsets = [0, 0], sizes = [1, 32], strides = [1, 1]} : vector<1x64xf32> to vector<1x32xf32>
    %94 = vector.extract_strided_slice %88 {offsets = [0, 0], sizes = [1, 32], strides = [1, 1]} : vector<1x128xf32> to vector<1x32xf32>
    %95 = arith.negf %94 : vector<1x32xf32>
    %96 = math.exp %95 : vector<1x32xf32>
    %cst_29 = arith.constant 1.000000e+00 : f32
    %97 = vector.broadcast %cst_29 : f32 to vector<1x32xf32>
    %98 = arith.addf %97, %96 : vector<1x32xf32>
    %99 = arith.divf %97, %98 : vector<1x32xf32>
    %100 = vector.extract_strided_slice %88 {offsets = [0, 32], sizes = [1, 32], strides = [1, 1]} : vector<1x128xf32> to vector<1x32xf32>
    %101 = arith.negf %100 : vector<1x32xf32>
    %102 = math.exp %101 : vector<1x32xf32>
    %cst_30 = arith.constant 1.000000e+00 : f32
    %103 = vector.broadcast %cst_30 : f32 to vector<1x32xf32>
    %104 = arith.addf %103, %102 : vector<1x32xf32>
    %105 = arith.divf %103, %104 : vector<1x32xf32>
    %106 = vector.extract_strided_slice %88 {offsets = [0, 64], sizes = [1, 32], strides = [1, 1]} : vector<1x128xf32> to vector<1x32xf32>
    %107 = math.tanh %106 : vector<1x32xf32>
    %108 = vector.extract_strided_slice %88 {offsets = [0, 96], sizes = [1, 32], strides = [1, 1]} : vector<1x128xf32> to vector<1x32xf32>
    %109 = arith.negf %108 : vector<1x32xf32>
    %110 = math.exp %109 : vector<1x32xf32>
    %cst_31 = arith.constant 1.000000e+00 : f32
    %111 = vector.broadcast %cst_31 : f32 to vector<1x32xf32>
    %112 = arith.addf %111, %110 : vector<1x32xf32>
    %113 = arith.divf %111, %112 : vector<1x32xf32>
    %114 = arith.mulf %105, %93 : vector<1x32xf32>
    %115 = arith.mulf %99, %107 : vector<1x32xf32>
    %116 = arith.addf %114, %115 : vector<1x32xf32>
    %117 = math.tanh %116 : vector<1x32xf32>
    %118 = arith.mulf %113, %117 : vector<1x32xf32>
    %119 = vector.extract_strided_slice %82 {offsets = [0, 32], sizes = [1, 32], strides = [1, 1]} : vector<1x64xf32> to vector<1x32xf32>
    %120 = vector.extract_strided_slice %92 {offsets = [0, 0], sizes = [1, 32], strides = [1, 1]} : vector<1x128xf32> to vector<1x32xf32>
    %121 = arith.negf %120 : vector<1x32xf32>
    %122 = math.exp %121 : vector<1x32xf32>
    %cst_32 = arith.constant 1.000000e+00 : f32
    %123 = vector.broadcast %cst_32 : f32 to vector<1x32xf32>
    %124 = arith.addf %123, %122 : vector<1x32xf32>
    %125 = arith.divf %123, %124 : vector<1x32xf32>
    %126 = vector.extract_strided_slice %92 {offsets = [0, 32], sizes = [1, 32], strides = [1, 1]} : vector<1x128xf32> to vector<1x32xf32>
    %127 = arith.negf %126 : vector<1x32xf32>
    %128 = math.exp %127 : vector<1x32xf32>
    %cst_33 = arith.constant 1.000000e+00 : f32
    %129 = vector.broadcast %cst_33 : f32 to vector<1x32xf32>
    %130 = arith.addf %129, %128 : vector<1x32xf32>
    %131 = arith.divf %129, %130 : vector<1x32xf32>
    %132 = vector.extract_strided_slice %92 {offsets = [0, 64], sizes = [1, 32], strides = [1, 1]} : vector<1x128xf32> to vector<1x32xf32>
    %133 = math.tanh %132 : vector<1x32xf32>
    %134 = vector.extract_strided_slice %92 {offsets = [0, 96], sizes = [1, 32], strides = [1, 1]} : vector<1x128xf32> to vector<1x32xf32>
    %135 = arith.negf %134 : vector<1x32xf32>
    %136 = math.exp %135 : vector<1x32xf32>
    %cst_34 = arith.constant 1.000000e+00 : f32
    %137 = vector.broadcast %cst_34 : f32 to vector<1x32xf32>
    %138 = arith.addf %137, %136 : vector<1x32xf32>
    %139 = arith.divf %137, %138 : vector<1x32xf32>
    %140 = arith.mulf %131, %119 : vector<1x32xf32>
    %141 = arith.mulf %125, %133 : vector<1x32xf32>
    %142 = arith.addf %140, %141 : vector<1x32xf32>
    %143 = math.tanh %142 : vector<1x32xf32>
    %144 = arith.mulf %139, %143 : vector<1x32xf32>
    %145 = arith.index_cast %c1_i32 : i32 to index
    %c0_35 = arith.constant 0 : index
    %146 = vector.load %arg20[%145, %c0_35] : memref<8x32xf32, #tpu.memory_space<vmem>>, vector<1x32xf32>
    tpu.vector_store %arg20[%145, %c0_35], %118 {strides = array<i32>} : memref<8x32xf32, #tpu.memory_space<vmem>>, vector<1x32xf32>,
    %147 = arith.index_cast %83 : i32 to index
    %c0_36 = arith.constant 0 : index
    %148 = vector.load %arg21[%147, %c0_36] : memref<8x32xf32, #tpu.memory_space<vmem>>, vector<1x32xf32>
    tpu.vector_store %arg21[%147, %c0_36], %144 {strides = array<i32>} : memref<8x32xf32, #tpu.memory_space<vmem>>, vector<1x32xf32>,
    %149 = tpu.concatenate %118, %144 in 1 : vector<1x32xf32>, vector<1x32xf32> -> vector<1x64xf32>
    %150 = tpu.concatenate %116, %142 in 1 : vector<1x32xf32>, vector<1x32xf32> -> vector<1x64xf32>
    %c2_i32 = arith.constant 2 : i32
    %c7_i32_37 = arith.constant 7 : i32
    %151 = arith.subi %c7_i32_37, %c2_i32 : i32
    %cst_38 = arith.constant dense<0.000000e+00> : vector<1x256xf32>
    %152 = tpu.matmul %149, %12, %cst_38 {dimension_numbers = #tpu.dot_dimension_numbers<[1], [0], [0], [1], [0, 0, 1, 1], [], []>} : vector<1x64xf32>, vector<64x256xf32>, vector<1x256xf32> -> vector<1x256xf32>
    %153 = arith.index_cast %c2_i32 : i32 to index
    %c0_39 = arith.constant 0 : index
    %154 = vector.load %arg19[%153, %c0_39] : memref<8x256xf32, #tpu.memory_space<vmem>>, vector<1x128xf32>
    %155 = vector.extract_strided_slice %152 {offsets = [0, 0], sizes = [1, 128], strides = [1, 1]} : vector<1x256xf32> to vector<1x128xf32>
    %156 = arith.addf %154, %155 : vector<1x128xf32>
    %157 = arith.index_cast %151 : i32 to index
    %c128_40 = arith.constant 128 : index
    %158 = vector.load %arg19[%157, %c128_40] : memref<8x256xf32, #tpu.memory_space<vmem>>, vector<1x128xf32>
    %159 = vector.extract_strided_slice %152 {offsets = [0, 128], sizes = [1, 128], strides = [1, 1]} : vector<1x256xf32> to vector<1x128xf32>
    %160 = arith.addf %158, %159 : vector<1x128xf32>
    %161 = vector.extract_strided_slice %150 {offsets = [0, 0], sizes = [1, 32], strides = [1, 1]} : vector<1x64xf32> to vector<1x32xf32>
    %162 = vector.extract_strided_slice %156 {offsets = [0, 0], sizes = [1, 32], strides = [1, 1]} : vector<1x128xf32> to vector<1x32xf32>
    %163 = arith.negf %162 : vector<1x32xf32>
    %164 = math.exp %163 : vector<1x32xf32>
    %cst_41 = arith.constant 1.000000e+00 : f32
    %165 = vector.broadcast %cst_41 : f32 to vector<1x32xf32>
    %166 = arith.addf %165, %164 : vector<1x32xf32>
    %167 = arith.divf %165, %166 : vector<1x32xf32>
    %168 = vector.extract_strided_slice %156 {offsets = [0, 32], sizes = [1, 32], strides = [1, 1]} : vector<1x128xf32> to vector<1x32xf32>
    %169 = arith.negf %168 : vector<1x32xf32>
    %170 = math.exp %169 : vector<1x32xf32>
    %cst_42 = arith.constant 1.000000e+00 : f32
    %171 = vector.broadcast %cst_42 : f32 to vector<1x32xf32>
    %172 = arith.addf %171, %170 : vector<1x32xf32>
    %173 = arith.divf %171, %172 : vector<1x32xf32>
    %174 = vector.extract_strided_slice %156 {offsets = [0, 64], sizes = [1, 32], strides = [1, 1]} : vector<1x128xf32> to vector<1x32xf32>
    %175 = math.tanh %174 : vector<1x32xf32>
    %176 = vector.extract_strided_slice %156 {offsets = [0, 96], sizes = [1, 32], strides = [1, 1]} : vector<1x128xf32> to vector<1x32xf32>
    %177 = arith.negf %176 : vector<1x32xf32>
    %178 = math.exp %177 : vector<1x32xf32>
    %cst_43 = arith.constant 1.000000e+00 : f32
    %179 = vector.broadcast %cst_43 : f32 to vector<1x32xf32>
    %180 = arith.addf %179, %178 : vector<1x32xf32>
    %181 = arith.divf %179, %180 : vector<1x32xf32>
    %182 = arith.mulf %173, %161 : vector<1x32xf32>
    %183 = arith.mulf %167, %175 : vector<1x32xf32>
    %184 = arith.addf %182, %183 : vector<1x32xf32>
    %185 = math.tanh %184 : vector<1x32xf32>
    %186 = arith.mulf %181, %185 : vector<1x32xf32>
    %187 = vector.extract_strided_slice %150 {offsets = [0, 32], sizes = [1, 32], strides = [1, 1]} : vector<1x64xf32> to vector<1x32xf32>
    %188 = vector.extract_strided_slice %160 {offsets = [0, 0], sizes = [1, 32], strides = [1, 1]} : vector<1x128xf32> to vector<1x32xf32>
    %189 = arith.negf %188 : vector<1x32xf32>
    %190 = math.exp %189 : vector<1x32xf32>
    %cst_44 = arith.constant 1.000000e+00 : f32
    %191 = vector.broadcast %cst_44 : f32 to vector<1x32xf32>
    %192 = arith.addf %191, %190 : vector<1x32xf32>
    %193 = arith.divf %191, %192 : vector<1x32xf32>
    %194 = vector.extract_strided_slice %160 {offsets = [0, 32], sizes = [1, 32], strides = [1, 1]} : vector<1x128xf32> to vector<1x32xf32>
    %195 = arith.negf %194 : vector<1x32xf32>
    %196 = math.exp %195 : vector<1x32xf32>
    %cst_45 = arith.constant 1.000000e+00 : f32
    %197 = vector.broadcast %cst_45 : f32 to vector<1x32xf32>
    %198 = arith.addf %197, %196 : vector<1x32xf32>
    %199 = arith.divf %197, %198 : vector<1x32xf32>
    %200 = vector.extract_strided_slice %160 {offsets = [0, 64], sizes = [1, 32], strides = [1, 1]} : vector<1x128xf32> to vector<1x32xf32>
    %201 = math.tanh %200 : vector<1x32xf32>
    %202 = vector.extract_strided_slice %160 {offsets = [0, 96], sizes = [1, 32], strides = [1, 1]} : vector<1x128xf32> to vector<1x32xf32>
    %203 = arith.negf %202 : vector<1x32xf32>
    %204 = math.exp %203 : vector<1x32xf32>
    %cst_46 = arith.constant 1.000000e+00 : f32
    %205 = vector.broadcast %cst_46 : f32 to vector<1x32xf32>
    %206 = arith.addf %205, %204 : vector<1x32xf32>
    %207 = arith.divf %205, %206 : vector<1x32xf32>
    %208 = arith.mulf %199, %187 : vector<1x32xf32>
    %209 = arith.mulf %193, %201 : vector<1x32xf32>
    %210 = arith.addf %208, %209 : vector<1x32xf32>
    %211 = math.tanh %210 : vector<1x32xf32>
    %212 = arith.mulf %207, %211 : vector<1x32xf32>
    %213 = arith.index_cast %c2_i32 : i32 to index
    %c0_47 = arith.constant 0 : index
    %214 = vector.load %arg20[%213, %c0_47] : memref<8x32xf32, #tpu.memory_space<vmem>>, vector<1x32xf32>
    tpu.vector_store %arg20[%213, %c0_47], %186 {strides = array<i32>} : memref<8x32xf32, #tpu.memory_space<vmem>>, vector<1x32xf32>,
    %215 = arith.index_cast %151 : i32 to index
    %c0_48 = arith.constant 0 : index
    %216 = vector.load %arg21[%215, %c0_48] : memref<8x32xf32, #tpu.memory_space<vmem>>, vector<1x32xf32>
    tpu.vector_store %arg21[%215, %c0_48], %212 {strides = array<i32>} : memref<8x32xf32, #tpu.memory_space<vmem>>, vector<1x32xf32>,
    %217 = tpu.concatenate %186, %212 in 1 : vector<1x32xf32>, vector<1x32xf32> -> vector<1x64xf32>
    %218 = tpu.concatenate %184, %210 in 1 : vector<1x32xf32>, vector<1x32xf32> -> vector<1x64xf32>
    %c3_i32 = arith.constant 3 : i32
    %c7_i32_49 = arith.constant 7 : i32
    %219 = arith.subi %c7_i32_49, %c3_i32 : i32
    %cst_50 = arith.constant dense<0.000000e+00> : vector<1x256xf32>
    %220 = tpu.matmul %217, %12, %cst_50 {dimension_numbers = #tpu.dot_dimension_numbers<[1], [0], [0], [1], [0, 0, 1, 1], [], []>} : vector<1x64xf32>, vector<64x256xf32>, vector<1x256xf32> -> vector<1x256xf32>
    %221 = arith.index_cast %c3_i32 : i32 to index
    %c0_51 = arith.constant 0 : index
    %222 = vector.load %arg19[%221, %c0_51] : memref<8x256xf32, #tpu.memory_space<vmem>>, vector<1x128xf32>
    %223 = vector.extract_strided_slice %220 {offsets = [0, 0], sizes = [1, 128], strides = [1, 1]} : vector<1x256xf32> to vector<1x128xf32>
    %224 = arith.addf %222, %223 : vector<1x128xf32>
    %225 = arith.index_cast %219 : i32 to index
    %c128_52 = arith.constant 128 : index
    %226 = vector.load %arg19[%225, %c128_52] : memref<8x256xf32, #tpu.memory_space<vmem>>, vector<1x128xf32>
    %227 = vector.extract_strided_slice %220 {offsets = [0, 128], sizes = [1, 128], strides = [1, 1]} : vector<1x256xf32> to vector<1x128xf32>
    %228 = arith.addf %226, %227 : vector<1x128xf32>
    %229 = vector.extract_strided_slice %218 {offsets = [0, 0], sizes = [1, 32], strides = [1, 1]} : vector<1x64xf32> to vector<1x32xf32>
    %230 = vector.extract_strided_slice %224 {offsets = [0, 0], sizes = [1, 32], strides = [1, 1]} : vector<1x128xf32> to vector<1x32xf32>
    %231 = arith.negf %230 : vector<1x32xf32>
    %232 = math.exp %231 : vector<1x32xf32>
    %cst_53 = arith.constant 1.000000e+00 : f32
    %233 = vector.broadcast %cst_53 : f32 to vector<1x32xf32>
    %234 = arith.addf %233, %232 : vector<1x32xf32>
    %235 = arith.divf %233, %234 : vector<1x32xf32>
    %236 = vector.extract_strided_slice %224 {offsets = [0, 32], sizes = [1, 32], strides = [1, 1]} : vector<1x128xf32> to vector<1x32xf32>
    %237 = arith.negf %236 : vector<1x32xf32>
    %238 = math.exp %237 : vector<1x32xf32>
    %cst_54 = arith.constant 1.000000e+00 : f32
    %239 = vector.broadcast %cst_54 : f32 to vector<1x32xf32>
    %240 = arith.addf %239, %238 : vector<1x32xf32>
    %241 = arith.divf %239, %240 : vector<1x32xf32>
    %242 = vector.extract_strided_slice %224 {offsets = [0, 64], sizes = [1, 32], strides = [1, 1]} : vector<1x128xf32> to vector<1x32xf32>
    %243 = math.tanh %242 : vector<1x32xf32>
    %244 = vector.extract_strided_slice %224 {offsets = [0, 96], sizes = [1, 32], strides = [1, 1]} : vector<1x128xf32> to vector<1x32xf32>
    %245 = arith.negf %244 : vector<1x32xf32>
    %246 = math.exp %245 : vector<1x32xf32>
    %cst_55 = arith.constant 1.000000e+00 : f32
    %247 = vector.broadcast %cst_55 : f32 to vector<1x32xf32>
    %248 = arith.addf %247, %246 : vector<1x32xf32>
    %249 = arith.divf %247, %248 : vector<1x32xf32>
    %250 = arith.mulf %241, %229 : vector<1x32xf32>
    %251 = arith.mulf %235, %243 : vector<1x32xf32>
    %252 = arith.addf %250, %251 : vector<1x32xf32>
    %253 = math.tanh %252 : vector<1x32xf32>
    %254 = arith.mulf %249, %253 : vector<1x32xf32>
    %255 = vector.extract_strided_slice %218 {offsets = [0, 32], sizes = [1, 32], strides = [1, 1]} : vector<1x64xf32> to vector<1x32xf32>
    %256 = vector.extract_strided_slice %228 {offsets = [0, 0], sizes = [1, 32], strides = [1, 1]} : vector<1x128xf32> to vector<1x32xf32>
    %257 = arith.negf %256 : vector<1x32xf32>
    %258 = math.exp %257 : vector<1x32xf32>
    %cst_56 = arith.constant 1.000000e+00 : f32
    %259 = vector.broadcast %cst_56 : f32 to vector<1x32xf32>
    %260 = arith.addf %259, %258 : vector<1x32xf32>
    %261 = arith.divf %259, %260 : vector<1x32xf32>
    %262 = vector.extract_strided_slice %228 {offsets = [0, 32], sizes = [1, 32], strides = [1, 1]} : vector<1x128xf32> to vector<1x32xf32>
    %263 = arith.negf %262 : vector<1x32xf32>
    %264 = math.exp %263 : vector<1x32xf32>
    %cst_57 = arith.constant 1.000000e+00 : f32
    %265 = vector.broadcast %cst_57 : f32 to vector<1x32xf32>
    %266 = arith.addf %265, %264 : vector<1x32xf32>
    %267 = arith.divf %265, %266 : vector<1x32xf32>
    %268 = vector.extract_strided_slice %228 {offsets = [0, 64], sizes = [1, 32], strides = [1, 1]} : vector<1x128xf32> to vector<1x32xf32>
    %269 = math.tanh %268 : vector<1x32xf32>
    %270 = vector.extract_strided_slice %228 {offsets = [0, 96], sizes = [1, 32], strides = [1, 1]} : vector<1x128xf32> to vector<1x32xf32>
    %271 = arith.negf %270 : vector<1x32xf32>
    %272 = math.exp %271 : vector<1x32xf32>
    %cst_58 = arith.constant 1.000000e+00 : f32
    %273 = vector.broadcast %cst_58 : f32 to vector<1x32xf32>
    %274 = arith.addf %273, %272 : vector<1x32xf32>
    %275 = arith.divf %273, %274 : vector<1x32xf32>
    %276 = arith.mulf %267, %255 : vector<1x32xf32>
    %277 = arith.mulf %261, %269 : vector<1x32xf32>
    %278 = arith.addf %276, %277 : vector<1x32xf32>
    %279 = math.tanh %278 : vector<1x32xf32>
    %280 = arith.mulf %275, %279 : vector<1x32xf32>
    %281 = arith.index_cast %c3_i32 : i32 to index
    %c0_59 = arith.constant 0 : index
    %282 = vector.load %arg20[%281, %c0_59] : memref<8x32xf32, #tpu.memory_space<vmem>>, vector<1x32xf32>
    tpu.vector_store %arg20[%281, %c0_59], %254 {strides = array<i32>} : memref<8x32xf32, #tpu.memory_space<vmem>>, vector<1x32xf32>,
    %283 = arith.index_cast %219 : i32 to index
    %c0_60 = arith.constant 0 : index
    %284 = vector.load %arg21[%283, %c0_60] : memref<8x32xf32, #tpu.memory_space<vmem>>, vector<1x32xf32>
    tpu.vector_store %arg21[%283, %c0_60], %280 {strides = array<i32>} : memref<8x32xf32, #tpu.memory_space<vmem>>, vector<1x32xf32>,
    %285 = tpu.concatenate %254, %280 in 1 : vector<1x32xf32>, vector<1x32xf32> -> vector<1x64xf32>
    %286 = tpu.concatenate %252, %278 in 1 : vector<1x32xf32>, vector<1x32xf32> -> vector<1x64xf32>
    %c4_i32 = arith.constant 4 : i32
    %c7_i32_61 = arith.constant 7 : i32
    %287 = arith.subi %c7_i32_61, %c4_i32 : i32
    %cst_62 = arith.constant dense<0.000000e+00> : vector<1x256xf32>
    %288 = tpu.matmul %285, %12, %cst_62 {dimension_numbers = #tpu.dot_dimension_numbers<[1], [0], [0], [1], [0, 0, 1, 1], [], []>} : vector<1x64xf32>, vector<64x256xf32>, vector<1x256xf32> -> vector<1x256xf32>
    %289 = arith.index_cast %c4_i32 : i32 to index
    %c0_63 = arith.constant 0 : index
    %290 = vector.load %arg19[%289, %c0_63] : memref<8x256xf32, #tpu.memory_space<vmem>>, vector<1x128xf32>
    %291 = vector.extract_strided_slice %288 {offsets = [0, 0], sizes = [1, 128], strides = [1, 1]} : vector<1x256xf32> to vector<1x128xf32>
    %292 = arith.addf %290, %291 : vector<1x128xf32>
    %293 = arith.index_cast %287 : i32 to index
    %c128_64 = arith.constant 128 : index
    %294 = vector.load %arg19[%293, %c128_64] : memref<8x256xf32, #tpu.memory_space<vmem>>, vector<1x128xf32>
    %295 = vector.extract_strided_slice %288 {offsets = [0, 128], sizes = [1, 128], strides = [1, 1]} : vector<1x256xf32> to vector<1x128xf32>
    %296 = arith.addf %294, %295 : vector<1x128xf32>
    %297 = vector.extract_strided_slice %286 {offsets = [0, 0], sizes = [1, 32], strides = [1, 1]} : vector<1x64xf32> to vector<1x32xf32>
    %298 = vector.extract_strided_slice %292 {offsets = [0, 0], sizes = [1, 32], strides = [1, 1]} : vector<1x128xf32> to vector<1x32xf32>
    %299 = arith.negf %298 : vector<1x32xf32>
    %300 = math.exp %299 : vector<1x32xf32>
    %cst_65 = arith.constant 1.000000e+00 : f32
    %301 = vector.broadcast %cst_65 : f32 to vector<1x32xf32>
    %302 = arith.addf %301, %300 : vector<1x32xf32>
    %303 = arith.divf %301, %302 : vector<1x32xf32>
    %304 = vector.extract_strided_slice %292 {offsets = [0, 32], sizes = [1, 32], strides = [1, 1]} : vector<1x128xf32> to vector<1x32xf32>
    %305 = arith.negf %304 : vector<1x32xf32>
    %306 = math.exp %305 : vector<1x32xf32>
    %cst_66 = arith.constant 1.000000e+00 : f32
    %307 = vector.broadcast %cst_66 : f32 to vector<1x32xf32>
    %308 = arith.addf %307, %306 : vector<1x32xf32>
    %309 = arith.divf %307, %308 : vector<1x32xf32>
    %310 = vector.extract_strided_slice %292 {offsets = [0, 64], sizes = [1, 32], strides = [1, 1]} : vector<1x128xf32> to vector<1x32xf32>
    %311 = math.tanh %310 : vector<1x32xf32>
    %312 = vector.extract_strided_slice %292 {offsets = [0, 96], sizes = [1, 32], strides = [1, 1]} : vector<1x128xf32> to vector<1x32xf32>
    %313 = arith.negf %312 : vector<1x32xf32>
    %314 = math.exp %313 : vector<1x32xf32>
    %cst_67 = arith.constant 1.000000e+00 : f32
    %315 = vector.broadcast %cst_67 : f32 to vector<1x32xf32>
    %316 = arith.addf %315, %314 : vector<1x32xf32>
    %317 = arith.divf %315, %316 : vector<1x32xf32>
    %318 = arith.mulf %309, %297 : vector<1x32xf32>
    %319 = arith.mulf %303, %311 : vector<1x32xf32>
    %320 = arith.addf %318, %319 : vector<1x32xf32>
    %321 = math.tanh %320 : vector<1x32xf32>
    %322 = arith.mulf %317, %321 : vector<1x32xf32>
    %323 = vector.extract_strided_slice %286 {offsets = [0, 32], sizes = [1, 32], strides = [1, 1]} : vector<1x64xf32> to vector<1x32xf32>
    %324 = vector.extract_strided_slice %296 {offsets = [0, 0], sizes = [1, 32], strides = [1, 1]} : vector<1x128xf32> to vector<1x32xf32>
    %325 = arith.negf %324 : vector<1x32xf32>
    %326 = math.exp %325 : vector<1x32xf32>
    %cst_68 = arith.constant 1.000000e+00 : f32
    %327 = vector.broadcast %cst_68 : f32 to vector<1x32xf32>
    %328 = arith.addf %327, %326 : vector<1x32xf32>
    %329 = arith.divf %327, %328 : vector<1x32xf32>
    %330 = vector.extract_strided_slice %296 {offsets = [0, 32], sizes = [1, 32], strides = [1, 1]} : vector<1x128xf32> to vector<1x32xf32>
    %331 = arith.negf %330 : vector<1x32xf32>
    %332 = math.exp %331 : vector<1x32xf32>
    %cst_69 = arith.constant 1.000000e+00 : f32
    %333 = vector.broadcast %cst_69 : f32 to vector<1x32xf32>
    %334 = arith.addf %333, %332 : vector<1x32xf32>
    %335 = arith.divf %333, %334 : vector<1x32xf32>
    %336 = vector.extract_strided_slice %296 {offsets = [0, 64], sizes = [1, 32], strides = [1, 1]} : vector<1x128xf32> to vector<1x32xf32>
    %337 = math.tanh %336 : vector<1x32xf32>
    %338 = vector.extract_strided_slice %296 {offsets = [0, 96], sizes = [1, 32], strides = [1, 1]} : vector<1x128xf32> to vector<1x32xf32>
    %339 = arith.negf %338 : vector<1x32xf32>
    %340 = math.exp %339 : vector<1x32xf32>
    %cst_70 = arith.constant 1.000000e+00 : f32
    %341 = vector.broadcast %cst_70 : f32 to vector<1x32xf32>
    %342 = arith.addf %341, %340 : vector<1x32xf32>
    %343 = arith.divf %341, %342 : vector<1x32xf32>
    %344 = arith.mulf %335, %323 : vector<1x32xf32>
    %345 = arith.mulf %329, %337 : vector<1x32xf32>
    %346 = arith.addf %344, %345 : vector<1x32xf32>
    %347 = math.tanh %346 : vector<1x32xf32>
    %348 = arith.mulf %343, %347 : vector<1x32xf32>
    %349 = arith.index_cast %c4_i32 : i32 to index
    %c0_71 = arith.constant 0 : index
    %350 = vector.load %arg20[%349, %c0_71] : memref<8x32xf32, #tpu.memory_space<vmem>>, vector<1x32xf32>
    tpu.vector_store %arg20[%349, %c0_71], %322 {strides = array<i32>} : memref<8x32xf32, #tpu.memory_space<vmem>>, vector<1x32xf32>,
    %351 = arith.index_cast %287 : i32 to index
    %c0_72 = arith.constant 0 : index
    %352 = vector.load %arg21[%351, %c0_72] : memref<8x32xf32, #tpu.memory_space<vmem>>, vector<1x32xf32>
    tpu.vector_store %arg21[%351, %c0_72], %348 {strides = array<i32>} : memref<8x32xf32, #tpu.memory_space<vmem>>, vector<1x32xf32>,
    %353 = tpu.concatenate %322, %348 in 1 : vector<1x32xf32>, vector<1x32xf32> -> vector<1x64xf32>
    %354 = tpu.concatenate %320, %346 in 1 : vector<1x32xf32>, vector<1x32xf32> -> vector<1x64xf32>
    %c5_i32 = arith.constant 5 : i32
    %c7_i32_73 = arith.constant 7 : i32
    %355 = arith.subi %c7_i32_73, %c5_i32 : i32
    %cst_74 = arith.constant dense<0.000000e+00> : vector<1x256xf32>
    %356 = tpu.matmul %353, %12, %cst_74 {dimension_numbers = #tpu.dot_dimension_numbers<[1], [0], [0], [1], [0, 0, 1, 1], [], []>} : vector<1x64xf32>, vector<64x256xf32>, vector<1x256xf32> -> vector<1x256xf32>
    %357 = arith.index_cast %c5_i32 : i32 to index
    %c0_75 = arith.constant 0 : index
    %358 = vector.load %arg19[%357, %c0_75] : memref<8x256xf32, #tpu.memory_space<vmem>>, vector<1x128xf32>
    %359 = vector.extract_strided_slice %356 {offsets = [0, 0], sizes = [1, 128], strides = [1, 1]} : vector<1x256xf32> to vector<1x128xf32>
    %360 = arith.addf %358, %359 : vector<1x128xf32>
    %361 = arith.index_cast %355 : i32 to index
    %c128_76 = arith.constant 128 : index
    %362 = vector.load %arg19[%361, %c128_76] : memref<8x256xf32, #tpu.memory_space<vmem>>, vector<1x128xf32>
    %363 = vector.extract_strided_slice %356 {offsets = [0, 128], sizes = [1, 128], strides = [1, 1]} : vector<1x256xf32> to vector<1x128xf32>
    %364 = arith.addf %362, %363 : vector<1x128xf32>
    %365 = vector.extract_strided_slice %354 {offsets = [0, 0], sizes = [1, 32], strides = [1, 1]} : vector<1x64xf32> to vector<1x32xf32>
    %366 = vector.extract_strided_slice %360 {offsets = [0, 0], sizes = [1, 32], strides = [1, 1]} : vector<1x128xf32> to vector<1x32xf32>
    %367 = arith.negf %366 : vector<1x32xf32>
    %368 = math.exp %367 : vector<1x32xf32>
    %cst_77 = arith.constant 1.000000e+00 : f32
    %369 = vector.broadcast %cst_77 : f32 to vector<1x32xf32>
    %370 = arith.addf %369, %368 : vector<1x32xf32>
    %371 = arith.divf %369, %370 : vector<1x32xf32>
    %372 = vector.extract_strided_slice %360 {offsets = [0, 32], sizes = [1, 32], strides = [1, 1]} : vector<1x128xf32> to vector<1x32xf32>
    %373 = arith.negf %372 : vector<1x32xf32>
    %374 = math.exp %373 : vector<1x32xf32>
    %cst_78 = arith.constant 1.000000e+00 : f32
    %375 = vector.broadcast %cst_78 : f32 to vector<1x32xf32>
    %376 = arith.addf %375, %374 : vector<1x32xf32>
    %377 = arith.divf %375, %376 : vector<1x32xf32>
    %378 = vector.extract_strided_slice %360 {offsets = [0, 64], sizes = [1, 32], strides = [1, 1]} : vector<1x128xf32> to vector<1x32xf32>
    %379 = math.tanh %378 : vector<1x32xf32>
    %380 = vector.extract_strided_slice %360 {offsets = [0, 96], sizes = [1, 32], strides = [1, 1]} : vector<1x128xf32> to vector<1x32xf32>
    %381 = arith.negf %380 : vector<1x32xf32>
    %382 = math.exp %381 : vector<1x32xf32>
    %cst_79 = arith.constant 1.000000e+00 : f32
    %383 = vector.broadcast %cst_79 : f32 to vector<1x32xf32>
    %384 = arith.addf %383, %382 : vector<1x32xf32>
    %385 = arith.divf %383, %384 : vector<1x32xf32>
    %386 = arith.mulf %377, %365 : vector<1x32xf32>
    %387 = arith.mulf %371, %379 : vector<1x32xf32>
    %388 = arith.addf %386, %387 : vector<1x32xf32>
    %389 = math.tanh %388 : vector<1x32xf32>
    %390 = arith.mulf %385, %389 : vector<1x32xf32>
    %391 = vector.extract_strided_slice %354 {offsets = [0, 32], sizes = [1, 32], strides = [1, 1]} : vector<1x64xf32> to vector<1x32xf32>
    %392 = vector.extract_strided_slice %364 {offsets = [0, 0], sizes = [1, 32], strides = [1, 1]} : vector<1x128xf32> to vector<1x32xf32>
    %393 = arith.negf %392 : vector<1x32xf32>
    %394 = math.exp %393 : vector<1x32xf32>
    %cst_80 = arith.constant 1.000000e+00 : f32
    %395 = vector.broadcast %cst_80 : f32 to vector<1x32xf32>
    %396 = arith.addf %395, %394 : vector<1x32xf32>
    %397 = arith.divf %395, %396 : vector<1x32xf32>
    %398 = vector.extract_strided_slice %364 {offsets = [0, 32], sizes = [1, 32], strides = [1, 1]} : vector<1x128xf32> to vector<1x32xf32>
    %399 = arith.negf %398 : vector<1x32xf32>
    %400 = math.exp %399 : vector<1x32xf32>
    %cst_81 = arith.constant 1.000000e+00 : f32
    %401 = vector.broadcast %cst_81 : f32 to vector<1x32xf32>
    %402 = arith.addf %401, %400 : vector<1x32xf32>
    %403 = arith.divf %401, %402 : vector<1x32xf32>
    %404 = vector.extract_strided_slice %364 {offsets = [0, 64], sizes = [1, 32], strides = [1, 1]} : vector<1x128xf32> to vector<1x32xf32>
    %405 = math.tanh %404 : vector<1x32xf32>
    %406 = vector.extract_strided_slice %364 {offsets = [0, 96], sizes = [1, 32], strides = [1, 1]} : vector<1x128xf32> to vector<1x32xf32>
    %407 = arith.negf %406 : vector<1x32xf32>
    %408 = math.exp %407 : vector<1x32xf32>
    %cst_82 = arith.constant 1.000000e+00 : f32
    %409 = vector.broadcast %cst_82 : f32 to vector<1x32xf32>
    %410 = arith.addf %409, %408 : vector<1x32xf32>
    %411 = arith.divf %409, %410 : vector<1x32xf32>
    %412 = arith.mulf %403, %391 : vector<1x32xf32>
    %413 = arith.mulf %397, %405 : vector<1x32xf32>
    %414 = arith.addf %412, %413 : vector<1x32xf32>
    %415 = math.tanh %414 : vector<1x32xf32>
    %416 = arith.mulf %411, %415 : vector<1x32xf32>
    %417 = arith.index_cast %c5_i32 : i32 to index
    %c0_83 = arith.constant 0 : index
    %418 = vector.load %arg20[%417, %c0_83] : memref<8x32xf32, #tpu.memory_space<vmem>>, vector<1x32xf32>
    tpu.vector_store %arg20[%417, %c0_83], %390 {strides = array<i32>} : memref<8x32xf32, #tpu.memory_space<vmem>>, vector<1x32xf32>,
    %419 = arith.index_cast %355 : i32 to index
    %c0_84 = arith.constant 0 : index
    %420 = vector.load %arg21[%419, %c0_84] : memref<8x32xf32, #tpu.memory_space<vmem>>, vector<1x32xf32>
    tpu.vector_store %arg21[%419, %c0_84], %416 {strides = array<i32>} : memref<8x32xf32, #tpu.memory_space<vmem>>, vector<1x32xf32>,
    %421 = tpu.concatenate %390, %416 in 1 : vector<1x32xf32>, vector<1x32xf32> -> vector<1x64xf32>
    %422 = tpu.concatenate %388, %414 in 1 : vector<1x32xf32>, vector<1x32xf32> -> vector<1x64xf32>
    %c6_i32 = arith.constant 6 : i32
    %c7_i32_85 = arith.constant 7 : i32
    %423 = arith.subi %c7_i32_85, %c6_i32 : i32
    %cst_86 = arith.constant dense<0.000000e+00> : vector<1x256xf32>
    %424 = tpu.matmul %421, %12, %cst_86 {dimension_numbers = #tpu.dot_dimension_numbers<[1], [0], [0], [1], [0, 0, 1, 1], [], []>} : vector<1x64xf32>, vector<64x256xf32>, vector<1x256xf32> -> vector<1x256xf32>
    %425 = arith.index_cast %c6_i32 : i32 to index
    %c0_87 = arith.constant 0 : index
    %426 = vector.load %arg19[%425, %c0_87] : memref<8x256xf32, #tpu.memory_space<vmem>>, vector<1x128xf32>
    %427 = vector.extract_strided_slice %424 {offsets = [0, 0], sizes = [1, 128], strides = [1, 1]} : vector<1x256xf32> to vector<1x128xf32>
    %428 = arith.addf %426, %427 : vector<1x128xf32>
    %429 = arith.index_cast %423 : i32 to index
    %c128_88 = arith.constant 128 : index
    %430 = vector.load %arg19[%429, %c128_88] : memref<8x256xf32, #tpu.memory_space<vmem>>, vector<1x128xf32>
    %431 = vector.extract_strided_slice %424 {offsets = [0, 128], sizes = [1, 128], strides = [1, 1]} : vector<1x256xf32> to vector<1x128xf32>
    %432 = arith.addf %430, %431 : vector<1x128xf32>
    %433 = vector.extract_strided_slice %422 {offsets = [0, 0], sizes = [1, 32], strides = [1, 1]} : vector<1x64xf32> to vector<1x32xf32>
    %434 = vector.extract_strided_slice %428 {offsets = [0, 0], sizes = [1, 32], strides = [1, 1]} : vector<1x128xf32> to vector<1x32xf32>
    %435 = arith.negf %434 : vector<1x32xf32>
    %436 = math.exp %435 : vector<1x32xf32>
    %cst_89 = arith.constant 1.000000e+00 : f32
    %437 = vector.broadcast %cst_89 : f32 to vector<1x32xf32>
    %438 = arith.addf %437, %436 : vector<1x32xf32>
    %439 = arith.divf %437, %438 : vector<1x32xf32>
    %440 = vector.extract_strided_slice %428 {offsets = [0, 32], sizes = [1, 32], strides = [1, 1]} : vector<1x128xf32> to vector<1x32xf32>
    %441 = arith.negf %440 : vector<1x32xf32>
    %442 = math.exp %441 : vector<1x32xf32>
    %cst_90 = arith.constant 1.000000e+00 : f32
    %443 = vector.broadcast %cst_90 : f32 to vector<1x32xf32>
    %444 = arith.addf %443, %442 : vector<1x32xf32>
    %445 = arith.divf %443, %444 : vector<1x32xf32>
    %446 = vector.extract_strided_slice %428 {offsets = [0, 64], sizes = [1, 32], strides = [1, 1]} : vector<1x128xf32> to vector<1x32xf32>
    %447 = math.tanh %446 : vector<1x32xf32>
    %448 = vector.extract_strided_slice %428 {offsets = [0, 96], sizes = [1, 32], strides = [1, 1]} : vector<1x128xf32> to vector<1x32xf32>
    %449 = arith.negf %448 : vector<1x32xf32>
    %450 = math.exp %449 : vector<1x32xf32>
    %cst_91 = arith.constant 1.000000e+00 : f32
    %451 = vector.broadcast %cst_91 : f32 to vector<1x32xf32>
    %452 = arith.addf %451, %450 : vector<1x32xf32>
    %453 = arith.divf %451, %452 : vector<1x32xf32>
    %454 = arith.mulf %445, %433 : vector<1x32xf32>
    %455 = arith.mulf %439, %447 : vector<1x32xf32>
    %456 = arith.addf %454, %455 : vector<1x32xf32>
    %457 = math.tanh %456 : vector<1x32xf32>
    %458 = arith.mulf %453, %457 : vector<1x32xf32>
    %459 = vector.extract_strided_slice %422 {offsets = [0, 32], sizes = [1, 32], strides = [1, 1]} : vector<1x64xf32> to vector<1x32xf32>
    %460 = vector.extract_strided_slice %432 {offsets = [0, 0], sizes = [1, 32], strides = [1, 1]} : vector<1x128xf32> to vector<1x32xf32>
    %461 = arith.negf %460 : vector<1x32xf32>
    %462 = math.exp %461 : vector<1x32xf32>
    %cst_92 = arith.constant 1.000000e+00 : f32
    %463 = vector.broadcast %cst_92 : f32 to vector<1x32xf32>
    %464 = arith.addf %463, %462 : vector<1x32xf32>
    %465 = arith.divf %463, %464 : vector<1x32xf32>
    %466 = vector.extract_strided_slice %432 {offsets = [0, 32], sizes = [1, 32], strides = [1, 1]} : vector<1x128xf32> to vector<1x32xf32>
    %467 = arith.negf %466 : vector<1x32xf32>
    %468 = math.exp %467 : vector<1x32xf32>
    %cst_93 = arith.constant 1.000000e+00 : f32
    %469 = vector.broadcast %cst_93 : f32 to vector<1x32xf32>
    %470 = arith.addf %469, %468 : vector<1x32xf32>
    %471 = arith.divf %469, %470 : vector<1x32xf32>
    %472 = vector.extract_strided_slice %432 {offsets = [0, 64], sizes = [1, 32], strides = [1, 1]} : vector<1x128xf32> to vector<1x32xf32>
    %473 = math.tanh %472 : vector<1x32xf32>
    %474 = vector.extract_strided_slice %432 {offsets = [0, 96], sizes = [1, 32], strides = [1, 1]} : vector<1x128xf32> to vector<1x32xf32>
    %475 = arith.negf %474 : vector<1x32xf32>
    %476 = math.exp %475 : vector<1x32xf32>
    %cst_94 = arith.constant 1.000000e+00 : f32
    %477 = vector.broadcast %cst_94 : f32 to vector<1x32xf32>
    %478 = arith.addf %477, %476 : vector<1x32xf32>
    %479 = arith.divf %477, %478 : vector<1x32xf32>
    %480 = arith.mulf %471, %459 : vector<1x32xf32>
    %481 = arith.mulf %465, %473 : vector<1x32xf32>
    %482 = arith.addf %480, %481 : vector<1x32xf32>
    %483 = math.tanh %482 : vector<1x32xf32>
    %484 = arith.mulf %479, %483 : vector<1x32xf32>
    %485 = arith.index_cast %c6_i32 : i32 to index
    %c0_95 = arith.constant 0 : index
    %486 = vector.load %arg20[%485, %c0_95] : memref<8x32xf32, #tpu.memory_space<vmem>>, vector<1x32xf32>
    tpu.vector_store %arg20[%485, %c0_95], %458 {strides = array<i32>} : memref<8x32xf32, #tpu.memory_space<vmem>>, vector<1x32xf32>,
    %487 = arith.index_cast %423 : i32 to index
    %c0_96 = arith.constant 0 : index
    %488 = vector.load %arg21[%487, %c0_96] : memref<8x32xf32, #tpu.memory_space<vmem>>, vector<1x32xf32>
    tpu.vector_store %arg21[%487, %c0_96], %484 {strides = array<i32>} : memref<8x32xf32, #tpu.memory_space<vmem>>, vector<1x32xf32>,
    %489 = tpu.concatenate %458, %484 in 1 : vector<1x32xf32>, vector<1x32xf32> -> vector<1x64xf32>
    %490 = tpu.concatenate %456, %482 in 1 : vector<1x32xf32>, vector<1x32xf32> -> vector<1x64xf32>
    %c7_i32_97 = arith.constant 7 : i32
    %c7_i32_98 = arith.constant 7 : i32
    %491 = arith.subi %c7_i32_98, %c7_i32_97 : i32
    %cst_99 = arith.constant dense<0.000000e+00> : vector<1x256xf32>
    %492 = tpu.matmul %489, %12, %cst_99 {dimension_numbers = #tpu.dot_dimension_numbers<[1], [0], [0], [1], [0, 0, 1, 1], [], []>} : vector<1x64xf32>, vector<64x256xf32>, vector<1x256xf32> -> vector<1x256xf32>
    %493 = arith.index_cast %c7_i32_97 : i32 to index
    %c0_100 = arith.constant 0 : index
    %494 = vector.load %arg19[%493, %c0_100] : memref<8x256xf32, #tpu.memory_space<vmem>>, vector<1x128xf32>
    %495 = vector.extract_strided_slice %492 {offsets = [0, 0], sizes = [1, 128], strides = [1, 1]} : vector<1x256xf32> to vector<1x128xf32>
    %496 = arith.addf %494, %495 : vector<1x128xf32>
    %497 = arith.index_cast %491 : i32 to index
    %c128_101 = arith.constant 128 : index
    %498 = vector.load %arg19[%497, %c128_101] : memref<8x256xf32, #tpu.memory_space<vmem>>, vector<1x128xf32>
    %499 = vector.extract_strided_slice %492 {offsets = [0, 128], sizes = [1, 128], strides = [1, 1]} : vector<1x256xf32> to vector<1x128xf32>
    %500 = arith.addf %498, %499 : vector<1x128xf32>
    %501 = vector.extract_strided_slice %490 {offsets = [0, 0], sizes = [1, 32], strides = [1, 1]} : vector<1x64xf32> to vector<1x32xf32>
    %502 = vector.extract_strided_slice %496 {offsets = [0, 0], sizes = [1, 32], strides = [1, 1]} : vector<1x128xf32> to vector<1x32xf32>
    %503 = arith.negf %502 : vector<1x32xf32>
    %504 = math.exp %503 : vector<1x32xf32>
    %cst_102 = arith.constant 1.000000e+00 : f32
    %505 = vector.broadcast %cst_102 : f32 to vector<1x32xf32>
    %506 = arith.addf %505, %504 : vector<1x32xf32>
    %507 = arith.divf %505, %506 : vector<1x32xf32>
    %508 = vector.extract_strided_slice %496 {offsets = [0, 32], sizes = [1, 32], strides = [1, 1]} : vector<1x128xf32> to vector<1x32xf32>
    %509 = arith.negf %508 : vector<1x32xf32>
    %510 = math.exp %509 : vector<1x32xf32>
    %cst_103 = arith.constant 1.000000e+00 : f32
    %511 = vector.broadcast %cst_103 : f32 to vector<1x32xf32>
    %512 = arith.addf %511, %510 : vector<1x32xf32>
    %513 = arith.divf %511, %512 : vector<1x32xf32>
    %514 = vector.extract_strided_slice %496 {offsets = [0, 64], sizes = [1, 32], strides = [1, 1]} : vector<1x128xf32> to vector<1x32xf32>
    %515 = math.tanh %514 : vector<1x32xf32>
    %516 = vector.extract_strided_slice %496 {offsets = [0, 96], sizes = [1, 32], strides = [1, 1]} : vector<1x128xf32> to vector<1x32xf32>
    %517 = arith.negf %516 : vector<1x32xf32>
    %518 = math.exp %517 : vector<1x32xf32>
    %cst_104 = arith.constant 1.000000e+00 : f32
    %519 = vector.broadcast %cst_104 : f32 to vector<1x32xf32>
    %520 = arith.addf %519, %518 : vector<1x32xf32>
    %521 = arith.divf %519, %520 : vector<1x32xf32>
    %522 = arith.mulf %513, %501 : vector<1x32xf32>
    %523 = arith.mulf %507, %515 : vector<1x32xf32>
    %524 = arith.addf %522, %523 : vector<1x32xf32>
    %525 = math.tanh %524 : vector<1x32xf32>
    %526 = arith.mulf %521, %525 : vector<1x32xf32>
    %527 = vector.extract_strided_slice %490 {offsets = [0, 32], sizes = [1, 32], strides = [1, 1]} : vector<1x64xf32> to vector<1x32xf32>
    %528 = vector.extract_strided_slice %500 {offsets = [0, 0], sizes = [1, 32], strides = [1, 1]} : vector<1x128xf32> to vector<1x32xf32>
    %529 = arith.negf %528 : vector<1x32xf32>
    %530 = math.exp %529 : vector<1x32xf32>
    %cst_105 = arith.constant 1.000000e+00 : f32
    %531 = vector.broadcast %cst_105 : f32 to vector<1x32xf32>
    %532 = arith.addf %531, %530 : vector<1x32xf32>
    %533 = arith.divf %531, %532 : vector<1x32xf32>
    %534 = vector.extract_strided_slice %500 {offsets = [0, 32], sizes = [1, 32], strides = [1, 1]} : vector<1x128xf32> to vector<1x32xf32>
    %535 = arith.negf %534 : vector<1x32xf32>
    %536 = math.exp %535 : vector<1x32xf32>
    %cst_106 = arith.constant 1.000000e+00 : f32
    %537 = vector.broadcast %cst_106 : f32 to vector<1x32xf32>
    %538 = arith.addf %537, %536 : vector<1x32xf32>
    %539 = arith.divf %537, %538 : vector<1x32xf32>
    %540 = vector.extract_strided_slice %500 {offsets = [0, 64], sizes = [1, 32], strides = [1, 1]} : vector<1x128xf32> to vector<1x32xf32>
    %541 = math.tanh %540 : vector<1x32xf32>
    %542 = vector.extract_strided_slice %500 {offsets = [0, 96], sizes = [1, 32], strides = [1, 1]} : vector<1x128xf32> to vector<1x32xf32>
    %543 = arith.negf %542 : vector<1x32xf32>
    %544 = math.exp %543 : vector<1x32xf32>
    %cst_107 = arith.constant 1.000000e+00 : f32
    %545 = vector.broadcast %cst_107 : f32 to vector<1x32xf32>
    %546 = arith.addf %545, %544 : vector<1x32xf32>
    %547 = arith.divf %545, %546 : vector<1x32xf32>
    %548 = arith.mulf %539, %527 : vector<1x32xf32>
    %549 = arith.mulf %533, %541 : vector<1x32xf32>
    %550 = arith.addf %548, %549 : vector<1x32xf32>
    %551 = math.tanh %550 : vector<1x32xf32>
    %552 = arith.mulf %547, %551 : vector<1x32xf32>
    %553 = arith.index_cast %c7_i32_97 : i32 to index
    %c0_108 = arith.constant 0 : index
    %554 = vector.load %arg20[%553, %c0_108] : memref<8x32xf32, #tpu.memory_space<vmem>>, vector<1x32xf32>
    tpu.vector_store %arg20[%553, %c0_108], %526 {strides = array<i32>} : memref<8x32xf32, #tpu.memory_space<vmem>>, vector<1x32xf32>,
    %555 = arith.index_cast %491 : i32 to index
    %c0_109 = arith.constant 0 : index
    %556 = vector.load %arg21[%555, %c0_109] : memref<8x32xf32, #tpu.memory_space<vmem>>, vector<1x32xf32>
    tpu.vector_store %arg21[%555, %c0_109], %552 {strides = array<i32>} : memref<8x32xf32, #tpu.memory_space<vmem>>, vector<1x32xf32>,
    %557 = tpu.concatenate %526, %552 in 1 : vector<1x32xf32>, vector<1x32xf32> -> vector<1x64xf32>
    %558 = tpu.concatenate %524, %550 in 1 : vector<1x32xf32>, vector<1x32xf32> -> vector<1x64xf32>
    %c8_i32 = arith.constant 8 : i32
    %c0_110 = arith.constant 0 : index
    %c0_111 = arith.constant 0 : index
    %559 = vector.load %arg20[%c0_110, %c0_111] : memref<8x32xf32, #tpu.memory_space<vmem>>, vector<8x32xf32>
    %c0_112 = arith.constant 0 : index
    %c0_113 = arith.constant 0 : index
    %560 = vector.load %arg21[%c0_112, %c0_113] : memref<8x32xf32, #tpu.memory_space<vmem>>, vector<8x32xf32>
    %561 = tpu.concatenate %559, %560 in 1 : vector<8x32xf32>, vector<8x32xf32> -> vector<8x64xf32>
    %c0_114 = arith.constant 0 : index
    %c0_115 = arith.constant 0 : index
    %562 = vector.load %arg7[%c0_114, %c0_115] : memref<64x256xf32, #tpu.memory_space<vmem>>, vector<64x256xf32>
    %cst_116 = arith.constant dense<0.000000e+00> : vector<8x256xf32>
    %563 = tpu.matmul %561, %562, %cst_116 {dimension_numbers = #tpu.dot_dimension_numbers<[1], [0], [0], [1], [0, 0, 1, 1], [], []>} : vector<8x64xf32>, vector<64x256xf32>, vector<8x256xf32> -> vector<8x256xf32>
    %c0_117 = arith.constant 0 : index
    %c0_118 = arith.constant 0 : index
    %564 = vector.load %arg9[%c0_117, %c0_118] : memref<1x256xf32, #tpu.memory_space<vmem>>, vector<1x256xf32>
    %565 = vector.broadcast %564 : vector<1x256xf32> to vector<8x256xf32>
    %566 = arith.addf %563, %565 : vector<8x256xf32>
    %c0_119 = arith.constant 0 : index
    %c0_120 = arith.constant 0 : index
    %567 = vector.load %arg19[%c0_119, %c0_120] : memref<8x256xf32, #tpu.memory_space<vmem>>, vector<8x256xf32>
    tpu.vector_store %arg19[%c0_119, %c0_120], %566 {strides = array<i32>} : memref<8x256xf32, #tpu.memory_space<vmem>>, vector<8x256xf32>,
    %c0_121 = arith.constant 0 : index
    %c0_122 = arith.constant 0 : index
    %568 = vector.load %arg8[%c0_121, %c0_122] : memref<64x256xf32, #tpu.memory_space<vmem>>, vector<64x256xf32>
    %cst_123 = arith.constant 0.000000e+00 : f32
    %569 = vector.broadcast %cst_123 : f32 to vector<1x64xf32>
    %cst_124 = arith.constant 0.000000e+00 : f32
    %570 = vector.broadcast %cst_124 : f32 to vector<1x64xf32>
    %c0_i32_125 = arith.constant 0 : i32
    %c7_i32_126 = arith.constant 7 : i32
    %571 = arith.subi %c7_i32_126, %c0_i32_125 : i32
    %cst_127 = arith.constant dense<0.000000e+00> : vector<1x256xf32>
    %572 = tpu.matmul %569, %568, %cst_127 {dimension_numbers = #tpu.dot_dimension_numbers<[1], [0], [0], [1], [0, 0, 1, 1], [], []>} : vector<1x64xf32>, vector<64x256xf32>, vector<1x256xf32> -> vector<1x256xf32>
    %573 = arith.index_cast %c0_i32_125 : i32 to index
    %c0_128 = arith.constant 0 : index
    %574 = vector.load %arg19[%573, %c0_128] : memref<8x256xf32, #tpu.memory_space<vmem>>, vector<1x128xf32>
    %575 = vector.extract_strided_slice %572 {offsets = [0, 0], sizes = [1, 128], strides = [1, 1]} : vector<1x256xf32> to vector<1x128xf32>
    %576 = arith.addf %574, %575 : vector<1x128xf32>
    %577 = arith.index_cast %571 : i32 to index
    %c128_129 = arith.constant 128 : index
    %578 = vector.load %arg19[%577, %c128_129] : memref<8x256xf32, #tpu.memory_space<vmem>>, vector<1x128xf32>
    %579 = vector.extract_strided_slice %572 {offsets = [0, 128], sizes = [1, 128], strides = [1, 1]} : vector<1x256xf32> to vector<1x128xf32>
    %580 = arith.addf %578, %579 : vector<1x128xf32>
    %581 = vector.extract_strided_slice %570 {offsets = [0, 0], sizes = [1, 32], strides = [1, 1]} : vector<1x64xf32> to vector<1x32xf32>
    %582 = vector.extract_strided_slice %576 {offsets = [0, 0], sizes = [1, 32], strides = [1, 1]} : vector<1x128xf32> to vector<1x32xf32>
    %583 = arith.negf %582 : vector<1x32xf32>
    %584 = math.exp %583 : vector<1x32xf32>
    %cst_130 = arith.constant 1.000000e+00 : f32
    %585 = vector.broadcast %cst_130 : f32 to vector<1x32xf32>
    %586 = arith.addf %585, %584 : vector<1x32xf32>
    %587 = arith.divf %585, %586 : vector<1x32xf32>
    %588 = vector.extract_strided_slice %576 {offsets = [0, 32], sizes = [1, 32], strides = [1, 1]} : vector<1x128xf32> to vector<1x32xf32>
    %589 = arith.negf %588 : vector<1x32xf32>
    %590 = math.exp %589 : vector<1x32xf32>
    %cst_131 = arith.constant 1.000000e+00 : f32
    %591 = vector.broadcast %cst_131 : f32 to vector<1x32xf32>
    %592 = arith.addf %591, %590 : vector<1x32xf32>
    %593 = arith.divf %591, %592 : vector<1x32xf32>
    %594 = vector.extract_strided_slice %576 {offsets = [0, 64], sizes = [1, 32], strides = [1, 1]} : vector<1x128xf32> to vector<1x32xf32>
    %595 = math.tanh %594 : vector<1x32xf32>
    %596 = vector.extract_strided_slice %576 {offsets = [0, 96], sizes = [1, 32], strides = [1, 1]} : vector<1x128xf32> to vector<1x32xf32>
    %597 = arith.negf %596 : vector<1x32xf32>
    %598 = math.exp %597 : vector<1x32xf32>
    %cst_132 = arith.constant 1.000000e+00 : f32
    %599 = vector.broadcast %cst_132 : f32 to vector<1x32xf32>
    %600 = arith.addf %599, %598 : vector<1x32xf32>
    %601 = arith.divf %599, %600 : vector<1x32xf32>
    %602 = arith.mulf %593, %581 : vector<1x32xf32>
    %603 = arith.mulf %587, %595 : vector<1x32xf32>
    %604 = arith.addf %602, %603 : vector<1x32xf32>
    %605 = math.tanh %604 : vector<1x32xf32>
    %606 = arith.mulf %601, %605 : vector<1x32xf32>
    %607 = vector.extract_strided_slice %570 {offsets = [0, 32], sizes = [1, 32], strides = [1, 1]} : vector<1x64xf32> to vector<1x32xf32>
    %608 = vector.extract_strided_slice %580 {offsets = [0, 0], sizes = [1, 32], strides = [1, 1]} : vector<1x128xf32> to vector<1x32xf32>
    %609 = arith.negf %608 : vector<1x32xf32>
    %610 = math.exp %609 : vector<1x32xf32>
    %cst_133 = arith.constant 1.000000e+00 : f32
    %611 = vector.broadcast %cst_133 : f32 to vector<1x32xf32>
    %612 = arith.addf %611, %610 : vector<1x32xf32>
    %613 = arith.divf %611, %612 : vector<1x32xf32>
    %614 = vector.extract_strided_slice %580 {offsets = [0, 32], sizes = [1, 32], strides = [1, 1]} : vector<1x128xf32> to vector<1x32xf32>
    %615 = arith.negf %614 : vector<1x32xf32>
    %616 = math.exp %615 : vector<1x32xf32>
    %cst_134 = arith.constant 1.000000e+00 : f32
    %617 = vector.broadcast %cst_134 : f32 to vector<1x32xf32>
    %618 = arith.addf %617, %616 : vector<1x32xf32>
    %619 = arith.divf %617, %618 : vector<1x32xf32>
    %620 = vector.extract_strided_slice %580 {offsets = [0, 64], sizes = [1, 32], strides = [1, 1]} : vector<1x128xf32> to vector<1x32xf32>
    %621 = math.tanh %620 : vector<1x32xf32>
    %622 = vector.extract_strided_slice %580 {offsets = [0, 96], sizes = [1, 32], strides = [1, 1]} : vector<1x128xf32> to vector<1x32xf32>
    %623 = arith.negf %622 : vector<1x32xf32>
    %624 = math.exp %623 : vector<1x32xf32>
    %cst_135 = arith.constant 1.000000e+00 : f32
    %625 = vector.broadcast %cst_135 : f32 to vector<1x32xf32>
    %626 = arith.addf %625, %624 : vector<1x32xf32>
    %627 = arith.divf %625, %626 : vector<1x32xf32>
    %628 = arith.mulf %619, %607 : vector<1x32xf32>
    %629 = arith.mulf %613, %621 : vector<1x32xf32>
    %630 = arith.addf %628, %629 : vector<1x32xf32>
    %631 = math.tanh %630 : vector<1x32xf32>
    %632 = arith.mulf %627, %631 : vector<1x32xf32>
    %633 = arith.index_cast %c0_i32_125 : i32 to index
    %c0_136 = arith.constant 0 : index
    %634 = vector.load %arg20[%633, %c0_136] : memref<8x32xf32, #tpu.memory_space<vmem>>, vector<1x32xf32>
    tpu.vector_store %arg20[%633, %c0_136], %606 {strides = array<i32>} : memref<8x32xf32, #tpu.memory_space<vmem>>, vector<1x32xf32>,
    %635 = arith.index_cast %571 : i32 to index
    %c0_137 = arith.constant 0 : index
    %636 = vector.load %arg21[%635, %c0_137] : memref<8x32xf32, #tpu.memory_space<vmem>>, vector<1x32xf32>
    tpu.vector_store %arg21[%635, %c0_137], %632 {strides = array<i32>} : memref<8x32xf32, #tpu.memory_space<vmem>>, vector<1x32xf32>,
    %637 = tpu.concatenate %606, %632 in 1 : vector<1x32xf32>, vector<1x32xf32> -> vector<1x64xf32>
    %638 = tpu.concatenate %604, %630 in 1 : vector<1x32xf32>, vector<1x32xf32> -> vector<1x64xf32>
    %c1_i32_138 = arith.constant 1 : i32
    %c7_i32_139 = arith.constant 7 : i32
    %639 = arith.subi %c7_i32_139, %c1_i32_138 : i32
    %cst_140 = arith.constant dense<0.000000e+00> : vector<1x256xf32>
    %640 = tpu.matmul %637, %568, %cst_140 {dimension_numbers = #tpu.dot_dimension_numbers<[1], [0], [0], [1], [0, 0, 1, 1], [], []>} : vector<1x64xf32>, vector<64x256xf32>, vector<1x256xf32> -> vector<1x256xf32>
    %641 = arith.index_cast %c1_i32_138 : i32 to index
    %c0_141 = arith.constant 0 : index
    %642 = vector.load %arg19[%641, %c0_141] : memref<8x256xf32, #tpu.memory_space<vmem>>, vector<1x128xf32>
    %643 = vector.extract_strided_slice %640 {offsets = [0, 0], sizes = [1, 128], strides = [1, 1]} : vector<1x256xf32> to vector<1x128xf32>
    %644 = arith.addf %642, %643 : vector<1x128xf32>
    %645 = arith.index_cast %639 : i32 to index
    %c128_142 = arith.constant 128 : index
    %646 = vector.load %arg19[%645, %c128_142] : memref<8x256xf32, #tpu.memory_space<vmem>>, vector<1x128xf32>
    %647 = vector.extract_strided_slice %640 {offsets = [0, 128], sizes = [1, 128], strides = [1, 1]} : vector<1x256xf32> to vector<1x128xf32>
    %648 = arith.addf %646, %647 : vector<1x128xf32>
    %649 = vector.extract_strided_slice %638 {offsets = [0, 0], sizes = [1, 32], strides = [1, 1]} : vector<1x64xf32> to vector<1x32xf32>
    %650 = vector.extract_strided_slice %644 {offsets = [0, 0], sizes = [1, 32], strides = [1, 1]} : vector<1x128xf32> to vector<1x32xf32>
    %651 = arith.negf %650 : vector<1x32xf32>
    %652 = math.exp %651 : vector<1x32xf32>
    %cst_143 = arith.constant 1.000000e+00 : f32
    %653 = vector.broadcast %cst_143 : f32 to vector<1x32xf32>
    %654 = arith.addf %653, %652 : vector<1x32xf32>
    %655 = arith.divf %653, %654 : vector<1x32xf32>
    %656 = vector.extract_strided_slice %644 {offsets = [0, 32], sizes = [1, 32], strides = [1, 1]} : vector<1x128xf32> to vector<1x32xf32>
    %657 = arith.negf %656 : vector<1x32xf32>
    %658 = math.exp %657 : vector<1x32xf32>
    %cst_144 = arith.constant 1.000000e+00 : f32
    %659 = vector.broadcast %cst_144 : f32 to vector<1x32xf32>
    %660 = arith.addf %659, %658 : vector<1x32xf32>
    %661 = arith.divf %659, %660 : vector<1x32xf32>
    %662 = vector.extract_strided_slice %644 {offsets = [0, 64], sizes = [1, 32], strides = [1, 1]} : vector<1x128xf32> to vector<1x32xf32>
    %663 = math.tanh %662 : vector<1x32xf32>
    %664 = vector.extract_strided_slice %644 {offsets = [0, 96], sizes = [1, 32], strides = [1, 1]} : vector<1x128xf32> to vector<1x32xf32>
    %665 = arith.negf %664 : vector<1x32xf32>
    %666 = math.exp %665 : vector<1x32xf32>
    %cst_145 = arith.constant 1.000000e+00 : f32
    %667 = vector.broadcast %cst_145 : f32 to vector<1x32xf32>
    %668 = arith.addf %667, %666 : vector<1x32xf32>
    %669 = arith.divf %667, %668 : vector<1x32xf32>
    %670 = arith.mulf %661, %649 : vector<1x32xf32>
    %671 = arith.mulf %655, %663 : vector<1x32xf32>
    %672 = arith.addf %670, %671 : vector<1x32xf32>
    %673 = math.tanh %672 : vector<1x32xf32>
    %674 = arith.mulf %669, %673 : vector<1x32xf32>
    %675 = vector.extract_strided_slice %638 {offsets = [0, 32], sizes = [1, 32], strides = [1, 1]} : vector<1x64xf32> to vector<1x32xf32>
    %676 = vector.extract_strided_slice %648 {offsets = [0, 0], sizes = [1, 32], strides = [1, 1]} : vector<1x128xf32> to vector<1x32xf32>
    %677 = arith.negf %676 : vector<1x32xf32>
    %678 = math.exp %677 : vector<1x32xf32>
    %cst_146 = arith.constant 1.000000e+00 : f32
    %679 = vector.broadcast %cst_146 : f32 to vector<1x32xf32>
    %680 = arith.addf %679, %678 : vector<1x32xf32>
    %681 = arith.divf %679, %680 : vector<1x32xf32>
    %682 = vector.extract_strided_slice %648 {offsets = [0, 32], sizes = [1, 32], strides = [1, 1]} : vector<1x128xf32> to vector<1x32xf32>
    %683 = arith.negf %682 : vector<1x32xf32>
    %684 = math.exp %683 : vector<1x32xf32>
    %cst_147 = arith.constant 1.000000e+00 : f32
    %685 = vector.broadcast %cst_147 : f32 to vector<1x32xf32>
    %686 = arith.addf %685, %684 : vector<1x32xf32>
    %687 = arith.divf %685, %686 : vector<1x32xf32>
    %688 = vector.extract_strided_slice %648 {offsets = [0, 64], sizes = [1, 32], strides = [1, 1]} : vector<1x128xf32> to vector<1x32xf32>
    %689 = math.tanh %688 : vector<1x32xf32>
    %690 = vector.extract_strided_slice %648 {offsets = [0, 96], sizes = [1, 32], strides = [1, 1]} : vector<1x128xf32> to vector<1x32xf32>
    %691 = arith.negf %690 : vector<1x32xf32>
    %692 = math.exp %691 : vector<1x32xf32>
    %cst_148 = arith.constant 1.000000e+00 : f32
    %693 = vector.broadcast %cst_148 : f32 to vector<1x32xf32>
    %694 = arith.addf %693, %692 : vector<1x32xf32>
    %695 = arith.divf %693, %694 : vector<1x32xf32>
    %696 = arith.mulf %687, %675 : vector<1x32xf32>
    %697 = arith.mulf %681, %689 : vector<1x32xf32>
    %698 = arith.addf %696, %697 : vector<1x32xf32>
    %699 = math.tanh %698 : vector<1x32xf32>
    %700 = arith.mulf %695, %699 : vector<1x32xf32>
    %701 = arith.index_cast %c1_i32_138 : i32 to index
    %c0_149 = arith.constant 0 : index
    %702 = vector.load %arg20[%701, %c0_149] : memref<8x32xf32, #tpu.memory_space<vmem>>, vector<1x32xf32>
    tpu.vector_store %arg20[%701, %c0_149], %674 {strides = array<i32>} : memref<8x32xf32, #tpu.memory_space<vmem>>, vector<1x32xf32>,
    %703 = arith.index_cast %639 : i32 to index
    %c0_150 = arith.constant 0 : index
    %704 = vector.load %arg21[%703, %c0_150] : memref<8x32xf32, #tpu.memory_space<vmem>>, vector<1x32xf32>
    tpu.vector_store %arg21[%703, %c0_150], %700 {strides = array<i32>} : memref<8x32xf32, #tpu.memory_space<vmem>>, vector<1x32xf32>,
    %705 = tpu.concatenate %674, %700 in 1 : vector<1x32xf32>, vector<1x32xf32> -> vector<1x64xf32>
    %706 = tpu.concatenate %672, %698 in 1 : vector<1x32xf32>, vector<1x32xf32> -> vector<1x64xf32>
    %c2_i32_151 = arith.constant 2 : i32
    %c7_i32_152 = arith.constant 7 : i32
    %707 = arith.subi %c7_i32_152, %c2_i32_151 : i32
    %cst_153 = arith.constant dense<0.000000e+00> : vector<1x256xf32>
    %708 = tpu.matmul %705, %568, %cst_153 {dimension_numbers = #tpu.dot_dimension_numbers<[1], [0], [0], [1], [0, 0, 1, 1], [], []>} : vector<1x64xf32>, vector<64x256xf32>, vector<1x256xf32> -> vector<1x256xf32>
    %709 = arith.index_cast %c2_i32_151 : i32 to index
    %c0_154 = arith.constant 0 : index
    %710 = vector.load %arg19[%709, %c0_154] : memref<8x256xf32, #tpu.memory_space<vmem>>, vector<1x128xf32>
    %711 = vector.extract_strided_slice %708 {offsets = [0, 0], sizes = [1, 128], strides = [1, 1]} : vector<1x256xf32> to vector<1x128xf32>
    %712 = arith.addf %710, %711 : vector<1x128xf32>
    %713 = arith.index_cast %707 : i32 to index
    %c128_155 = arith.constant 128 : index
    %714 = vector.load %arg19[%713, %c128_155] : memref<8x256xf32, #tpu.memory_space<vmem>>, vector<1x128xf32>
    %715 = vector.extract_strided_slice %708 {offsets = [0, 128], sizes = [1, 128], strides = [1, 1]} : vector<1x256xf32> to vector<1x128xf32>
    %716 = arith.addf %714, %715 : vector<1x128xf32>
    %717 = vector.extract_strided_slice %706 {offsets = [0, 0], sizes = [1, 32], strides = [1, 1]} : vector<1x64xf32> to vector<1x32xf32>
    %718 = vector.extract_strided_slice %712 {offsets = [0, 0], sizes = [1, 32], strides = [1, 1]} : vector<1x128xf32> to vector<1x32xf32>
    %719 = arith.negf %718 : vector<1x32xf32>
    %720 = math.exp %719 : vector<1x32xf32>
    %cst_156 = arith.constant 1.000000e+00 : f32
    %721 = vector.broadcast %cst_156 : f32 to vector<1x32xf32>
    %722 = arith.addf %721, %720 : vector<1x32xf32>
    %723 = arith.divf %721, %722 : vector<1x32xf32>
    %724 = vector.extract_strided_slice %712 {offsets = [0, 32], sizes = [1, 32], strides = [1, 1]} : vector<1x128xf32> to vector<1x32xf32>
    %725 = arith.negf %724 : vector<1x32xf32>
    %726 = math.exp %725 : vector<1x32xf32>
    %cst_157 = arith.constant 1.000000e+00 : f32
    %727 = vector.broadcast %cst_157 : f32 to vector<1x32xf32>
    %728 = arith.addf %727, %726 : vector<1x32xf32>
    %729 = arith.divf %727, %728 : vector<1x32xf32>
    %730 = vector.extract_strided_slice %712 {offsets = [0, 64], sizes = [1, 32], strides = [1, 1]} : vector<1x128xf32> to vector<1x32xf32>
    %731 = math.tanh %730 : vector<1x32xf32>
    %732 = vector.extract_strided_slice %712 {offsets = [0, 96], sizes = [1, 32], strides = [1, 1]} : vector<1x128xf32> to vector<1x32xf32>
    %733 = arith.negf %732 : vector<1x32xf32>
    %734 = math.exp %733 : vector<1x32xf32>
    %cst_158 = arith.constant 1.000000e+00 : f32
    %735 = vector.broadcast %cst_158 : f32 to vector<1x32xf32>
    %736 = arith.addf %735, %734 : vector<1x32xf32>
    %737 = arith.divf %735, %736 : vector<1x32xf32>
    %738 = arith.mulf %729, %717 : vector<1x32xf32>
    %739 = arith.mulf %723, %731 : vector<1x32xf32>
    %740 = arith.addf %738, %739 : vector<1x32xf32>
    %741 = math.tanh %740 : vector<1x32xf32>
    %742 = arith.mulf %737, %741 : vector<1x32xf32>
    %743 = vector.extract_strided_slice %706 {offsets = [0, 32], sizes = [1, 32], strides = [1, 1]} : vector<1x64xf32> to vector<1x32xf32>
    %744 = vector.extract_strided_slice %716 {offsets = [0, 0], sizes = [1, 32], strides = [1, 1]} : vector<1x128xf32> to vector<1x32xf32>
    %745 = arith.negf %744 : vector<1x32xf32>
    %746 = math.exp %745 : vector<1x32xf32>
    %cst_159 = arith.constant 1.000000e+00 : f32
    %747 = vector.broadcast %cst_159 : f32 to vector<1x32xf32>
    %748 = arith.addf %747, %746 : vector<1x32xf32>
    %749 = arith.divf %747, %748 : vector<1x32xf32>
    %750 = vector.extract_strided_slice %716 {offsets = [0, 32], sizes = [1, 32], strides = [1, 1]} : vector<1x128xf32> to vector<1x32xf32>
    %751 = arith.negf %750 : vector<1x32xf32>
    %752 = math.exp %751 : vector<1x32xf32>
    %cst_160 = arith.constant 1.000000e+00 : f32
    %753 = vector.broadcast %cst_160 : f32 to vector<1x32xf32>
    %754 = arith.addf %753, %752 : vector<1x32xf32>
    %755 = arith.divf %753, %754 : vector<1x32xf32>
    %756 = vector.extract_strided_slice %716 {offsets = [0, 64], sizes = [1, 32], strides = [1, 1]} : vector<1x128xf32> to vector<1x32xf32>
    %757 = math.tanh %756 : vector<1x32xf32>
    %758 = vector.extract_strided_slice %716 {offsets = [0, 96], sizes = [1, 32], strides = [1, 1]} : vector<1x128xf32> to vector<1x32xf32>
    %759 = arith.negf %758 : vector<1x32xf32>
    %760 = math.exp %759 : vector<1x32xf32>
    %cst_161 = arith.constant 1.000000e+00 : f32
    %761 = vector.broadcast %cst_161 : f32 to vector<1x32xf32>
    %762 = arith.addf %761, %760 : vector<1x32xf32>
    %763 = arith.divf %761, %762 : vector<1x32xf32>
    %764 = arith.mulf %755, %743 : vector<1x32xf32>
    %765 = arith.mulf %749, %757 : vector<1x32xf32>
    %766 = arith.addf %764, %765 : vector<1x32xf32>
    %767 = math.tanh %766 : vector<1x32xf32>
    %768 = arith.mulf %763, %767 : vector<1x32xf32>
    %769 = arith.index_cast %c2_i32_151 : i32 to index
    %c0_162 = arith.constant 0 : index
    %770 = vector.load %arg20[%769, %c0_162] : memref<8x32xf32, #tpu.memory_space<vmem>>, vector<1x32xf32>
    tpu.vector_store %arg20[%769, %c0_162], %742 {strides = array<i32>} : memref<8x32xf32, #tpu.memory_space<vmem>>, vector<1x32xf32>,
    %771 = arith.index_cast %707 : i32 to index
    %c0_163 = arith.constant 0 : index
    %772 = vector.load %arg21[%771, %c0_163] : memref<8x32xf32, #tpu.memory_space<vmem>>, vector<1x32xf32>
    tpu.vector_store %arg21[%771, %c0_163], %768 {strides = array<i32>} : memref<8x32xf32, #tpu.memory_space<vmem>>, vector<1x32xf32>,
    %773 = tpu.concatenate %742, %768 in 1 : vector<1x32xf32>, vector<1x32xf32> -> vector<1x64xf32>
    %774 = tpu.concatenate %740, %766 in 1 : vector<1x32xf32>, vector<1x32xf32> -> vector<1x64xf32>
    %c3_i32_164 = arith.constant 3 : i32
    %c7_i32_165 = arith.constant 7 : i32
    %775 = arith.subi %c7_i32_165, %c3_i32_164 : i32
    %cst_166 = arith.constant dense<0.000000e+00> : vector<1x256xf32>
    %776 = tpu.matmul %773, %568, %cst_166 {dimension_numbers = #tpu.dot_dimension_numbers<[1], [0], [0], [1], [0, 0, 1, 1], [], []>} : vector<1x64xf32>, vector<64x256xf32>, vector<1x256xf32> -> vector<1x256xf32>
    %777 = arith.index_cast %c3_i32_164 : i32 to index
    %c0_167 = arith.constant 0 : index
    %778 = vector.load %arg19[%777, %c0_167] : memref<8x256xf32, #tpu.memory_space<vmem>>, vector<1x128xf32>
    %779 = vector.extract_strided_slice %776 {offsets = [0, 0], sizes = [1, 128], strides = [1, 1]} : vector<1x256xf32> to vector<1x128xf32>
    %780 = arith.addf %778, %779 : vector<1x128xf32>
    %781 = arith.index_cast %775 : i32 to index
    %c128_168 = arith.constant 128 : index
    %782 = vector.load %arg19[%781, %c128_168] : memref<8x256xf32, #tpu.memory_space<vmem>>, vector<1x128xf32>
    %783 = vector.extract_strided_slice %776 {offsets = [0, 128], sizes = [1, 128], strides = [1, 1]} : vector<1x256xf32> to vector<1x128xf32>
    %784 = arith.addf %782, %783 : vector<1x128xf32>
    %785 = vector.extract_strided_slice %774 {offsets = [0, 0], sizes = [1, 32], strides = [1, 1]} : vector<1x64xf32> to vector<1x32xf32>
    %786 = vector.extract_strided_slice %780 {offsets = [0, 0], sizes = [1, 32], strides = [1, 1]} : vector<1x128xf32> to vector<1x32xf32>
    %787 = arith.negf %786 : vector<1x32xf32>
    %788 = math.exp %787 : vector<1x32xf32>
    %cst_169 = arith.constant 1.000000e+00 : f32
    %789 = vector.broadcast %cst_169 : f32 to vector<1x32xf32>
    %790 = arith.addf %789, %788 : vector<1x32xf32>
    %791 = arith.divf %789, %790 : vector<1x32xf32>
    %792 = vector.extract_strided_slice %780 {offsets = [0, 32], sizes = [1, 32], strides = [1, 1]} : vector<1x128xf32> to vector<1x32xf32>
    %793 = arith.negf %792 : vector<1x32xf32>
    %794 = math.exp %793 : vector<1x32xf32>
    %cst_170 = arith.constant 1.000000e+00 : f32
    %795 = vector.broadcast %cst_170 : f32 to vector<1x32xf32>
    %796 = arith.addf %795, %794 : vector<1x32xf32>
    %797 = arith.divf %795, %796 : vector<1x32xf32>
    %798 = vector.extract_strided_slice %780 {offsets = [0, 64], sizes = [1, 32], strides = [1, 1]} : vector<1x128xf32> to vector<1x32xf32>
    %799 = math.tanh %798 : vector<1x32xf32>
    %800 = vector.extract_strided_slice %780 {offsets = [0, 96], sizes = [1, 32], strides = [1, 1]} : vector<1x128xf32> to vector<1x32xf32>
    %801 = arith.negf %800 : vector<1x32xf32>
    %802 = math.exp %801 : vector<1x32xf32>
    %cst_171 = arith.constant 1.000000e+00 : f32
    %803 = vector.broadcast %cst_171 : f32 to vector<1x32xf32>
    %804 = arith.addf %803, %802 : vector<1x32xf32>
    %805 = arith.divf %803, %804 : vector<1x32xf32>
    %806 = arith.mulf %797, %785 : vector<1x32xf32>
    %807 = arith.mulf %791, %799 : vector<1x32xf32>
    %808 = arith.addf %806, %807 : vector<1x32xf32>
    %809 = math.tanh %808 : vector<1x32xf32>
    %810 = arith.mulf %805, %809 : vector<1x32xf32>
    %811 = vector.extract_strided_slice %774 {offsets = [0, 32], sizes = [1, 32], strides = [1, 1]} : vector<1x64xf32> to vector<1x32xf32>
    %812 = vector.extract_strided_slice %784 {offsets = [0, 0], sizes = [1, 32], strides = [1, 1]} : vector<1x128xf32> to vector<1x32xf32>
    %813 = arith.negf %812 : vector<1x32xf32>
    %814 = math.exp %813 : vector<1x32xf32>
    %cst_172 = arith.constant 1.000000e+00 : f32
    %815 = vector.broadcast %cst_172 : f32 to vector<1x32xf32>
    %816 = arith.addf %815, %814 : vector<1x32xf32>
    %817 = arith.divf %815, %816 : vector<1x32xf32>
    %818 = vector.extract_strided_slice %784 {offsets = [0, 32], sizes = [1, 32], strides = [1, 1]} : vector<1x128xf32> to vector<1x32xf32>
    %819 = arith.negf %818 : vector<1x32xf32>
    %820 = math.exp %819 : vector<1x32xf32>
    %cst_173 = arith.constant 1.000000e+00 : f32
    %821 = vector.broadcast %cst_173 : f32 to vector<1x32xf32>
    %822 = arith.addf %821, %820 : vector<1x32xf32>
    %823 = arith.divf %821, %822 : vector<1x32xf32>
    %824 = vector.extract_strided_slice %784 {offsets = [0, 64], sizes = [1, 32], strides = [1, 1]} : vector<1x128xf32> to vector<1x32xf32>
    %825 = math.tanh %824 : vector<1x32xf32>
    %826 = vector.extract_strided_slice %784 {offsets = [0, 96], sizes = [1, 32], strides = [1, 1]} : vector<1x128xf32> to vector<1x32xf32>
    %827 = arith.negf %826 : vector<1x32xf32>
    %828 = math.exp %827 : vector<1x32xf32>
    %cst_174 = arith.constant 1.000000e+00 : f32
    %829 = vector.broadcast %cst_174 : f32 to vector<1x32xf32>
    %830 = arith.addf %829, %828 : vector<1x32xf32>
    %831 = arith.divf %829, %830 : vector<1x32xf32>
    %832 = arith.mulf %823, %811 : vector<1x32xf32>
    %833 = arith.mulf %817, %825 : vector<1x32xf32>
    %834 = arith.addf %832, %833 : vector<1x32xf32>
    %835 = math.tanh %834 : vector<1x32xf32>
    %836 = arith.mulf %831, %835 : vector<1x32xf32>
    %837 = arith.index_cast %c3_i32_164 : i32 to index
    %c0_175 = arith.constant 0 : index
    %838 = vector.load %arg20[%837, %c0_175] : memref<8x32xf32, #tpu.memory_space<vmem>>, vector<1x32xf32>
    tpu.vector_store %arg20[%837, %c0_175], %810 {strides = array<i32>} : memref<8x32xf32, #tpu.memory_space<vmem>>, vector<1x32xf32>,
    %839 = arith.index_cast %775 : i32 to index
    %c0_176 = arith.constant 0 : index
    %840 = vector.load %arg21[%839, %c0_176] : memref<8x32xf32, #tpu.memory_space<vmem>>, vector<1x32xf32>
    tpu.vector_store %arg21[%839, %c0_176], %836 {strides = array<i32>} : memref<8x32xf32, #tpu.memory_space<vmem>>, vector<1x32xf32>,
    %841 = tpu.concatenate %810, %836 in 1 : vector<1x32xf32>, vector<1x32xf32> -> vector<1x64xf32>
    %842 = tpu.concatenate %808, %834 in 1 : vector<1x32xf32>, vector<1x32xf32> -> vector<1x64xf32>
    %c4_i32_177 = arith.constant 4 : i32
    %c7_i32_178 = arith.constant 7 : i32
    %843 = arith.subi %c7_i32_178, %c4_i32_177 : i32
    %cst_179 = arith.constant dense<0.000000e+00> : vector<1x256xf32>
    %844 = tpu.matmul %841, %568, %cst_179 {dimension_numbers = #tpu.dot_dimension_numbers<[1], [0], [0], [1], [0, 0, 1, 1], [], []>} : vector<1x64xf32>, vector<64x256xf32>, vector<1x256xf32> -> vector<1x256xf32>
    %845 = arith.index_cast %c4_i32_177 : i32 to index
    %c0_180 = arith.constant 0 : index
    %846 = vector.load %arg19[%845, %c0_180] : memref<8x256xf32, #tpu.memory_space<vmem>>, vector<1x128xf32>
    %847 = vector.extract_strided_slice %844 {offsets = [0, 0], sizes = [1, 128], strides = [1, 1]} : vector<1x256xf32> to vector<1x128xf32>
    %848 = arith.addf %846, %847 : vector<1x128xf32>
    %849 = arith.index_cast %843 : i32 to index
    %c128_181 = arith.constant 128 : index
    %850 = vector.load %arg19[%849, %c128_181] : memref<8x256xf32, #tpu.memory_space<vmem>>, vector<1x128xf32>
    %851 = vector.extract_strided_slice %844 {offsets = [0, 128], sizes = [1, 128], strides = [1, 1]} : vector<1x256xf32> to vector<1x128xf32>
    %852 = arith.addf %850, %851 : vector<1x128xf32>
    %853 = vector.extract_strided_slice %842 {offsets = [0, 0], sizes = [1, 32], strides = [1, 1]} : vector<1x64xf32> to vector<1x32xf32>
    %854 = vector.extract_strided_slice %848 {offsets = [0, 0], sizes = [1, 32], strides = [1, 1]} : vector<1x128xf32> to vector<1x32xf32>
    %855 = arith.negf %854 : vector<1x32xf32>
    %856 = math.exp %855 : vector<1x32xf32>
    %cst_182 = arith.constant 1.000000e+00 : f32
    %857 = vector.broadcast %cst_182 : f32 to vector<1x32xf32>
    %858 = arith.addf %857, %856 : vector<1x32xf32>
    %859 = arith.divf %857, %858 : vector<1x32xf32>
    %860 = vector.extract_strided_slice %848 {offsets = [0, 32], sizes = [1, 32], strides = [1, 1]} : vector<1x128xf32> to vector<1x32xf32>
    %861 = arith.negf %860 : vector<1x32xf32>
    %862 = math.exp %861 : vector<1x32xf32>
    %cst_183 = arith.constant 1.000000e+00 : f32
    %863 = vector.broadcast %cst_183 : f32 to vector<1x32xf32>
    %864 = arith.addf %863, %862 : vector<1x32xf32>
    %865 = arith.divf %863, %864 : vector<1x32xf32>
    %866 = vector.extract_strided_slice %848 {offsets = [0, 64], sizes = [1, 32], strides = [1, 1]} : vector<1x128xf32> to vector<1x32xf32>
    %867 = math.tanh %866 : vector<1x32xf32>
    %868 = vector.extract_strided_slice %848 {offsets = [0, 96], sizes = [1, 32], strides = [1, 1]} : vector<1x128xf32> to vector<1x32xf32>
    %869 = arith.negf %868 : vector<1x32xf32>
    %870 = math.exp %869 : vector<1x32xf32>
    %cst_184 = arith.constant 1.000000e+00 : f32
    %871 = vector.broadcast %cst_184 : f32 to vector<1x32xf32>
    %872 = arith.addf %871, %870 : vector<1x32xf32>
    %873 = arith.divf %871, %872 : vector<1x32xf32>
    %874 = arith.mulf %865, %853 : vector<1x32xf32>
    %875 = arith.mulf %859, %867 : vector<1x32xf32>
    %876 = arith.addf %874, %875 : vector<1x32xf32>
    %877 = math.tanh %876 : vector<1x32xf32>
    %878 = arith.mulf %873, %877 : vector<1x32xf32>
    %879 = vector.extract_strided_slice %842 {offsets = [0, 32], sizes = [1, 32], strides = [1, 1]} : vector<1x64xf32> to vector<1x32xf32>
    %880 = vector.extract_strided_slice %852 {offsets = [0, 0], sizes = [1, 32], strides = [1, 1]} : vector<1x128xf32> to vector<1x32xf32>
    %881 = arith.negf %880 : vector<1x32xf32>
    %882 = math.exp %881 : vector<1x32xf32>
    %cst_185 = arith.constant 1.000000e+00 : f32
    %883 = vector.broadcast %cst_185 : f32 to vector<1x32xf32>
    %884 = arith.addf %883, %882 : vector<1x32xf32>
    %885 = arith.divf %883, %884 : vector<1x32xf32>
    %886 = vector.extract_strided_slice %852 {offsets = [0, 32], sizes = [1, 32], strides = [1, 1]} : vector<1x128xf32> to vector<1x32xf32>
    %887 = arith.negf %886 : vector<1x32xf32>
    %888 = math.exp %887 : vector<1x32xf32>
    %cst_186 = arith.constant 1.000000e+00 : f32
    %889 = vector.broadcast %cst_186 : f32 to vector<1x32xf32>
    %890 = arith.addf %889, %888 : vector<1x32xf32>
    %891 = arith.divf %889, %890 : vector<1x32xf32>
    %892 = vector.extract_strided_slice %852 {offsets = [0, 64], sizes = [1, 32], strides = [1, 1]} : vector<1x128xf32> to vector<1x32xf32>
    %893 = math.tanh %892 : vector<1x32xf32>
    %894 = vector.extract_strided_slice %852 {offsets = [0, 96], sizes = [1, 32], strides = [1, 1]} : vector<1x128xf32> to vector<1x32xf32>
    %895 = arith.negf %894 : vector<1x32xf32>
    %896 = math.exp %895 : vector<1x32xf32>
    %cst_187 = arith.constant 1.000000e+00 : f32
    %897 = vector.broadcast %cst_187 : f32 to vector<1x32xf32>
    %898 = arith.addf %897, %896 : vector<1x32xf32>
    %899 = arith.divf %897, %898 : vector<1x32xf32>
    %900 = arith.mulf %891, %879 : vector<1x32xf32>
    %901 = arith.mulf %885, %893 : vector<1x32xf32>
    %902 = arith.addf %900, %901 : vector<1x32xf32>
    %903 = math.tanh %902 : vector<1x32xf32>
    %904 = arith.mulf %899, %903 : vector<1x32xf32>
    %905 = arith.index_cast %c4_i32_177 : i32 to index
    %c0_188 = arith.constant 0 : index
    %906 = vector.load %arg20[%905, %c0_188] : memref<8x32xf32, #tpu.memory_space<vmem>>, vector<1x32xf32>
    tpu.vector_store %arg20[%905, %c0_188], %878 {strides = array<i32>} : memref<8x32xf32, #tpu.memory_space<vmem>>, vector<1x32xf32>,
    %907 = arith.index_cast %843 : i32 to index
    %c0_189 = arith.constant 0 : index
    %908 = vector.load %arg21[%907, %c0_189] : memref<8x32xf32, #tpu.memory_space<vmem>>, vector<1x32xf32>
    tpu.vector_store %arg21[%907, %c0_189], %904 {strides = array<i32>} : memref<8x32xf32, #tpu.memory_space<vmem>>, vector<1x32xf32>,
    %909 = tpu.concatenate %878, %904 in 1 : vector<1x32xf32>, vector<1x32xf32> -> vector<1x64xf32>
    %910 = tpu.concatenate %876, %902 in 1 : vector<1x32xf32>, vector<1x32xf32> -> vector<1x64xf32>
    %c5_i32_190 = arith.constant 5 : i32
    %c7_i32_191 = arith.constant 7 : i32
    %911 = arith.subi %c7_i32_191, %c5_i32_190 : i32
    %cst_192 = arith.constant dense<0.000000e+00> : vector<1x256xf32>
    %912 = tpu.matmul %909, %568, %cst_192 {dimension_numbers = #tpu.dot_dimension_numbers<[1], [0], [0], [1], [0, 0, 1, 1], [], []>} : vector<1x64xf32>, vector<64x256xf32>, vector<1x256xf32> -> vector<1x256xf32>
    %913 = arith.index_cast %c5_i32_190 : i32 to index
    %c0_193 = arith.constant 0 : index
    %914 = vector.load %arg19[%913, %c0_193] : memref<8x256xf32, #tpu.memory_space<vmem>>, vector<1x128xf32>
    %915 = vector.extract_strided_slice %912 {offsets = [0, 0], sizes = [1, 128], strides = [1, 1]} : vector<1x256xf32> to vector<1x128xf32>
    %916 = arith.addf %914, %915 : vector<1x128xf32>
    %917 = arith.index_cast %911 : i32 to index
    %c128_194 = arith.constant 128 : index
    %918 = vector.load %arg19[%917, %c128_194] : memref<8x256xf32, #tpu.memory_space<vmem>>, vector<1x128xf32>
    %919 = vector.extract_strided_slice %912 {offsets = [0, 128], sizes = [1, 128], strides = [1, 1]} : vector<1x256xf32> to vector<1x128xf32>
    %920 = arith.addf %918, %919 : vector<1x128xf32>
    %921 = vector.extract_strided_slice %910 {offsets = [0, 0], sizes = [1, 32], strides = [1, 1]} : vector<1x64xf32> to vector<1x32xf32>
    %922 = vector.extract_strided_slice %916 {offsets = [0, 0], sizes = [1, 32], strides = [1, 1]} : vector<1x128xf32> to vector<1x32xf32>
    %923 = arith.negf %922 : vector<1x32xf32>
    %924 = math.exp %923 : vector<1x32xf32>
    %cst_195 = arith.constant 1.000000e+00 : f32
    %925 = vector.broadcast %cst_195 : f32 to vector<1x32xf32>
    %926 = arith.addf %925, %924 : vector<1x32xf32>
    %927 = arith.divf %925, %926 : vector<1x32xf32>
    %928 = vector.extract_strided_slice %916 {offsets = [0, 32], sizes = [1, 32], strides = [1, 1]} : vector<1x128xf32> to vector<1x32xf32>
    %929 = arith.negf %928 : vector<1x32xf32>
    %930 = math.exp %929 : vector<1x32xf32>
    %cst_196 = arith.constant 1.000000e+00 : f32
    %931 = vector.broadcast %cst_196 : f32 to vector<1x32xf32>
    %932 = arith.addf %931, %930 : vector<1x32xf32>
    %933 = arith.divf %931, %932 : vector<1x32xf32>
    %934 = vector.extract_strided_slice %916 {offsets = [0, 64], sizes = [1, 32], strides = [1, 1]} : vector<1x128xf32> to vector<1x32xf32>
    %935 = math.tanh %934 : vector<1x32xf32>
    %936 = vector.extract_strided_slice %916 {offsets = [0, 96], sizes = [1, 32], strides = [1, 1]} : vector<1x128xf32> to vector<1x32xf32>
    %937 = arith.negf %936 : vector<1x32xf32>
    %938 = math.exp %937 : vector<1x32xf32>
    %cst_197 = arith.constant 1.000000e+00 : f32
    %939 = vector.broadcast %cst_197 : f32 to vector<1x32xf32>
    %940 = arith.addf %939, %938 : vector<1x32xf32>
    %941 = arith.divf %939, %940 : vector<1x32xf32>
    %942 = arith.mulf %933, %921 : vector<1x32xf32>
    %943 = arith.mulf %927, %935 : vector<1x32xf32>
    %944 = arith.addf %942, %943 : vector<1x32xf32>
    %945 = math.tanh %944 : vector<1x32xf32>
    %946 = arith.mulf %941, %945 : vector<1x32xf32>
    %947 = vector.extract_strided_slice %910 {offsets = [0, 32], sizes = [1, 32], strides = [1, 1]} : vector<1x64xf32> to vector<1x32xf32>
    %948 = vector.extract_strided_slice %920 {offsets = [0, 0], sizes = [1, 32], strides = [1, 1]} : vector<1x128xf32> to vector<1x32xf32>
    %949 = arith.negf %948 : vector<1x32xf32>
    %950 = math.exp %949 : vector<1x32xf32>
    %cst_198 = arith.constant 1.000000e+00 : f32
    %951 = vector.broadcast %cst_198 : f32 to vector<1x32xf32>
    %952 = arith.addf %951, %950 : vector<1x32xf32>
    %953 = arith.divf %951, %952 : vector<1x32xf32>
    %954 = vector.extract_strided_slice %920 {offsets = [0, 32], sizes = [1, 32], strides = [1, 1]} : vector<1x128xf32> to vector<1x32xf32>
    %955 = arith.negf %954 : vector<1x32xf32>
    %956 = math.exp %955 : vector<1x32xf32>
    %cst_199 = arith.constant 1.000000e+00 : f32
    %957 = vector.broadcast %cst_199 : f32 to vector<1x32xf32>
    %958 = arith.addf %957, %956 : vector<1x32xf32>
    %959 = arith.divf %957, %958 : vector<1x32xf32>
    %960 = vector.extract_strided_slice %920 {offsets = [0, 64], sizes = [1, 32], strides = [1, 1]} : vector<1x128xf32> to vector<1x32xf32>
    %961 = math.tanh %960 : vector<1x32xf32>
    %962 = vector.extract_strided_slice %920 {offsets = [0, 96], sizes = [1, 32], strides = [1, 1]} : vector<1x128xf32> to vector<1x32xf32>
    %963 = arith.negf %962 : vector<1x32xf32>
    %964 = math.exp %963 : vector<1x32xf32>
    %cst_200 = arith.constant 1.000000e+00 : f32
    %965 = vector.broadcast %cst_200 : f32 to vector<1x32xf32>
    %966 = arith.addf %965, %964 : vector<1x32xf32>
    %967 = arith.divf %965, %966 : vector<1x32xf32>
    %968 = arith.mulf %959, %947 : vector<1x32xf32>
    %969 = arith.mulf %953, %961 : vector<1x32xf32>
    %970 = arith.addf %968, %969 : vector<1x32xf32>
    %971 = math.tanh %970 : vector<1x32xf32>
    %972 = arith.mulf %967, %971 : vector<1x32xf32>
    %973 = arith.index_cast %c5_i32_190 : i32 to index
    %c0_201 = arith.constant 0 : index
    %974 = vector.load %arg20[%973, %c0_201] : memref<8x32xf32, #tpu.memory_space<vmem>>, vector<1x32xf32>
    tpu.vector_store %arg20[%973, %c0_201], %946 {strides = array<i32>} : memref<8x32xf32, #tpu.memory_space<vmem>>, vector<1x32xf32>,
    %975 = arith.index_cast %911 : i32 to index
    %c0_202 = arith.constant 0 : index
    %976 = vector.load %arg21[%975, %c0_202] : memref<8x32xf32, #tpu.memory_space<vmem>>, vector<1x32xf32>
    tpu.vector_store %arg21[%975, %c0_202], %972 {strides = array<i32>} : memref<8x32xf32, #tpu.memory_space<vmem>>, vector<1x32xf32>,
    %977 = tpu.concatenate %946, %972 in 1 : vector<1x32xf32>, vector<1x32xf32> -> vector<1x64xf32>
    %978 = tpu.concatenate %944, %970 in 1 : vector<1x32xf32>, vector<1x32xf32> -> vector<1x64xf32>
    %c6_i32_203 = arith.constant 6 : i32
    %c7_i32_204 = arith.constant 7 : i32
    %979 = arith.subi %c7_i32_204, %c6_i32_203 : i32
    %cst_205 = arith.constant dense<0.000000e+00> : vector<1x256xf32>
    %980 = tpu.matmul %977, %568, %cst_205 {dimension_numbers = #tpu.dot_dimension_numbers<[1], [0], [0], [1], [0, 0, 1, 1], [], []>} : vector<1x64xf32>, vector<64x256xf32>, vector<1x256xf32> -> vector<1x256xf32>
    %981 = arith.index_cast %c6_i32_203 : i32 to index
    %c0_206 = arith.constant 0 : index
    %982 = vector.load %arg19[%981, %c0_206] : memref<8x256xf32, #tpu.memory_space<vmem>>, vector<1x128xf32>
    %983 = vector.extract_strided_slice %980 {offsets = [0, 0], sizes = [1, 128], strides = [1, 1]} : vector<1x256xf32> to vector<1x128xf32>
    %984 = arith.addf %982, %983 : vector<1x128xf32>
    %985 = arith.index_cast %979 : i32 to index
    %c128_207 = arith.constant 128 : index
    %986 = vector.load %arg19[%985, %c128_207] : memref<8x256xf32, #tpu.memory_space<vmem>>, vector<1x128xf32>
    %987 = vector.extract_strided_slice %980 {offsets = [0, 128], sizes = [1, 128], strides = [1, 1]} : vector<1x256xf32> to vector<1x128xf32>
    %988 = arith.addf %986, %987 : vector<1x128xf32>
    %989 = vector.extract_strided_slice %978 {offsets = [0, 0], sizes = [1, 32], strides = [1, 1]} : vector<1x64xf32> to vector<1x32xf32>
    %990 = vector.extract_strided_slice %984 {offsets = [0, 0], sizes = [1, 32], strides = [1, 1]} : vector<1x128xf32> to vector<1x32xf32>
    %991 = arith.negf %990 : vector<1x32xf32>
    %992 = math.exp %991 : vector<1x32xf32>
    %cst_208 = arith.constant 1.000000e+00 : f32
    %993 = vector.broadcast %cst_208 : f32 to vector<1x32xf32>
    %994 = arith.addf %993, %992 : vector<1x32xf32>
    %995 = arith.divf %993, %994 : vector<1x32xf32>
    %996 = vector.extract_strided_slice %984 {offsets = [0, 32], sizes = [1, 32], strides = [1, 1]} : vector<1x128xf32> to vector<1x32xf32>
    %997 = arith.negf %996 : vector<1x32xf32>
    %998 = math.exp %997 : vector<1x32xf32>
    %cst_209 = arith.constant 1.000000e+00 : f32
    %999 = vector.broadcast %cst_209 : f32 to vector<1x32xf32>
    %1000 = arith.addf %999, %998 : vector<1x32xf32>
    %1001 = arith.divf %999, %1000 : vector<1x32xf32>
    %1002 = vector.extract_strided_slice %984 {offsets = [0, 64], sizes = [1, 32], strides = [1, 1]} : vector<1x128xf32> to vector<1x32xf32>
    %1003 = math.tanh %1002 : vector<1x32xf32>
    %1004 = vector.extract_strided_slice %984 {offsets = [0, 96], sizes = [1, 32], strides = [1, 1]} : vector<1x128xf32> to vector<1x32xf32>
    %1005 = arith.negf %1004 : vector<1x32xf32>
    %1006 = math.exp %1005 : vector<1x32xf32>
    %cst_210 = arith.constant 1.000000e+00 : f32
    %1007 = vector.broadcast %cst_210 : f32 to vector<1x32xf32>
    %1008 = arith.addf %1007, %1006 : vector<1x32xf32>
    %1009 = arith.divf %1007, %1008 : vector<1x32xf32>
    %1010 = arith.mulf %1001, %989 : vector<1x32xf32>
    %1011 = arith.mulf %995, %1003 : vector<1x32xf32>
    %1012 = arith.addf %1010, %1011 : vector<1x32xf32>
    %1013 = math.tanh %1012 : vector<1x32xf32>
    %1014 = arith.mulf %1009, %1013 : vector<1x32xf32>
    %1015 = vector.extract_strided_slice %978 {offsets = [0, 32], sizes = [1, 32], strides = [1, 1]} : vector<1x64xf32> to vector<1x32xf32>
    %1016 = vector.extract_strided_slice %988 {offsets = [0, 0], sizes = [1, 32], strides = [1, 1]} : vector<1x128xf32> to vector<1x32xf32>
    %1017 = arith.negf %1016 : vector<1x32xf32>
    %1018 = math.exp %1017 : vector<1x32xf32>
    %cst_211 = arith.constant 1.000000e+00 : f32
    %1019 = vector.broadcast %cst_211 : f32 to vector<1x32xf32>
    %1020 = arith.addf %1019, %1018 : vector<1x32xf32>
    %1021 = arith.divf %1019, %1020 : vector<1x32xf32>
    %1022 = vector.extract_strided_slice %988 {offsets = [0, 32], sizes = [1, 32], strides = [1, 1]} : vector<1x128xf32> to vector<1x32xf32>
    %1023 = arith.negf %1022 : vector<1x32xf32>
    %1024 = math.exp %1023 : vector<1x32xf32>
    %cst_212 = arith.constant 1.000000e+00 : f32
    %1025 = vector.broadcast %cst_212 : f32 to vector<1x32xf32>
    %1026 = arith.addf %1025, %1024 : vector<1x32xf32>
    %1027 = arith.divf %1025, %1026 : vector<1x32xf32>
    %1028 = vector.extract_strided_slice %988 {offsets = [0, 64], sizes = [1, 32], strides = [1, 1]} : vector<1x128xf32> to vector<1x32xf32>
    %1029 = math.tanh %1028 : vector<1x32xf32>
    %1030 = vector.extract_strided_slice %988 {offsets = [0, 96], sizes = [1, 32], strides = [1, 1]} : vector<1x128xf32> to vector<1x32xf32>
    %1031 = arith.negf %1030 : vector<1x32xf32>
    %1032 = math.exp %1031 : vector<1x32xf32>
    %cst_213 = arith.constant 1.000000e+00 : f32
    %1033 = vector.broadcast %cst_213 : f32 to vector<1x32xf32>
    %1034 = arith.addf %1033, %1032 : vector<1x32xf32>
    %1035 = arith.divf %1033, %1034 : vector<1x32xf32>
    %1036 = arith.mulf %1027, %1015 : vector<1x32xf32>
    %1037 = arith.mulf %1021, %1029 : vector<1x32xf32>
    %1038 = arith.addf %1036, %1037 : vector<1x32xf32>
    %1039 = math.tanh %1038 : vector<1x32xf32>
    %1040 = arith.mulf %1035, %1039 : vector<1x32xf32>
    %1041 = arith.index_cast %c6_i32_203 : i32 to index
    %c0_214 = arith.constant 0 : index
    %1042 = vector.load %arg20[%1041, %c0_214] : memref<8x32xf32, #tpu.memory_space<vmem>>, vector<1x32xf32>
    tpu.vector_store %arg20[%1041, %c0_214], %1014 {strides = array<i32>} : memref<8x32xf32, #tpu.memory_space<vmem>>, vector<1x32xf32>,
    %1043 = arith.index_cast %979 : i32 to index
    %c0_215 = arith.constant 0 : index
    %1044 = vector.load %arg21[%1043, %c0_215] : memref<8x32xf32, #tpu.memory_space<vmem>>, vector<1x32xf32>
    tpu.vector_store %arg21[%1043, %c0_215], %1040 {strides = array<i32>} : memref<8x32xf32, #tpu.memory_space<vmem>>, vector<1x32xf32>,
    %1045 = tpu.concatenate %1014, %1040 in 1 : vector<1x32xf32>, vector<1x32xf32> -> vector<1x64xf32>
    %1046 = tpu.concatenate %1012, %1038 in 1 : vector<1x32xf32>, vector<1x32xf32> -> vector<1x64xf32>
    %c7_i32_216 = arith.constant 7 : i32
    %c7_i32_217 = arith.constant 7 : i32
    %1047 = arith.subi %c7_i32_217, %c7_i32_216 : i32
    %cst_218 = arith.constant dense<0.000000e+00> : vector<1x256xf32>
    %1048 = tpu.matmul %1045, %568, %cst_218 {dimension_numbers = #tpu.dot_dimension_numbers<[1], [0], [0], [1], [0, 0, 1, 1], [], []>} : vector<1x64xf32>, vector<64x256xf32>, vector<1x256xf32> -> vector<1x256xf32>
    %1049 = arith.index_cast %c7_i32_216 : i32 to index
    %c0_219 = arith.constant 0 : index
    %1050 = vector.load %arg19[%1049, %c0_219] : memref<8x256xf32, #tpu.memory_space<vmem>>, vector<1x128xf32>
    %1051 = vector.extract_strided_slice %1048 {offsets = [0, 0], sizes = [1, 128], strides = [1, 1]} : vector<1x256xf32> to vector<1x128xf32>
    %1052 = arith.addf %1050, %1051 : vector<1x128xf32>
    %1053 = arith.index_cast %1047 : i32 to index
    %c128_220 = arith.constant 128 : index
    %1054 = vector.load %arg19[%1053, %c128_220] : memref<8x256xf32, #tpu.memory_space<vmem>>, vector<1x128xf32>
    %1055 = vector.extract_strided_slice %1048 {offsets = [0, 128], sizes = [1, 128], strides = [1, 1]} : vector<1x256xf32> to vector<1x128xf32>
    %1056 = arith.addf %1054, %1055 : vector<1x128xf32>
    %1057 = vector.extract_strided_slice %1046 {offsets = [0, 0], sizes = [1, 32], strides = [1, 1]} : vector<1x64xf32> to vector<1x32xf32>
    %1058 = vector.extract_strided_slice %1052 {offsets = [0, 0], sizes = [1, 32], strides = [1, 1]} : vector<1x128xf32> to vector<1x32xf32>
    %1059 = arith.negf %1058 : vector<1x32xf32>
    %1060 = math.exp %1059 : vector<1x32xf32>
    %cst_221 = arith.constant 1.000000e+00 : f32
    %1061 = vector.broadcast %cst_221 : f32 to vector<1x32xf32>
    %1062 = arith.addf %1061, %1060 : vector<1x32xf32>
    %1063 = arith.divf %1061, %1062 : vector<1x32xf32>
    %1064 = vector.extract_strided_slice %1052 {offsets = [0, 32], sizes = [1, 32], strides = [1, 1]} : vector<1x128xf32> to vector<1x32xf32>
    %1065 = arith.negf %1064 : vector<1x32xf32>
    %1066 = math.exp %1065 : vector<1x32xf32>
    %cst_222 = arith.constant 1.000000e+00 : f32
    %1067 = vector.broadcast %cst_222 : f32 to vector<1x32xf32>
    %1068 = arith.addf %1067, %1066 : vector<1x32xf32>
    %1069 = arith.divf %1067, %1068 : vector<1x32xf32>
    %1070 = vector.extract_strided_slice %1052 {offsets = [0, 64], sizes = [1, 32], strides = [1, 1]} : vector<1x128xf32> to vector<1x32xf32>
    %1071 = math.tanh %1070 : vector<1x32xf32>
    %1072 = vector.extract_strided_slice %1052 {offsets = [0, 96], sizes = [1, 32], strides = [1, 1]} : vector<1x128xf32> to vector<1x32xf32>
    %1073 = arith.negf %1072 : vector<1x32xf32>
    %1074 = math.exp %1073 : vector<1x32xf32>
    %cst_223 = arith.constant 1.000000e+00 : f32
    %1075 = vector.broadcast %cst_223 : f32 to vector<1x32xf32>
    %1076 = arith.addf %1075, %1074 : vector<1x32xf32>
    %1077 = arith.divf %1075, %1076 : vector<1x32xf32>
    %1078 = arith.mulf %1069, %1057 : vector<1x32xf32>
    %1079 = arith.mulf %1063, %1071 : vector<1x32xf32>
    %1080 = arith.addf %1078, %1079 : vector<1x32xf32>
    %1081 = math.tanh %1080 : vector<1x32xf32>
    %1082 = arith.mulf %1077, %1081 : vector<1x32xf32>
    %1083 = vector.extract_strided_slice %1046 {offsets = [0, 32], sizes = [1, 32], strides = [1, 1]} : vector<1x64xf32> to vector<1x32xf32>
    %1084 = vector.extract_strided_slice %1056 {offsets = [0, 0], sizes = [1, 32], strides = [1, 1]} : vector<1x128xf32> to vector<1x32xf32>
    %1085 = arith.negf %1084 : vector<1x32xf32>
    %1086 = math.exp %1085 : vector<1x32xf32>
    %cst_224 = arith.constant 1.000000e+00 : f32
    %1087 = vector.broadcast %cst_224 : f32 to vector<1x32xf32>
    %1088 = arith.addf %1087, %1086 : vector<1x32xf32>
    %1089 = arith.divf %1087, %1088 : vector<1x32xf32>
    %1090 = vector.extract_strided_slice %1056 {offsets = [0, 32], sizes = [1, 32], strides = [1, 1]} : vector<1x128xf32> to vector<1x32xf32>
    %1091 = arith.negf %1090 : vector<1x32xf32>
    %1092 = math.exp %1091 : vector<1x32xf32>
    %cst_225 = arith.constant 1.000000e+00 : f32
    %1093 = vector.broadcast %cst_225 : f32 to vector<1x32xf32>
    %1094 = arith.addf %1093, %1092 : vector<1x32xf32>
    %1095 = arith.divf %1093, %1094 : vector<1x32xf32>
    %1096 = vector.extract_strided_slice %1056 {offsets = [0, 64], sizes = [1, 32], strides = [1, 1]} : vector<1x128xf32> to vector<1x32xf32>
    %1097 = math.tanh %1096 : vector<1x32xf32>
    %1098 = vector.extract_strided_slice %1056 {offsets = [0, 96], sizes = [1, 32], strides = [1, 1]} : vector<1x128xf32> to vector<1x32xf32>
    %1099 = arith.negf %1098 : vector<1x32xf32>
    %1100 = math.exp %1099 : vector<1x32xf32>
    %cst_226 = arith.constant 1.000000e+00 : f32
    %1101 = vector.broadcast %cst_226 : f32 to vector<1x32xf32>
    %1102 = arith.addf %1101, %1100 : vector<1x32xf32>
    %1103 = arith.divf %1101, %1102 : vector<1x32xf32>
    %1104 = arith.mulf %1095, %1083 : vector<1x32xf32>
    %1105 = arith.mulf %1089, %1097 : vector<1x32xf32>
    %1106 = arith.addf %1104, %1105 : vector<1x32xf32>
    %1107 = math.tanh %1106 : vector<1x32xf32>
    %1108 = arith.mulf %1103, %1107 : vector<1x32xf32>
    %1109 = arith.index_cast %c7_i32_216 : i32 to index
    %c0_227 = arith.constant 0 : index
    %1110 = vector.load %arg20[%1109, %c0_227] : memref<8x32xf32, #tpu.memory_space<vmem>>, vector<1x32xf32>
    tpu.vector_store %arg20[%1109, %c0_227], %1082 {strides = array<i32>} : memref<8x32xf32, #tpu.memory_space<vmem>>, vector<1x32xf32>,
    %1111 = arith.index_cast %1047 : i32 to index
    %c0_228 = arith.constant 0 : index
    %1112 = vector.load %arg21[%1111, %c0_228] : memref<8x32xf32, #tpu.memory_space<vmem>>, vector<1x32xf32>
    tpu.vector_store %arg21[%1111, %c0_228], %1108 {strides = array<i32>} : memref<8x32xf32, #tpu.memory_space<vmem>>, vector<1x32xf32>,
    %1113 = tpu.concatenate %1082, %1108 in 1 : vector<1x32xf32>, vector<1x32xf32> -> vector<1x64xf32>
    %1114 = tpu.concatenate %1080, %1106 in 1 : vector<1x32xf32>, vector<1x32xf32> -> vector<1x64xf32>
    %c8_i32_229 = arith.constant 8 : i32
    %c0_230 = arith.constant 0 : index
    %c0_231 = arith.constant 0 : index
    %1115 = vector.load %arg20[%c0_230, %c0_231] : memref<8x32xf32, #tpu.memory_space<vmem>>, vector<8x32xf32>
    %c0_232 = arith.constant 0 : index
    %c0_233 = arith.constant 0 : index
    %1116 = vector.load %arg21[%c0_232, %c0_233] : memref<8x32xf32, #tpu.memory_space<vmem>>, vector<8x32xf32>
    %1117 = tpu.concatenate %1115, %1116 in 1 : vector<8x32xf32>, vector<8x32xf32> -> vector<8x64xf32>
    %c0_234 = arith.constant 0 : index
    %c0_235 = arith.constant 0 : index
    %1118 = vector.load %arg10[%c0_234, %c0_235] : memref<64x192xf32, #tpu.memory_space<vmem>>, vector<64x192xf32>
    %cst_236 = arith.constant dense<0.000000e+00> : vector<8x192xf32>
    %1119 = tpu.matmul %1117, %1118, %cst_236 {dimension_numbers = #tpu.dot_dimension_numbers<[1], [0], [0], [1], [0, 0, 1, 1], [], []>} : vector<8x64xf32>, vector<64x192xf32>, vector<8x192xf32> -> vector<8x192xf32>
    %c0_237 = arith.constant 0 : index
    %c0_238 = arith.constant 0 : index
    %1120 = vector.load %arg11[%c0_237, %c0_238] : memref<1x192xf32, #tpu.memory_space<vmem>>, vector<1x192xf32>
    %1121 = vector.broadcast %1120 : vector<1x192xf32> to vector<8x192xf32>
    %1122 = arith.addf %1119, %1121 : vector<8x192xf32>
    %1123 = vector.extract_strided_slice %1122 {offsets = [0, 0], sizes = [8, 8], strides = [1, 1]} : vector<8x192xf32> to vector<8x8xf32>
    %1124 = vector.extract_strided_slice %1122 {offsets = [0, 8], sizes = [8, 8], strides = [1, 1]} : vector<8x192xf32> to vector<8x8xf32>
    %1125 = vector.extract_strided_slice %1122 {offsets = [0, 16], sizes = [8, 8], strides = [1, 1]} : vector<8x192xf32> to vector<8x8xf32>
    %1126 = vector.extract_strided_slice %1122 {offsets = [0, 24], sizes = [8, 8], strides = [1, 1]} : vector<8x192xf32> to vector<8x8xf32>
    %1127 = vector.extract_strided_slice %1122 {offsets = [0, 32], sizes = [8, 8], strides = [1, 1]} : vector<8x192xf32> to vector<8x8xf32>
    %1128 = vector.extract_strided_slice %1122 {offsets = [0, 40], sizes = [8, 8], strides = [1, 1]} : vector<8x192xf32> to vector<8x8xf32>
    %1129 = vector.extract_strided_slice %1122 {offsets = [0, 48], sizes = [8, 8], strides = [1, 1]} : vector<8x192xf32> to vector<8x8xf32>
    %1130 = vector.extract_strided_slice %1122 {offsets = [0, 56], sizes = [8, 8], strides = [1, 1]} : vector<8x192xf32> to vector<8x8xf32>
    %1131 = vector.shape_cast %1123 : vector<8x8xf32> to vector<1x8x8xf32>
    %1132 = vector.shape_cast %1124 : vector<8x8xf32> to vector<1x8x8xf32>
    %1133 = vector.shape_cast %1125 : vector<8x8xf32> to vector<1x8x8xf32>
    %1134 = vector.shape_cast %1126 : vector<8x8xf32> to vector<1x8x8xf32>
    %1135 = vector.shape_cast %1127 : vector<8x8xf32> to vector<1x8x8xf32>
    %1136 = vector.shape_cast %1128 : vector<8x8xf32> to vector<1x8x8xf32>
    %1137 = vector.shape_cast %1129 : vector<8x8xf32> to vector<1x8x8xf32>
    %1138 = vector.shape_cast %1130 : vector<8x8xf32> to vector<1x8x8xf32>
    %1139 = tpu.concatenate %1131, %1132, %1133, %1134, %1135, %1136, %1137, %1138 in 0 : vector<1x8x8xf32>, vector<1x8x8xf32>, vector<1x8x8xf32>, vector<1x8x8xf32>, vector<1x8x8xf32>, vector<1x8x8xf32>, vector<1x8x8xf32>, vector<1x8x8xf32> -> vector<8x8x8xf32>
    %1140 = vector.extract_strided_slice %1122 {offsets = [0, 64], sizes = [8, 8], strides = [1, 1]} : vector<8x192xf32> to vector<8x8xf32>
    %1141 = vector.extract_strided_slice %1122 {offsets = [0, 72], sizes = [8, 8], strides = [1, 1]} : vector<8x192xf32> to vector<8x8xf32>
    %1142 = vector.extract_strided_slice %1122 {offsets = [0, 80], sizes = [8, 8], strides = [1, 1]} : vector<8x192xf32> to vector<8x8xf32>
    %1143 = vector.extract_strided_slice %1122 {offsets = [0, 88], sizes = [8, 8], strides = [1, 1]} : vector<8x192xf32> to vector<8x8xf32>
    %1144 = vector.extract_strided_slice %1122 {offsets = [0, 96], sizes = [8, 8], strides = [1, 1]} : vector<8x192xf32> to vector<8x8xf32>
    %1145 = vector.extract_strided_slice %1122 {offsets = [0, 104], sizes = [8, 8], strides = [1, 1]} : vector<8x192xf32> to vector<8x8xf32>
    %1146 = vector.extract_strided_slice %1122 {offsets = [0, 112], sizes = [8, 8], strides = [1, 1]} : vector<8x192xf32> to vector<8x8xf32>
    %1147 = vector.extract_strided_slice %1122 {offsets = [0, 120], sizes = [8, 8], strides = [1, 1]} : vector<8x192xf32> to vector<8x8xf32>
    %1148 = vector.shape_cast %1140 : vector<8x8xf32> to vector<1x8x8xf32>
    %1149 = vector.shape_cast %1141 : vector<8x8xf32> to vector<1x8x8xf32>
    %1150 = vector.shape_cast %1142 : vector<8x8xf32> to vector<1x8x8xf32>
    %1151 = vector.shape_cast %1143 : vector<8x8xf32> to vector<1x8x8xf32>
    %1152 = vector.shape_cast %1144 : vector<8x8xf32> to vector<1x8x8xf32>
    %1153 = vector.shape_cast %1145 : vector<8x8xf32> to vector<1x8x8xf32>
    %1154 = vector.shape_cast %1146 : vector<8x8xf32> to vector<1x8x8xf32>
    %1155 = vector.shape_cast %1147 : vector<8x8xf32> to vector<1x8x8xf32>
    %1156 = tpu.concatenate %1148, %1149, %1150, %1151, %1152, %1153, %1154, %1155 in 0 : vector<1x8x8xf32>, vector<1x8x8xf32>, vector<1x8x8xf32>, vector<1x8x8xf32>, vector<1x8x8xf32>, vector<1x8x8xf32>, vector<1x8x8xf32>, vector<1x8x8xf32> -> vector<8x8x8xf32>
    %1157 = vector.extract_strided_slice %1122 {offsets = [0, 128], sizes = [8, 8], strides = [1, 1]} : vector<8x192xf32> to vector<8x8xf32>
    %1158 = vector.extract_strided_slice %1122 {offsets = [0, 136], sizes = [8, 8], strides = [1, 1]} : vector<8x192xf32> to vector<8x8xf32>
    %1159 = vector.extract_strided_slice %1122 {offsets = [0, 144], sizes = [8, 8], strides = [1, 1]} : vector<8x192xf32> to vector<8x8xf32>
    %1160 = vector.extract_strided_slice %1122 {offsets = [0, 152], sizes = [8, 8], strides = [1, 1]} : vector<8x192xf32> to vector<8x8xf32>
    %1161 = vector.extract_strided_slice %1122 {offsets = [0, 160], sizes = [8, 8], strides = [1, 1]} : vector<8x192xf32> to vector<8x8xf32>
    %1162 = vector.extract_strided_slice %1122 {offsets = [0, 168], sizes = [8, 8], strides = [1, 1]} : vector<8x192xf32> to vector<8x8xf32>
    %1163 = vector.extract_strided_slice %1122 {offsets = [0, 176], sizes = [8, 8], strides = [1, 1]} : vector<8x192xf32> to vector<8x8xf32>
    %1164 = vector.extract_strided_slice %1122 {offsets = [0, 184], sizes = [8, 8], strides = [1, 1]} : vector<8x192xf32> to vector<8x8xf32>
    %1165 = vector.shape_cast %1157 : vector<8x8xf32> to vector<1x8x8xf32>
    %1166 = vector.shape_cast %1158 : vector<8x8xf32> to vector<1x8x8xf32>
    %1167 = vector.shape_cast %1159 : vector<8x8xf32> to vector<1x8x8xf32>
    %1168 = vector.shape_cast %1160 : vector<8x8xf32> to vector<1x8x8xf32>
    %1169 = vector.shape_cast %1161 : vector<8x8xf32> to vector<1x8x8xf32>
    %1170 = vector.shape_cast %1162 : vector<8x8xf32> to vector<1x8x8xf32>
    %1171 = vector.shape_cast %1163 : vector<8x8xf32> to vector<1x8x8xf32>
    %1172 = vector.shape_cast %1164 : vector<8x8xf32> to vector<1x8x8xf32>
    %1173 = tpu.concatenate %1165, %1166, %1167, %1168, %1169, %1170, %1171, %1172 in 0 : vector<1x8x8xf32>, vector<1x8x8xf32>, vector<1x8x8xf32>, vector<1x8x8xf32>, vector<1x8x8xf32>, vector<1x8x8xf32>, vector<1x8x8xf32>, vector<1x8x8xf32> -> vector<8x8x8xf32>
    %cst_239 = arith.constant dense<0.000000e+00> : vector<8x8x8xf32>
    %1174 = tpu.matmul %1139, %1156, %cst_239 {dimension_numbers = #tpu.dot_dimension_numbers<[2], [2], [1], [1], [0, 0, 0, 1, 1, 1], [0], [0]>} : vector<8x8x8xf32>, vector<8x8x8xf32>, vector<8x8x8xf32> -> vector<8x8x8xf32>
    %c0_240 = arith.constant 0 : index
    %c0_241 = arith.constant 0 : index
    %c0_242 = arith.constant 0 : index
    %1175 = vector.load %arg3[%c0_240, %c0_241, %c0_242] : memref<1x1x8xf32, #tpu.memory_space<vmem>>, vector<1x1x8xf32>
    %1176 = vector.broadcast %1175 : vector<1x1x8xf32> to vector<8x8x8xf32>
    %1177 = arith.addf %1174, %1176 : vector<8x8x8xf32>
    %cst_243 = arith.constant dense<0xFF800000> : vector<8x8xf32>
    %1178 = vector.multi_reduction <maximumf>, %1177, %cst_243 [2] : vector<8x8x8xf32> to vector<8x8xf32>
    %1179 = vector.shape_cast %1178 : vector<8x8xf32> to vector<8x8x1xf32>
    %1180 = vector.broadcast %1179 : vector<8x8x1xf32> to vector<8x8x8xf32>
    %1181 = arith.subf %1177, %1180 : vector<8x8x8xf32>
    %1182 = math.exp %1181 : vector<8x8x8xf32>
    %cst_244 = arith.constant dense<0.000000e+00> : vector<8x8xf32>
    %1183 = vector.multi_reduction <add>, %1182, %cst_244 [2] : vector<8x8x8xf32> to vector<8x8xf32>
    %1184 = vector.shape_cast %1183 : vector<8x8xf32> to vector<8x8x1xf32>
    %1185 = tpu.reciprocal %1184 {approx = true} : vector<8x8x1xf32> -> vector<8x8x1xf32>
    %1186 = vector.broadcast %1185 : vector<8x8x1xf32> to vector<8x8x8xf32>
    %1187 = arith.mulf %1182, %1186 : vector<8x8x8xf32>
    %cst_245 = arith.constant dense<0.000000e+00> : vector<8x8x8xf32>
    %1188 = tpu.matmul %1187, %1173, %cst_245 {dimension_numbers = #tpu.dot_dimension_numbers<[2], [1], [1], [2], [0, 0, 0, 1, 1, 2], [0], [0]>} : vector<8x8x8xf32>, vector<8x8x8xf32>, vector<8x8x8xf32> -> vector<8x8x8xf32>
    %1189 = vector.extract_strided_slice %1188 {offsets = [0, 0, 0], sizes = [1, 8, 8], strides = [1, 1, 1]} : vector<8x8x8xf32> to vector<1x8x8xf32>
    %1190 = vector.shape_cast %1189 : vector<1x8x8xf32> to vector<8x8xf32>
    %1191 = vector.extract_strided_slice %1188 {offsets = [1, 0, 0], sizes = [1, 8, 8], strides = [1, 1, 1]} : vector<8x8x8xf32> to vector<1x8x8xf32>
    %1192 = vector.shape_cast %1191 : vector<1x8x8xf32> to vector<8x8xf32>
    %1193 = vector.extract_strided_slice %1188 {offsets = [2, 0, 0], sizes = [1, 8, 8], strides = [1, 1, 1]} : vector<8x8x8xf32> to vector<1x8x8xf32>
    %1194 = vector.shape_cast %1193 : vector<1x8x8xf32> to vector<8x8xf32>
    %1195 = vector.extract_strided_slice %1188 {offsets = [3, 0, 0], sizes = [1, 8, 8], strides = [1, 1, 1]} : vector<8x8x8xf32> to vector<1x8x8xf32>
    %1196 = vector.shape_cast %1195 : vector<1x8x8xf32> to vector<8x8xf32>
    %1197 = vector.extract_strided_slice %1188 {offsets = [4, 0, 0], sizes = [1, 8, 8], strides = [1, 1, 1]} : vector<8x8x8xf32> to vector<1x8x8xf32>
    %1198 = vector.shape_cast %1197 : vector<1x8x8xf32> to vector<8x8xf32>
    %1199 = vector.extract_strided_slice %1188 {offsets = [5, 0, 0], sizes = [1, 8, 8], strides = [1, 1, 1]} : vector<8x8x8xf32> to vector<1x8x8xf32>
    %1200 = vector.shape_cast %1199 : vector<1x8x8xf32> to vector<8x8xf32>
    %1201 = vector.extract_strided_slice %1188 {offsets = [6, 0, 0], sizes = [1, 8, 8], strides = [1, 1, 1]} : vector<8x8x8xf32> to vector<1x8x8xf32>
    %1202 = vector.shape_cast %1201 : vector<1x8x8xf32> to vector<8x8xf32>
    %1203 = vector.extract_strided_slice %1188 {offsets = [7, 0, 0], sizes = [1, 8, 8], strides = [1, 1, 1]} : vector<8x8x8xf32> to vector<1x8x8xf32>
    %1204 = vector.shape_cast %1203 : vector<1x8x8xf32> to vector<8x8xf32>
    %1205 = tpu.concatenate %1190, %1192, %1194, %1196, %1198, %1200, %1202, %1204 in 1 : vector<8x8xf32>, vector<8x8xf32>, vector<8x8xf32>, vector<8x8xf32>, vector<8x8xf32>, vector<8x8xf32>, vector<8x8xf32>, vector<8x8xf32> -> vector<8x64xf32>
    %c0_246 = arith.constant 0 : index
    %c0_247 = arith.constant 0 : index
    %1206 = vector.load %arg12[%c0_246, %c0_247] : memref<64x64xf32, #tpu.memory_space<vmem>>, vector<64x64xf32>
    %cst_248 = arith.constant dense<0.000000e+00> : vector<8x64xf32>
    %1207 = tpu.matmul %1205, %1206, %cst_248 {dimension_numbers = #tpu.dot_dimension_numbers<[1], [0], [0], [1], [0, 0, 1, 1], [], []>} : vector<8x64xf32>, vector<64x64xf32>, vector<8x64xf32> -> vector<8x64xf32>
    %c0_249 = arith.constant 0 : index
    %c0_250 = arith.constant 0 : index
    %1208 = vector.load %arg13[%c0_249, %c0_250] : memref<1x64xf32, #tpu.memory_space<vmem>>, vector<1x64xf32>
    %1209 = vector.broadcast %1208 : vector<1x64xf32> to vector<8x64xf32>
    %1210 = arith.addf %1207, %1209 : vector<8x64xf32>
    %cst_251 = arith.constant dense<0.000000e+00> : vector<8xf32>
    %1211 = vector.multi_reduction <add>, %1210, %cst_251 [1] : vector<8x64xf32> to vector<8xf32>
    %1212 = vector.shape_cast %1211 : vector<8xf32> to vector<8x1xf32>
    %cst_252 = arith.constant 6.400000e+01 : f32
    %1213 = vector.broadcast %cst_252 : f32 to vector<8x1xf32>
    %1214 = arith.divf %1212, %1213 : vector<8x1xf32>
    %1215 = vector.broadcast %1214 : vector<8x1xf32> to vector<8x64xf32>
    %1216 = arith.subf %1210, %1215 : vector<8x64xf32>
    %1217 = arith.mulf %1216, %1216 : vector<8x64xf32>
    %cst_253 = arith.constant dense<0.000000e+00> : vector<8xf32>
    %1218 = vector.multi_reduction <add>, %1217, %cst_253 [1] : vector<8x64xf32> to vector<8xf32>
    %1219 = vector.shape_cast %1218 : vector<8xf32> to vector<8x1xf32>
    %cst_254 = arith.constant 6.400000e+01 : f32
    %1220 = vector.broadcast %cst_254 : f32 to vector<8x1xf32>
    %1221 = arith.divf %1219, %1220 : vector<8x1xf32>
    %1222 = vector.broadcast %1214 : vector<8x1xf32> to vector<8x64xf32>
    %1223 = arith.subf %1210, %1222 : vector<8x64xf32>
    %cst_255 = arith.constant 9.99999974E-6 : f32
    %1224 = vector.broadcast %cst_255 : f32 to vector<8x1xf32>
    %1225 = arith.addf %1221, %1224 : vector<8x1xf32>
    %1226 = math.rsqrt %1225 : vector<8x1xf32>
    %1227 = vector.broadcast %1226 : vector<8x1xf32> to vector<8x64xf32>
    %1228 = arith.mulf %1223, %1227 : vector<8x64xf32>
    %c0_256 = arith.constant 0 : index
    %c0_257 = arith.constant 0 : index
    %1229 = vector.load %arg14[%c0_256, %c0_257] : memref<1x64xf32, #tpu.memory_space<vmem>>, vector<1x64xf32>
    %1230 = vector.broadcast %1229 : vector<1x64xf32> to vector<8x64xf32>
    %1231 = arith.mulf %1228, %1230 : vector<8x64xf32>
    %c0_258 = arith.constant 0 : index
    %c0_259 = arith.constant 0 : index
    %1232 = vector.load %arg15[%c0_258, %c0_259] : memref<1x64xf32, #tpu.memory_space<vmem>>, vector<1x64xf32>
    %1233 = vector.broadcast %1232 : vector<1x64xf32> to vector<8x64xf32>
    %1234 = arith.addf %1231, %1233 : vector<8x64xf32>
    %c0_260 = arith.constant 0 : index
    %c0_261 = arith.constant 0 : index
    %1235 = vector.load %arg16[%c0_260, %c0_261] : memref<64x128xf32, #tpu.memory_space<vmem>>, vector<64x128xf32>
    %cst_262 = arith.constant dense<0.000000e+00> : vector<8x128xf32>
    %1236 = tpu.matmul %1234, %1235, %cst_262 {dimension_numbers = #tpu.dot_dimension_numbers<[1], [0], [0], [1], [0, 0, 1, 1], [], []>} : vector<8x64xf32>, vector<64x128xf32>, vector<8x128xf32> -> vector<8x128xf32>
    %c0_263 = arith.constant 0 : index
    %c0_264 = arith.constant 0 : index
    %1237 = vector.load %arg17[%c0_263, %c0_264] : memref<1x128xf32, #tpu.memory_space<vmem>>, vector<1x128xf32>
    %1238 = vector.broadcast %1237 : vector<1x128xf32> to vector<8x128xf32>
    %1239 = arith.addf %1236, %1238 : vector<8x128xf32>
    %c0_265 = arith.constant 0 : index
    %c0_266 = arith.constant 0 : index
    %c0_267 = arith.constant 0 : index
    %1240 = vector.load %arg18[%c0_265, %c0_266, %c0_267] : memref<1x8x128xf32, #tpu.memory_space<vmem>>, vector<1x8x128xf32>
    %1241 = vector.shape_cast %1240 : vector<1x8x128xf32> to vector<8x128xf32>
    %1242 = vector.shape_cast %1239 : vector<8x128xf32> to vector<1x8x128xf32>
    tpu.vector_store %arg18[%c0_265, %c0_266, %c0_267], %1242 {strides = array<i32>} : memref<1x8x128xf32, #tpu.memory_space<vmem>>, vector<1x8x128xf32>,
    return
  }
  func.func @transform_0(%arg0: i32) -> (i32, i32, i32) {
    %c0_i32 = arith.constant 0 : i32
    %c0_i32_0 = arith.constant 0 : i32
    %c0_i32_1 = arith.constant 0 : i32
    return %arg0, %c0_i32, %c0_i32_0 : i32, i32, i32
  }
  func.func @transform_1(%arg0: i32) -> (i32, i32, i32) {
    %c0_i32 = arith.constant 0 : i32
    %c0_i32_0 = arith.constant 0 : i32
    %c0_i32_1 = arith.constant 0 : i32
    return %arg0, %c0_i32, %c0_i32_0 : i32, i32, i32
  }
  func.func @transform_2(%arg0: i32) -> (i32, i32, i32) {
    %c0_i32 = arith.constant 0 : i32
    %c0_i32_0 = arith.constant 0 : i32
    %c0_i32_1 = arith.constant 0 : i32
    return %arg0, %c0_i32, %c0_i32_0 : i32, i32, i32
  }
  func.func @transform_3(%arg0: i32) -> (i32, i32) {
    %c0_i32 = arith.constant 0 : i32
    %c0_i32_0 = arith.constant 0 : i32
    %c0_i32_1 = arith.constant 0 : i32
    return %c0_i32, %c0_i32_0 : i32, i32
  }
  func.func @transform_4(%arg0: i32) -> (i32, i32) {
    %c0_i32 = arith.constant 0 : i32
    %c0_i32_0 = arith.constant 0 : i32
    %c0_i32_1 = arith.constant 0 : i32
    return %c0_i32, %c0_i32_0 : i32, i32
  }
  func.func @transform_5(%arg0: i32) -> (i32, i32) {
    %c0_i32 = arith.constant 0 : i32
    %c0_i32_0 = arith.constant 0 : i32
    %c0_i32_1 = arith.constant 0 : i32
    return %c0_i32, %c0_i32_0 : i32, i32
  }
  func.func @transform_6(%arg0: i32) -> (i32, i32) {
    %c0_i32 = arith.constant 0 : i32
    %c0_i32_0 = arith.constant 0 : i32
    %c0_i32_1 = arith.constant 0 : i32
    return %c0_i32, %c0_i32_0 : i32, i32
  }
  func.func @transform_7(%arg0: i32) -> (i32, i32) {
    %c0_i32 = arith.constant 0 : i32
    %c0_i32_0 = arith.constant 0 : i32
    %c0_i32_1 = arith.constant 0 : i32
    return %c0_i32, %c0_i32_0 : i32, i32
  }
  func.func @transform_8(%arg0: i32) -> (i32, i32) {
    %c0_i32 = arith.constant 0 : i32
    %c0_i32_0 = arith.constant 0 : i32
    %c0_i32_1 = arith.constant 0 : i32
    return %c0_i32, %c0_i32_0 : i32, i32
  }
  func.func @transform_9(%arg0: i32) -> (i32, i32) {
    %c0_i32 = arith.constant 0 : i32
    %c0_i32_0 = arith.constant 0 : i32
    %c0_i32_1 = arith.constant 0 : i32
    return %c0_i32, %c0_i32_0 : i32, i32
  }
  func.func @transform_10(%arg0: i32) -> (i32, i32) {
    %c0_i32 = arith.constant 0 : i32
    %c0_i32_0 = arith.constant 0 : i32
    %c0_i32_1 = arith.constant 0 : i32
    return %c0_i32, %c0_i32_0 : i32, i32
  }
  func.func @transform_11(%arg0: i32) -> (i32, i32) {
    %c0_i32 = arith.constant 0 : i32
    %c0_i32_0 = arith.constant 0 : i32
    %c0_i32_1 = arith.constant 0 : i32
    return %c0_i32, %c0_i32_0 : i32, i32
  }
  func.func @transform_12(%arg0: i32) -> (i32, i32) {
    %c0_i32 = arith.constant 0 : i32
    %c0_i32_0 = arith.constant 0 : i32
    %c0_i32_1 = arith.constant 0 : i32
    return %c0_i32, %c0_i32_0 : i32, i32
  }
  func.func @transform_13(%arg0: i32) -> (i32, i32) {
    %c0_i32 = arith.constant 0 : i32
    %c0_i32_0 = arith.constant 0 : i32
    %c0_i32_1 = arith.constant 0 : i32
    return %c0_i32, %c0_i32_0 : i32, i32
  }
  func.func @transform_14(%arg0: i32) -> (i32, i32) {
    %c0_i32 = arith.constant 0 : i32
    %c0_i32_0 = arith.constant 0 : i32
    %c0_i32_1 = arith.constant 0 : i32
    return %c0_i32, %c0_i32_0 : i32, i32
  }
  func.func @transform_15(%arg0: i32) -> (i32, i32) {
    %c0_i32 = arith.constant 0 : i32
    %c0_i32_0 = arith.constant 0 : i32
    %c0_i32_1 = arith.constant 0 : i32
    return %c0_i32, %c0_i32_0 : i32, i32
  }
  func.func @transform_16(%arg0: i32) -> (i32, i32) {
    %c0_i32 = arith.constant 0 : i32
    %c0_i32_0 = arith.constant 0 : i32
    %c0_i32_1 = arith.constant 0 : i32
    return %c0_i32, %c0_i32_0 : i32, i32
  }
  func.func @transform_17(%arg0: i32) -> (i32, i32, i32) {
    %c0_i32 = arith.constant 0 : i32
    %c0_i32_0 = arith.constant 0 : i32
    %c0_i32_1 = arith.constant 0 : i32
    return %arg0, %c0_i32, %c0_i32_0 : i32, i32, i32
  }
}

</mosaic_0001>

<llo_original>
// kernel: forward.1
$region0: #{forward.1}
  #allocation0 [shape = 'u32[]', space=smem, size = 0x4, offset = 0x4, fixed_abs, tag = 'smem constant byte address 0x4 - core index']
  #allocation1 [shape = 'u32[72,128]{1,0:T(1,128)}', space=vmem, size = 0x9000, scoped, tag = 'internal scratch']
  #allocation2 [shape = 'f32[8,256]{1,0:T(8,128)}', space=vmem, size = 0x2000, scoped, tag = 'scratch operand']
  #allocation3 [shape = 'f32[8,32]{1,0:T(8,128)}', space=vmem, size = 0x1000, scoped, tag = 'scratch operand']
  #allocation4 [shape = 'f32[8,32]{1,0:T(8,128)}', space=vmem, size = 0x1000, scoped, tag = 'scratch operand']
  %s0 = inlined_call_operand.vmem [shape: f32[2,8,32], index: 0, kind: input, shape index: {}]
  %s1 = inlined_call_operand.vmem [shape: f32[2,8,1], index: 1, kind: input, shape index: {}]
  %s2 = inlined_call_operand.vmem [shape: f32[2,1,8], index: 2, kind: input, shape index: {}]
  %s3 = inlined_call_operand.hbm [shape: f32[32,256], index: 3, kind: input, shape index: {}]
  %s4 = inlined_call_operand.vmem [shape: f32[64,256], index: 4, kind: input, shape index: {}]
  %s5 = inlined_call_operand.vmem [shape: f32[1,256], index: 5, kind: input, shape index: {}]
  %s6 = inlined_call_operand.vmem [shape: f32[64,256], index: 6, kind: input, shape index: {}]
  %s7 = inlined_call_operand.hbm [shape: f32[64,256], index: 7, kind: input, shape index: {}]
  %s8 = inlined_call_operand.vmem [shape: f32[1,256], index: 8, kind: input, shape index: {}]
  %s9 = inlined_call_operand.hbm [shape: f32[64,192], index: 9, kind: input, shape index: {}]
  %s10 = inlined_call_operand.vmem [shape: f32[1,192], index: 10, kind: input, shape index: {}]
  %s11 = inlined_call_operand.hbm [shape: f32[64,64], index: 11, kind: input, shape index: {}]
  %s12 = inlined_call_operand.vmem [shape: f32[1,64], index: 12, kind: input, shape index: {}]
  %s13 = inlined_call_operand.vmem [shape: f32[1,64], index: 13, kind: input, shape index: {}]
  %s14 = inlined_call_operand.vmem [shape: f32[1,64], index: 14, kind: input, shape index: {}]
  %s15 = inlined_call_operand.hbm [shape: f32[64,128], index: 15, kind: input, shape index: {}]
  %s16 = inlined_call_operand.vmem [shape: f32[1,128], index: 16, kind: input, shape index: {}]
  %s17 = inlined_call_operand.vmem [shape: f32[2,8,128], index: 17, kind: output, shape index: {}]
  %s18 = sld [smem:[#allocation0]]
  $region121: #{forward.1} parent=0
    _
  %s20 = ssub.s32 1, %s18
  %s21 = scalar_select 0, %s20, %s18
  $region1: #{forward.1} parent=0
    #allocation5 [shape = 'u8[32768]{0}', space=vmem, size = 0x8000, scoped, tag = 'input window, operand 3, single buffered']
    #allocation6 [shape = 's32[2]{0}', space=sflag, size = 0x8, scoped, tag = 'scoped memory for forward.1']
    #allocation7 [shape = 'u8[65536]{0}', space=vmem, size = 0x10000, scoped, tag = 'input window, operand 7, single buffered']
    #allocation8 [shape = 's32[1]{0}', space=sflag, size = 0x4, scoped, tag = 'scoped memory for forward.1']
    #allocation9 [shape = 'u8[65536]{0}', space=vmem, size = 0x10000, scoped, tag = 'input window, operand 9, single buffered']
    #allocation10 [shape = 'u8[32768]{0}', space=vmem, size = 0x8000, scoped, tag = 'input window, operand 11, single buffered']
    #allocation11 [shape = 's32[1]{0}', space=sflag, size = 0x4, scoped, tag = 'scoped memory for forward.1']
    #allocation12 [shape = 'u8[32768]{0}', space=vmem, size = 0x8000, scoped, tag = 'input window, operand 15, single buffered']
    %22 = vsyncpa [#allocation6], 0
    %23 = vsyncpa [#allocation8], 0
    %24 = vsyncpa [#allocation11], 0
    loop: start=0, step=1, limit=4
    $region2: #{forward.1} parent=1 // loop_pre_header
      _
    $region3: #{forward.1} parent=1 // loop_header
      %s26 = sphi 0, %s30
      %p27 = scmp.ge.s32.totalorder %s26, 4
      %s36 = sphi 0, %s38
      %s39 = sphi 0, %s36
      %s40 = sphi 0, %s39
      %s56 = sphi 0, %s40
      %s62 = sphi 0, %s64
      %s65 = sphi 0, %s62
      %s66 = sphi 0, %s65
      %s82 = sphi 0, %s66
      %s88 = sphi 0, %s90
      %s91 = sphi 0, %s88
      %s92 = sphi 0, %s91
      %s108 = sphi 0, %s92
      %s112 = sphi 0, %s112
      %s114 = sphi 0, %s112
      %s115 = sphi 0, %s114
      %s129 = sphi 0, %s115
      %s133 = sphi 0, %s133
      %s135 = sphi 0, %s133
      %s136 = sphi 0, %s135
      %s150 = sphi 0, %s136
      %s154 = sphi 0, %s154
      %s156 = sphi 0, %s154
      %s157 = sphi 0, %s156
      %s171 = sphi 0, %s157
      %s175 = sphi 0, %s175
      %s177 = sphi 0, %s175
      %s178 = sphi 0, %s177
      %s192 = sphi 0, %s178
      %s196 = sphi 0, %s196
      %s198 = sphi 0, %s196
      %s199 = sphi 0, %s198
      %s213 = sphi 0, %s199
      %s217 = sphi 0, %s217
      %s219 = sphi 0, %s217
      %s220 = sphi 0, %s219
      %s234 = sphi 0, %s220
      %s238 = sphi 0, %s238
      %s240 = sphi 0, %s238
      %s241 = sphi 0, %s240
      %s255 = sphi 0, %s241
      %s259 = sphi 0, %s259
      %s261 = sphi 0, %s259
      %s262 = sphi 0, %s261
      %s276 = sphi 0, %s262
      %s280 = sphi 0, %s280
      %s282 = sphi 0, %s280
      %s283 = sphi 0, %s282
      %s297 = sphi 0, %s283
      %s301 = sphi 0, %s301
      %s303 = sphi 0, %s301
      %s304 = sphi 0, %s303
      %s318 = sphi 0, %s304
      %s322 = sphi 0, %s322
      %s324 = sphi 0, %s322
      %s325 = sphi 0, %s324
      %s339 = sphi 0, %s325
      %s343 = sphi 0, %s343
      %s345 = sphi 0, %s343
      %s346 = sphi 0, %s345
      %s360 = sphi 0, %s346
      %s364 = sphi 0, %s364
      %s366 = sphi 0, %s364
      %s367 = sphi 0, %s366
      %s381 = sphi 0, %s367
      %s385 = sphi 0, %s385
      %s387 = sphi 0, %s385
      %s388 = sphi 0, %s387
      %s402 = sphi 0, %s388
      %s408 = sphi 0, %s410
      %s411 = sphi 0, %s408
      %s412 = sphi 0, %s411
      %s428 = sphi 0, %s412
    $region4: #{forward.1} parent=1 // loop_header_branch
      %29 = sbr.rel (%p27) target = $region8
    $region5: #{forward.1} parent=1 // loop_body
      %s31 = ssub.s32 %s26, 1
      %s32 = ssub.s32 %s26, 2
      %s33 = sadd.s32 %s26, 1
      %s34 = ssub.s32 %s26, %s33
      %p35 = scmp.eq.s32.totalorder %s34, 0
      %s37 = sadd.s32 %s36, 1
      %s38 = scalar_select %p35, %s36, %s37
      %p41 = pneg %p35
      %p42 = scmp.eq.s32.totalorder %s26, 1
      %p43 = por %p41, %p42
      %p44 = scmp.ne.s32.totalorder %s36, %s39
      %p45 = scmp.eq.s32.totalorder %s26, 0
      %p46 = por %p44, %p45
      %p47 = scmp.ne.s32.totalorder %s36, %s39
      %p48 = scmp.eq.s32.totalorder %s31, 1
      %p49 = por %p47, %p48
      %p50 = scmp.ne.s32.totalorder %s39, %s40
      %p51 = scmp.eq.s32.totalorder %s31, 0
      %p52 = por %p50, %p51
      %p53 = scmp.ne.s32.totalorder %s39, %s40
      %p54 = scmp.eq.s32.totalorder %s32, 1
      %p55 = por %p53, %p54
      %p57 = scmp.ne.s32.totalorder %s40, %s56
      %p58 = scmp.eq.s32.totalorder %s32, 0
      %p59 = por %p57, %p58
      %s60 = ssub.s32 %s26, %s33
      %p61 = scmp.eq.s32.totalorder %s60, 0
      %s63 = sadd.s32 %s62, 1
      %s64 = scalar_select %p61, %s62, %s63
      %p67 = pneg %p61
      %p68 = scmp.eq.s32.totalorder %s26, 1
      %p69 = por %p67, %p68
      %p70 = scmp.ne.s32.totalorder %s62, %s65
      %p71 = scmp.eq.s32.totalorder %s26, 0
      %p72 = por %p70, %p71
      %p73 = scmp.ne.s32.totalorder %s62, %s65
      %p74 = scmp.eq.s32.totalorder %s31, 1
      %p75 = por %p73, %p74
      %p76 = scmp.ne.s32.totalorder %s65, %s66
      %p77 = scmp.eq.s32.totalorder %s31, 0
      %p78 = por %p76, %p77
      %p79 = scmp.ne.s32.totalorder %s65, %s66
      %p80 = scmp.eq.s32.totalorder %s32, 1
      %p81 = por %p79, %p80
      %p83 = scmp.ne.s32.totalorder %s66, %s82
      %p84 = scmp.eq.s32.totalorder %s32, 0
      %p85 = por %p83, %p84
      %s86 = ssub.s32 %s26, %s33
      %p87 = scmp.eq.s32.totalorder %s86, 0
      %s89 = sadd.s32 %s88, 1
      %s90 = scalar_select %p87, %s88, %s89
      %p93 = pneg %p87
      %p94 = scmp.eq.s32.totalorder %s26, 1
      %p95 = por %p93, %p94
      %p96 = scmp.ne.s32.totalorder %s88, %s91
      %p97 = scmp.eq.s32.totalorder %s26, 0
      %p98 = por %p96, %p97
      %p99 = scmp.ne.s32.totalorder %s88, %s91
      %p100 = scmp.eq.s32.totalorder %s31, 1
      %p101 = por %p99, %p100
      %p102 = scmp.ne.s32.totalorder %s91, %s92
      %p103 = scmp.eq.s32.totalorder %s31, 0
      %p104 = por %p102, %p103
      %p105 = scmp.ne.s32.totalorder %s91, %s92
      %p106 = scmp.eq.s32.totalorder %s32, 1
      %p107 = por %p105, %p106
      %p109 = scmp.ne.s32.totalorder %s92, %s108
      %p110 = scmp.eq.s32.totalorder %s32, 0
      %p111 = por %p109, %p110
      %s113 = sadd.s32 %s112, 1
      %p116 = scmp.eq.s32.totalorder %s26, 1
      %p117 = scmp.ne.s32.totalorder %s112, %s114
      %p118 = scmp.eq.s32.totalorder %s26, 0
      %p119 = por %p117, %p118
      %p120 = scmp.ne.s32.totalorder %s112, %s114
      %p121 = scmp.eq.s32.totalorder %s31, 1
      %p122 = por %p120, %p121
      %p123 = scmp.ne.s32.totalorder %s114, %s115
      %p124 = scmp.eq.s32.totalorder %s31, 0
      %p125 = por %p123, %p124
      %p126 = scmp.ne.s32.totalorder %s114, %s115
      %p127 = scmp.eq.s32.totalorder %s32, 1
      %p128 = por %p126, %p127
      %p130 = scmp.ne.s32.totalorder %s115, %s129
      %p131 = scmp.eq.s32.totalorder %s32, 0
      %p132 = por %p130, %p131
      %s134 = sadd.s32 %s133, 1
      %p137 = scmp.eq.s32.totalorder %s26, 1
      %p138 = scmp.ne.s32.totalorder %s133, %s135
      %p139 = scmp.eq.s32.totalorder %s26, 0
      %p140 = por %p138, %p139
      %p141 = scmp.ne.s32.totalorder %s133, %s135
      %p142 = scmp.eq.s32.totalorder %s31, 1
      %p143 = por %p141, %p142
      %p144 = scmp.ne.s32.totalorder %s135, %s136
      %p145 = scmp.eq.s32.totalorder %s31, 0
      %p146 = por %p144, %p145
      %p147 = scmp.ne.s32.totalorder %s135, %s136
      %p148 = scmp.eq.s32.totalorder %s32, 1
      %p149 = por %p147, %p148
      %p151 = scmp.ne.s32.totalorder %s136, %s150
      %p152 = scmp.eq.s32.totalorder %s32, 0
      %p153 = por %p151, %p152
      %s155 = sadd.s32 %s154, 1
      %p158 = scmp.eq.s32.totalorder %s26, 1
      %p159 = scmp.ne.s32.totalorder %s154, %s156
      %p160 = scmp.eq.s32.totalorder %s26, 0
      %p161 = por %p159, %p160
      %p162 = scmp.ne.s32.totalorder %s154, %s156
      %p163 = scmp.eq.s32.totalorder %s31, 1
      %p164 = por %p162, %p163
      %p165 = scmp.ne.s32.totalorder %s156, %s157
      %p166 = scmp.eq.s32.totalorder %s31, 0
      %p167 = por %p165, %p166
      %p168 = scmp.ne.s32.totalorder %s156, %s157
      %p169 = scmp.eq.s32.totalorder %s32, 1
      %p170 = por %p168, %p169
      %p172 = scmp.ne.s32.totalorder %s157, %s171
      %p173 = scmp.eq.s32.totalorder %s32, 0
      %p174 = por %p172, %p173
      %s176 = sadd.s32 %s175, 1
      %p179 = scmp.eq.s32.totalorder %s26, 1
      %p180 = scmp.ne.s32.totalorder %s175, %s177
      %p181 = scmp.eq.s32.totalorder %s26, 0
      %p182 = por %p180, %p181
      %p183 = scmp.ne.s32.totalorder %s175, %s177
      %p184 = scmp.eq.s32.totalorder %s31, 1
      %p185 = por %p183, %p184
      %p186 = scmp.ne.s32.totalorder %s177, %s178
      %p187 = scmp.eq.s32.totalorder %s31, 0
      %p188 = por %p186, %p187
      %p189 = scmp.ne.s32.totalorder %s177, %s178
      %p190 = scmp.eq.s32.totalorder %s32, 1
      %p191 = por %p189, %p190
      %p193 = scmp.ne.s32.totalorder %s178, %s192
      %p194 = scmp.eq.s32.totalorder %s32, 0
      %p195 = por %p193, %p194
      %s197 = sadd.s32 %s196, 1
      %p200 = scmp.eq.s32.totalorder %s26, 1
      %p201 = scmp.ne.s32.totalorder %s196, %s198
      %p202 = scmp.eq.s32.totalorder %s26, 0
      %p203 = por %p201, %p202
      %p204 = scmp.ne.s32.totalorder %s196, %s198
      %p205 = scmp.eq.s32.totalorder %s31, 1
      %p206 = por %p204, %p205
      %p207 = scmp.ne.s32.totalorder %s198, %s199
      %p208 = scmp.eq.s32.totalorder %s31, 0
      %p209 = por %p207, %p208
      %p210 = scmp.ne.s32.totalorder %s198, %s199
      %p211 = scmp.eq.s32.totalorder %s32, 1
      %p212 = por %p210, %p211
      %p214 = scmp.ne.s32.totalorder %s199, %s213
      %p215 = scmp.eq.s32.totalorder %s32, 0
      %p216 = por %p214, %p215
      %s218 = sadd.s32 %s217, 1
      %p221 = scmp.eq.s32.totalorder %s26, 1
      %p222 = scmp.ne.s32.totalorder %s217, %s219
      %p223 = scmp.eq.s32.totalorder %s26, 0
      %p224 = por %p222, %p223
      %p225 = scmp.ne.s32.totalorder %s217, %s219
      %p226 = scmp.eq.s32.totalorder %s31, 1
      %p227 = por %p225, %p226
      %p228 = scmp.ne.s32.totalorder %s219, %s220
      %p229 = scmp.eq.s32.totalorder %s31, 0
      %p230 = por %p228, %p229
      %p231 = scmp.ne.s32.totalorder %s219, %s220
      %p232 = scmp.eq.s32.totalorder %s32, 1
      %p233 = por %p231, %p232
      %p235 = scmp.ne.s32.totalorder %s220, %s234
      %p236 = scmp.eq.s32.totalorder %s32, 0
      %p237 = por %p235, %p236
      %s239 = sadd.s32 %s238, 1
      %p242 = scmp.eq.s32.totalorder %s26, 1
      %p243 = scmp.ne.s32.totalorder %s238, %s240
      %p244 = scmp.eq.s32.totalorder %s26, 0
      %p245 = por %p243, %p244
      %p246 = scmp.ne.s32.totalorder %s238, %s240
      %p247 = scmp.eq.s32.totalorder %s31, 1
      %p248 = por %p246, %p247
      %p249 = scmp.ne.s32.totalorder %s240, %s241
      %p250 = scmp.eq.s32.totalorder %s31, 0
      %p251 = por %p249, %p250
      %p252 = scmp.ne.s32.totalorder %s240, %s241
      %p253 = scmp.eq.s32.totalorder %s32, 1
      %p254 = por %p252, %p253
      %p256 = scmp.ne.s32.totalorder %s241, %s255
      %p257 = scmp.eq.s32.totalorder %s32, 0
      %p258 = por %p256, %p257
      %s260 = sadd.s32 %s259, 1
      %p263 = scmp.eq.s32.totalorder %s26, 1
      %p264 = scmp.ne.s32.totalorder %s259, %s261
      %p265 = scmp.eq.s32.totalorder %s26, 0
      %p266 = por %p264, %p265
      %p267 = scmp.ne.s32.totalorder %s259, %s261
      %p268 = scmp.eq.s32.totalorder %s31, 1
      %p269 = por %p267, %p268
      %p270 = scmp.ne.s32.totalorder %s261, %s262
      %p271 = scmp.eq.s32.totalorder %s31, 0
      %p272 = por %p270, %p271
      %p273 = scmp.ne.s32.totalorder %s261, %s262
      %p274 = scmp.eq.s32.totalorder %s32, 1
      %p275 = por %p273, %p274
      %p277 = scmp.ne.s32.totalorder %s262, %s276
      %p278 = scmp.eq.s32.totalorder %s32, 0
      %p279 = por %p277, %p278
      %s281 = sadd.s32 %s280, 1
      %p284 = scmp.eq.s32.totalorder %s26, 1
      %p285 = scmp.ne.s32.totalorder %s280, %s282
      %p286 = scmp.eq.s32.totalorder %s26, 0
      %p287 = por %p285, %p286
      %p288 = scmp.ne.s32.totalorder %s280, %s282
      %p289 = scmp.eq.s32.totalorder %s31, 1
      %p290 = por %p288, %p289
      %p291 = scmp.ne.s32.totalorder %s282, %s283
      %p292 = scmp.eq.s32.totalorder %s31, 0
      %p293 = por %p291, %p292
      %p294 = scmp.ne.s32.totalorder %s282, %s283
      %p295 = scmp.eq.s32.totalorder %s32, 1
      %p296 = por %p294, %p295
      %p298 = scmp.ne.s32.totalorder %s283, %s297
      %p299 = scmp.eq.s32.totalorder %s32, 0
      %p300 = por %p298, %p299
      %s302 = sadd.s32 %s301, 1
      %p305 = scmp.eq.s32.totalorder %s26, 1
      %p306 = scmp.ne.s32.totalorder %s301, %s303
      %p307 = scmp.eq.s32.totalorder %s26, 0
      %p308 = por %p306, %p307
      %p309 = scmp.ne.s32.totalorder %s301, %s303
      %p310 = scmp.eq.s32.totalorder %s31, 1
      %p311 = por %p309, %p310
      %p312 = scmp.ne.s32.totalorder %s303, %s304
      %p313 = scmp.eq.s32.totalorder %s31, 0
      %p314 = por %p312, %p313
      %p315 = scmp.ne.s32.totalorder %s303, %s304
      %p316 = scmp.eq.s32.totalorder %s32, 1
      %p317 = por %p315, %p316
      %p319 = scmp.ne.s32.totalorder %s304, %s318
      %p320 = scmp.eq.s32.totalorder %s32, 0
      %p321 = por %p319, %p320
      %s323 = sadd.s32 %s322, 1
      %p326 = scmp.eq.s32.totalorder %s26, 1
      %p327 = scmp.ne.s32.totalorder %s322, %s324
      %p328 = scmp.eq.s32.totalorder %s26, 0
      %p329 = por %p327, %p328
      %p330 = scmp.ne.s32.totalorder %s322, %s324
      %p331 = scmp.eq.s32.totalorder %s31, 1
      %p332 = por %p330, %p331
      %p333 = scmp.ne.s32.totalorder %s324, %s325
      %p334 = scmp.eq.s32.totalorder %s31, 0
      %p335 = por %p333, %p334
      %p336 = scmp.ne.s32.totalorder %s324, %s325
      %p337 = scmp.eq.s32.totalorder %s32, 1
      %p338 = por %p336, %p337
      %p340 = scmp.ne.s32.totalorder %s325, %s339
      %p341 = scmp.eq.s32.totalorder %s32, 0
      %p342 = por %p340, %p341
      %s344 = sadd.s32 %s343, 1
      %p347 = scmp.eq.s32.totalorder %s26, 1
      %p348 = scmp.ne.s32.totalorder %s343, %s345
      %p349 = scmp.eq.s32.totalorder %s26, 0
      %p350 = por %p348, %p349
      %p351 = scmp.ne.s32.totalorder %s343, %s345
      %p352 = scmp.eq.s32.totalorder %s31, 1
      %p353 = por %p351, %p352
      %p354 = scmp.ne.s32.totalorder %s345, %s346
      %p355 = scmp.eq.s32.totalorder %s31, 0
      %p356 = por %p354, %p355
      %p357 = scmp.ne.s32.totalorder %s345, %s346
      %p358 = scmp.eq.s32.totalorder %s32, 1
      %p359 = por %p357, %p358
      %p361 = scmp.ne.s32.totalorder %s346, %s360
      %p362 = scmp.eq.s32.totalorder %s32, 0
      %p363 = por %p361, %p362
      %s365 = sadd.s32 %s364, 1
      %p368 = scmp.eq.s32.totalorder %s26, 1
      %p369 = scmp.ne.s32.totalorder %s364, %s366
      %p370 = scmp.eq.s32.totalorder %s26, 0
      %p371 = por %p369, %p370
      %p372 = scmp.ne.s32.totalorder %s364, %s366
      %p373 = scmp.eq.s32.totalorder %s31, 1
      %p374 = por %p372, %p373
      %p375 = scmp.ne.s32.totalorder %s366, %s367
      %p376 = scmp.eq.s32.totalorder %s31, 0
      %p377 = por %p375, %p376
      %p378 = scmp.ne.s32.totalorder %s366, %s367
      %p379 = scmp.eq.s32.totalorder %s32, 1
      %p380 = por %p378, %p379
      %p382 = scmp.ne.s32.totalorder %s367, %s381
      %p383 = scmp.eq.s32.totalorder %s32, 0
      %p384 = por %p382, %p383
      %s386 = sadd.s32 %s385, 1
      %p389 = scmp.eq.s32.totalorder %s26, 1
      %p390 = scmp.ne.s32.totalorder %s385, %s387
      %p391 = scmp.eq.s32.totalorder %s26, 0
      %p392 = por %p390, %p391
      %p393 = scmp.ne.s32.totalorder %s385, %s387
      %p394 = scmp.eq.s32.totalorder %s31, 1
      %p395 = por %p393, %p394
      %p396 = scmp.ne.s32.totalorder %s387, %s388
      %p397 = scmp.eq.s32.totalorder %s31, 0
      %p398 = por %p396, %p397
      %p399 = scmp.ne.s32.totalorder %s387, %s388
      %p400 = scmp.eq.s32.totalorder %s32, 1
      %p401 = por %p399, %p400
      %p403 = scmp.ne.s32.totalorder %s388, %s402
      %p404 = scmp.eq.s32.totalorder %s32, 0
      %p405 = por %p403, %p404
      %s406 = ssub.s32 %s26, %s33
      %p407 = scmp.eq.s32.totalorder %s406, 0
      %s409 = sadd.s32 %s408, 1
      %s410 = scalar_select %p407, %s408, %s409
      %p413 = pneg %p407
      %p414 = scmp.eq.s32.totalorder %s26, 1
      %p415 = por %p413, %p414
      %p416 = scmp.ne.s32.totalorder %s408, %s411
      %p417 = scmp.eq.s32.totalorder %s26, 0
      %p418 = por %p416, %p417
      %p419 = scmp.ne.s32.totalorder %s408, %s411
      %p420 = scmp.eq.s32.totalorder %s31, 1
      %p421 = por %p419, %p420
      %p422 = scmp.ne.s32.totalorder %s411, %s412
      %p423 = scmp.eq.s32.totalorder %s31, 0
      %p424 = por %p422, %p423
      %p425 = scmp.ne.s32.totalorder %s411, %s412
      %p426 = scmp.eq.s32.totalorder %s32, 1
      %p427 = por %p425, %p426
      %p429 = scmp.ne.s32.totalorder %s412, %s428
      %p430 = scmp.eq.s32.totalorder %s32, 0
      %p431 = por %p429, %p430
      %p432 = scmp.le.s32.totalorder 1, %s26
      %p433 = scmp.lt.s32.totalorder %s26, 3
      %p434 = pnand %p432, %p433
      %p435 = pneg %p434
      // Predicated region
      $region9: #{forward.1} parent=5 // pred_check
        _
      $region10: #{forward.1} parent=5 // pred_check_branch
        %437 = sbr.rel (%p434) target = $region12
      $region11: #{forward.1} parent=5 // pred_region
        %s438 = ssub.s32 %s26, 1
        // Predicated region
        $region13: #{forward.1} parent=11 // pred_check
          %p439 = pneg %p125
        $region14: #{forward.1} parent=11 // pred_check_branch
          %441 = sbr.rel (%p439) target = $region16
        $region15: #{forward.1} parent=11 // pred_region
          %443 = vsyncadd [#allocation6], 0
          %s444 = sshll.u32 %s3, 4
          %s445 = int_to_ptr.hbm [resolvable:$true] %s444
          %s446 = sshll.u32 [#allocation5], 4
          %s447 = int_to_ptr.vmem [resolvable:$true] %s446
          %452 = dma.hbm_to_vmem [thread:$0]  %s445, 1024, %s447, [#allocation6], 256, 256, 16
        $region16: #{forward.1} parent=11 // pred_fallthru
          _
        // Predicated region
        $region17: #{forward.1} parent=11 // pred_check
          %p453 = pneg %p146
        $region18: #{forward.1} parent=11 // pred_check_branch
          %455 = sbr.rel (%p453) target = $region20
        $region19: #{forward.1} parent=11 // pred_region
          _
        $region20: #{forward.1} parent=11 // pred_fallthru
          _
        // Predicated region
        $region21: #{forward.1} parent=11 // pred_check
          %p456 = pneg %p167
        $region22: #{forward.1} parent=11 // pred_check_branch
          %458 = sbr.rel (%p456) target = $region24
        $region23: #{forward.1} parent=11 // pred_region
          _
        $region24: #{forward.1} parent=11 // pred_fallthru
          _
        // Predicated region
        $region25: #{forward.1} parent=11 // pred_check
          %p459 = pneg %p188
        $region26: #{forward.1} parent=11 // pred_check_branch
          %461 = sbr.rel (%p459) target = $region28
        $region27: #{forward.1} parent=11 // pred_region
          _
        $region28: #{forward.1} parent=11 // pred_fallthru
          _
        // Predicated region
        $region29: #{forward.1} parent=11 // pred_check
          %p462 = pneg %p209
        $region30: #{forward.1} parent=11 // pred_check_branch
          %464 = sbr.rel (%p462) target = $region32
        $region31: #{forward.1} parent=11 // pred_region
          %466 = vsyncadd [#allocation8], 0
          %s467 = sshll.u32 %s7, 4
          %s468 = int_to_ptr.hbm [resolvable:$true] %s467
          %s469 = sshll.u32 [#allocation7], 4
          %s470 = int_to_ptr.vmem [resolvable:$true] %s469
          %475 = dma.hbm_to_vmem [thread:$0]  %s468, 2048, %s470, [#allocation8], 256, 256, 16
        $region32: #{forward.1} parent=11 // pred_fallthru
          _
        // Predicated region
        $region33: #{forward.1} parent=11 // pred_check
          %p476 = pneg %p230
        $region34: #{forward.1} parent=11 // pred_check_branch
          %478 = sbr.rel (%p476) target = $region36
        $region35: #{forward.1} parent=11 // pred_region
          _
        $region36: #{forward.1} parent=11 // pred_fallthru
          _
        // Predicated region
        $region37: #{forward.1} parent=11 // pred_check
          %p479 = pneg %p251
        $region38: #{forward.1} parent=11 // pred_check_branch
          %481 = sbr.rel (%p479) target = $region40
        $region39: #{forward.1} parent=11 // pred_region
          %483 = vsyncadd [#allocation8], 0
          %s484 = sshll.u32 %s9, 4
          %s485 = int_to_ptr.hbm [resolvable:$true] %s484
          %s486 = sshll.u32 [#allocation9], 4
          %s487 = int_to_ptr.vmem [resolvable:$true] %s486
          %492 = dma.hbm_to_vmem [thread:$0]  %s485, 2048, %s487, [#allocation8], 256, 256, 16
        $region40: #{forward.1} parent=11 // pred_fallthru
          _
        // Predicated region
        $region41: #{forward.1} parent=11 // pred_check
          %p493 = pneg %p272
        $region42: #{forward.1} parent=11 // pred_check_branch
          %495 = sbr.rel (%p493) target = $region44
        $region43: #{forward.1} parent=11 // pred_region
          _
        $region44: #{forward.1} parent=11 // pred_fallthru
          _
        // Predicated region
        $region45: #{forward.1} parent=11 // pred_check
          %p496 = pneg %p293
        $region46: #{forward.1} parent=11 // pred_check_branch
          %498 = sbr.rel (%p496) target = $region48
        $region47: #{forward.1} parent=11 // pred_region
          %500 = vsyncadd [#allocation11], 0
          %s501 = sshll.u32 %s11, 4
          %s502 = int_to_ptr.hbm [resolvable:$true] %s501
          %s503 = sshll.u32 [#allocation10], 4
          %s504 = int_to_ptr.vmem [resolvable:$true] %s503
          %509 = dma.hbm_to_vmem [thread:$0]  %s502, 1024, %s504, [#allocation11], 128, 128, 8
        $region48: #{forward.1} parent=11 // pred_fallthru
          _
        // Predicated region
        $region49: #{forward.1} parent=11 // pred_check
          %p510 = pneg %p314
        $region50: #{forward.1} parent=11 // pred_check_branch
          %512 = sbr.rel (%p510) target = $region52
        $region51: #{forward.1} parent=11 // pred_region
          _
        $region52: #{forward.1} parent=11 // pred_fallthru
          _
        // Predicated region
        $region53: #{forward.1} parent=11 // pred_check
          %p513 = pneg %p335
        $region54: #{forward.1} parent=11 // pred_check_branch
          %515 = sbr.rel (%p513) target = $region56
        $region55: #{forward.1} parent=11 // pred_region
          _
        $region56: #{forward.1} parent=11 // pred_fallthru
          _
        // Predicated region
        $region57: #{forward.1} parent=11 // pred_check
          %p516 = pneg %p356
        $region58: #{forward.1} parent=11 // pred_check_branch
          %518 = sbr.rel (%p516) target = $region60
        $region59: #{forward.1} parent=11 // pred_region
          _
        $region60: #{forward.1} parent=11 // pred_fallthru
          _
        // Predicated region
        $region61: #{forward.1} parent=11 // pred_check
          %p519 = pneg %p377
        $region62: #{forward.1} parent=11 // pred_check_branch
          %521 = sbr.rel (%p519) target = $region64
        $region63: #{forward.1} parent=11 // pred_region
          %523 = vsyncadd [#allocation11], 0
          %s524 = sshll.u32 %s15, 4
          %s525 = int_to_ptr.hbm [resolvable:$true] %s524
          %s526 = sshll.u32 [#allocation12], 4
          %s527 = int_to_ptr.vmem [resolvable:$true] %s526
          %532 = dma.hbm_to_vmem [thread:$0]  %s525, 1024, %s527, [#allocation11], 128, 128, 8
        $region64: #{forward.1} parent=11 // pred_fallthru
          _
        // Predicated region
        $region65: #{forward.1} parent=11 // pred_check
          %p533 = pneg %p398
        $region66: #{forward.1} parent=11 // pred_check_branch
          %535 = sbr.rel (%p533) target = $region68
        $region67: #{forward.1} parent=11 // pred_region
          _
        $region68: #{forward.1} parent=11 // pred_fallthru
          _
      $region12: #{forward.1} parent=5 // pred_fallthru
        _
      %p536 = scmp.lt.s32.totalorder %s26, 2
      // Predicated region
      $region69: #{forward.1} parent=5 // pred_check
        %p537 = pneg %p536
      $region70: #{forward.1} parent=5 // pred_check_branch
        %539 = sbr.rel (%p537) target = $region72
      $region71: #{forward.1} parent=5 // pred_region
        // Predicated region
        $region73: #{forward.1} parent=71 // pred_check
          %p540 = pneg %p46
        $region74: #{forward.1} parent=71 // pred_check_branch
          %542 = sbr.rel (%p540) target = $region76
        $region75: #{forward.1} parent=71 // pred_region
          %p543 = scmp.lt.s32.totalorder %s26, 1
          %s544 = scalar_select %p543, %s26, 1
          %s545 = smul.addr %s544, 8
          %s546 = scalar_lea.vmem %s0, %s545
        $region76: #{forward.1} parent=71 // pred_fallthru
          _
        // Predicated region
        $region77: #{forward.1} parent=71 // pred_check
          %p547 = pneg %p72
        $region78: #{forward.1} parent=71 // pred_check_branch
          %549 = sbr.rel (%p547) target = $region80
        $region79: #{forward.1} parent=71 // pred_region
          %p550 = scmp.lt.s32.totalorder %s26, 1
          %s551 = scalar_select %p550, %s26, 1
          %s552 = smul.addr %s551, 8
          %s553 = scalar_lea.vmem %s1, %s552
        $region80: #{forward.1} parent=71 // pred_fallthru
          _
        // Predicated region
        $region81: #{forward.1} parent=71 // pred_check
          %p554 = pneg %p98
        $region82: #{forward.1} parent=71 // pred_check_branch
          %556 = sbr.rel (%p554) target = $region84
        $region83: #{forward.1} parent=71 // pred_region
          %p557 = scmp.lt.s32.totalorder %s26, 1
          %s558 = scalar_select %p557, %s26, 1
          %s559 = scalar_lea.vmem %s2, %s558
        $region84: #{forward.1} parent=71 // pred_fallthru
          _
      $region72: #{forward.1} parent=5 // pred_fallthru
        _
      %p560 = scmp.le.s32.totalorder 1, %s26
      %p561 = scmp.lt.s32.totalorder %s26, 3
      %p562 = pnand %p560, %p561
      %p563 = pneg %p562
      // Predicated region
      $region85: #{forward.1} parent=5 // pred_check
        _
      $region86: #{forward.1} parent=5 // pred_check_branch
        %565 = sbr.rel (%p562) target = $region88
      $region87: #{forward.1} parent=5 // pred_region
        %s566 = ssub.s32 %s26, 1
        // Predicated region
        $region89: #{forward.1} parent=87 // pred_check
          %p567 = pneg %p125
        $region90: #{forward.1} parent=87 // pred_check_branch
          %569 = sbr.rel (%p567) target = $region92
        $region91: #{forward.1} parent=87 // pred_region
          %571 = dma.done [#allocation6], 1024
        $region92: #{forward.1} parent=87 // pred_fallthru
          _
        // Predicated region
        $region93: #{forward.1} parent=87 // pred_check
          %p572 = pneg %p209
        $region94: #{forward.1} parent=87 // pred_check_branch
          %574 = sbr.rel (%p572) target = $region96
        $region95: #{forward.1} parent=87 // pred_region
          %576 = dma.done [#allocation8], 2048
        $region96: #{forward.1} parent=87 // pred_fallthru
          _
        // Predicated region
        $region97: #{forward.1} parent=87 // pred_check
          %p577 = pneg %p251
        $region98: #{forward.1} parent=87 // pred_check_branch
          %579 = sbr.rel (%p577) target = $region100
        $region99: #{forward.1} parent=87 // pred_region
          %581 = dma.done [#allocation8], 2048
        $region100: #{forward.1} parent=87 // pred_fallthru
          _
        // Predicated region
        $region101: #{forward.1} parent=87 // pred_check
          %p582 = pneg %p293
        $region102: #{forward.1} parent=87 // pred_check_branch
          %584 = sbr.rel (%p582) target = $region104
        $region103: #{forward.1} parent=87 // pred_region
          %586 = dma.done [#allocation11], 1024
        $region104: #{forward.1} parent=87 // pred_fallthru
          _
        // Predicated region
        $region105: #{forward.1} parent=87 // pred_check
          %p587 = pneg %p377
        $region106: #{forward.1} parent=87 // pred_check_branch
          %589 = sbr.rel (%p587) target = $region108
        $region107: #{forward.1} parent=87 // pred_region
          %591 = dma.done [#allocation11], 1024
        $region108: #{forward.1} parent=87 // pred_fallthru
          _
        %p592 = scmp.lt.s32.totalorder %s31, 1
        %s593 = scalar_select %p592, %s31, 1
        %s594 = smul.addr %s593, 8
        %s595 = scalar_lea.vmem %s0, %s594
        %p596 = pneg %p52
        %p597 = pneg %p49
        %p598 = scmp.lt.s32.totalorder %s31, 1
        %s599 = scalar_select %p598, %s31, 1
        %s600 = smul.addr %s599, 8
        %s601 = scalar_lea.vmem %s1, %s600
        %p602 = pneg %p78
        %p603 = pneg %p75
        %p604 = scmp.lt.s32.totalorder %s31, 1
        %s605 = scalar_select %p604, %s31, 1
        %s606 = scalar_lea.vmem %s2, %s605
        %p607 = pneg %p104
        %p608 = pneg %p101
        %p609 = pneg %p125
        %p610 = pneg %p122
        %p611 = pneg %p146
        %p612 = pneg %p143
        %p613 = pneg %p167
        %p614 = pneg %p164
        %p615 = pneg %p188
        %p616 = pneg %p185
        %p617 = pneg %p209
        %p618 = pneg %p206
        %p619 = pneg %p230
        %p620 = pneg %p227
        %p621 = pneg %p251
        %p622 = pneg %p248
        %p623 = pneg %p272
        %p624 = pneg %p269
        %p625 = pneg %p293
        %p626 = pneg %p290
        %p627 = pneg %p314
        %p628 = pneg %p311
        %p629 = pneg %p335
        %p630 = pneg %p332
        %p631 = pneg %p356
        %p632 = pneg %p353
        %p633 = pneg %p377
        %p634 = pneg %p374
        %p635 = pneg %p398
        %p636 = pneg %p395
        %p637 = pneg %p424
        %p638 = pneg %p421
        %p639 = scmp.lt.s32.totalorder %s31, 1
        %s640 = scalar_select %p639, %s31, 1
        %s641 = smul.addr %s640, 8
        %s642 = scalar_lea.vmem %s17, %s641
        %p643 = scmp.lt.s32.totalorder %s31, 1
        %s644 = scalar_select %p643, %s31, 1
        %s645 = smul.addr %s644, 8
        %s646 = scalar_lea.vmem %s0, %s645
        %p647 = scmp.lt.s32.totalorder %s31, 1
        %s648 = scalar_select %p647, %s31, 1
        %s649 = smul.addr %s648, 8
        %s650 = scalar_lea.vmem %s1, %s649
        %p651 = scmp.lt.s32.totalorder %s31, 1
        %s652 = scalar_select %p651, %s31, 1
        %s653 = scalar_lea.vmem %s2, %s652
        %p654 = scmp.lt.s32.totalorder %s31, 1
        %s655 = scalar_select %p654, %s31, 1
        %s656 = smul.addr %s655, 8
        %s657 = scalar_lea.vmem %s17, %s656
        %v658 = vld [vmem:[%s646] sm:$0xff]
        %v659 = vld [vmem:[%s650] sm:$0xff]
        %661 = vset.pattern.permute.xlu0 0
        %662 = vperm.xlu0 %661, %v659
        %v663 = vpop.permute.xlu0 %662
        %v665 = vmul.f32 %v658, %v663
        %v666 = vld [vmem:[#allocation5] sm:$0xff]
        %v667 = vld [vmem:[#allocation5 + $0x8] sm:$0xff]
        %v668 = vld [vmem:[#allocation5 + $0x10] sm:$0xff]
        %v669 = vld [vmem:[#allocation5 + $0x18] sm:$0xff]
        %v670 = vld [vmem:[#allocation5 + $0x20] sm:$0xff]
        %v671 = vld [vmem:[#allocation5 + $0x28] sm:$0xff]
        %v672 = vld [vmem:[#allocation5 + $0x30] sm:$0xff]
        %v673 = vld [vmem:[#allocation5 + $0x38] sm:$0xff]
        %v674 = vld [vmem:[%s5] sm:$0x3]
        %v676 = vperm.slane %v674, 0
        %v677 = vperm.slane %v674, 1
        %vm680 = vcmask 261120
        %v682 = vsel %vm680, %v665, 0
        %684 = vmatpush.msra.mxu0 0.0
        %685 = vmatpush.msra.mxu0 0.0
        %686 = vmatpush.msra.mxu0 0.0
        %687 = vmatpush.msra.mxu0 0.0
        %688 = vmatpush.msra.mxu0 0.0
        %689 = vmatpush.msra.mxu0 0.0
        %690 = vmatpush.msra.mxu0 0.0
        %691 = vmatpush.msra.mxu0 0.0
        %692 = vmatpush.msra.mxu0 0.0
        %693 = vmatpush.msra.mxu0 0.0
        %694 = vmatpush.msra.mxu0 0.0
        %695 = vmatpush.msra.mxu0 0.0
        %696 = vmatpush.msra.mxu0 %v672
        %697 = vmatpush.msra.mxu0 %v670
        %698 = vmatpush.msra.mxu0 %v668
        %699 = vmatpush.msra.mxu0 %v666
        %700 = vmatmul.f32.gmra.mxu0 %v682
        %v701 = vpop.f32.mrf.mxu0
        %v702 = vadd.f32 %v676, %v701
        %703 = vdwg.mxu0
        %704 = vmatpush.msra.mxu0 0.0
        %705 = vmatpush.msra.mxu0 0.0
        %706 = vmatpush.msra.mxu0 0.0
        %707 = vmatpush.msra.mxu0 0.0
        %708 = vmatpush.msra.mxu0 0.0
        %709 = vmatpush.msra.mxu0 0.0
        %710 = vmatpush.msra.mxu0 0.0
        %711 = vmatpush.msra.mxu0 0.0
        %712 = vmatpush.msra.mxu0 0.0
        %713 = vmatpush.msra.mxu0 0.0
        %714 = vmatpush.msra.mxu0 0.0
        %715 = vmatpush.msra.mxu0 0.0
        %716 = vmatpush.msra.mxu0 %v673
        %717 = vmatpush.msra.mxu0 %v671
        %718 = vmatpush.msra.mxu0 %v669
        %719 = vmatpush.msra.mxu0 %v667
        %720 = vmatmul.f32.gmra.mxu0 %v682
        %v721 = vpop.f32.mrf.mxu0
        %v722 = vadd.f32 %v677, %v721
        %723 = vdwg.mxu0
        %724 = vst [vmem:[#allocation2] sm:$0xff] %v702
        %725 = vst [vmem:[#allocation2 + $0x8] sm:$0xff] %v722
        %v726 = vld [vmem:[%s4] sm:$0xff]
        %v727 = vld [vmem:[%s4 + $0x8] sm:$0xff]
        %v728 = vld [vmem:[%s4 + $0x10] sm:$0xff]
        %v729 = vld [vmem:[%s4 + $0x18] sm:$0xff]
        %v730 = vld [vmem:[%s4 + $0x20] sm:$0xff]
        %v731 = vld [vmem:[%s4 + $0x28] sm:$0xff]
        %v732 = vld [vmem:[%s4 + $0x30] sm:$0xff]
        %v733 = vld [vmem:[%s4 + $0x38] sm:$0xff]
        %v734 = vld [vmem:[%s4 + $0x40] sm:$0xff]
        %v735 = vld [vmem:[%s4 + $0x48] sm:$0xff]
        %v736 = vld [vmem:[%s4 + $0x50] sm:$0xff]
        %v737 = vld [vmem:[%s4 + $0x58] sm:$0xff]
        %v738 = vld [vmem:[%s4 + $0x60] sm:$0xff]
        %v739 = vld [vmem:[%s4 + $0x68] sm:$0xff]
        %v740 = vld [vmem:[%s4 + $0x70] sm:$0xff]
        %v741 = vld [vmem:[%s4 + $0x78] sm:$0xff]
        %vm742 = vcmask 523264
        %v744 = vsel %vm742, 0.0, 0
        %746 = vmatpush.msra.mxu0 0.0
        %747 = vmatpush.msra.mxu0 0.0
        %748 = vmatpush.msra.mxu0 0.0
        %749 = vmatpush.msra.mxu0 0.0
        %750 = vmatpush.msra.mxu0 0.0
        %751 = vmatpush.msra.mxu0 0.0
        %752 = vmatpush.msra.mxu0 0.0
        %753 = vmatpush.msra.mxu0 0.0
        %754 = vmatpush.msra.mxu0 %v740
        %755 = vmatpush.msra.mxu0 %v738
        %756 = vmatpush.msra.mxu0 %v736
        %757 = vmatpush.msra.mxu0 %v734
        %758 = vmatpush.msra.mxu0 %v732
        %759 = vmatpush.msra.mxu0 %v730
        %760 = vmatpush.msra.mxu0 %v728
        %761 = vmatpush.msra.mxu0 %v726
        %762 = vmatmul.f32.gmra.mxu0 %v744
        %v763 = vpop.f32.mrf.mxu0
        %v764 = vadd.f32 0.0, %v763
        %765 = vdwg.mxu0
        %766 = vmatpush.msra.mxu0 0.0
        %767 = vmatpush.msra.mxu0 0.0
        %768 = vmatpush.msra.mxu0 0.0
        %769 = vmatpush.msra.mxu0 0.0
        %770 = vmatpush.msra.mxu0 0.0
        %771 = vmatpush.msra.mxu0 0.0
        %772 = vmatpush.msra.mxu0 0.0
        %773 = vmatpush.msra.mxu0 0.0
        %774 = vmatpush.msra.mxu0 %v741
        %775 = vmatpush.msra.mxu0 %v739
        %776 = vmatpush.msra.mxu0 %v737
        %777 = vmatpush.msra.mxu0 %v735
        %778 = vmatpush.msra.mxu0 %v733
        %779 = vmatpush.msra.mxu0 %v731
        %780 = vmatpush.msra.mxu0 %v729
        %781 = vmatpush.msra.mxu0 %v727
        %782 = vmatmul.f32.gmra.mxu0 %v744
        %v783 = vpop.f32.mrf.mxu0
        %v784 = vadd.f32 0.0, %v783
        %785 = vdwg.mxu0
        %v786 = vld [vmem:[#allocation2] ss:$0 sm:$0xff]
        %v787 = vadd.f32 %v786, %v764
        %v788 = vld [vmem:[#allocation2 + $0xf] ss:$0 sm:$0xff]
        %v789 = vadd.f32 %v788, %v784
        %v790 = vxor.u32 %v787, 2147483648
        %v791 = vmul.f32 %v790, 1.442695
        %v792 = vpow.pop %v791
        %v793 = vadd.f32 %v792, 1.0
        %v794 = vrcp.pop %v793
        %v795 = vmul.f32 %v793, %v794
        %v796 = vsub.f32 1.0, %v795
        %v797 = vmul.f32 %v794, %v796
        %v798 = vadd.f32 %v794, %v797
        %vm799 = vweird.f32 %v793
        %vm800 = vweird.f32 %v794
        %vm801 = vmor %vm799, %vm800
        %v802 = vsel %vm801, %v794, %v798
        %v803 = vand.u32 2147483647, %v793
        %vm804 = vcmp.eq.f32.partialorder %v803, 8.507059e+37
        %v805 = vand.u32 %v793, 2147483648
        %v806 = vor.u32 1.1754944e-38, %v805
        %v807 = vsel %vm804, %v806, %v802
        %v808 = vmul.f32 1.0, %v807
        %v809 = vtanh.pop %v787
        %v810 = vmul.f32 %v808, 0.0
        %812 = vrot.lane.b32.xlu0 %v809, 64
        %v813 = vpop.permute.xlu0 %812
        %v815 = vmul.f32 %v808, %v813
        %817 = vrot.lane.b32.xlu0 %v815, 32
        %v818 = vpop.permute.xlu0 %817
        %v820 = vadd.f32 %v810, %v818
        %v821 = vtanh.pop %v820
        %823 = vrot.lane.b32.xlu0 %v821, 64
        %v824 = vpop.permute.xlu0 %823
        %v826 = vmul.f32 %v808, %v824
        %v827 = vxor.u32 %v789, 2147483648
        %v828 = vmul.f32 %v827, 1.442695
        %v829 = vpow.pop %v828
        %v830 = vadd.f32 %v829, 1.0
        %v831 = vrcp.pop %v830
        %v832 = vmul.f32 %v830, %v831
        %v833 = vsub.f32 1.0, %v832
        %v834 = vmul.f32 %v831, %v833
        %v835 = vadd.f32 %v831, %v834
        %vm836 = vweird.f32 %v830
        %vm837 = vweird.f32 %v831
        %vm838 = vmor %vm836, %vm837
        %v839 = vsel %vm838, %v831, %v835
        %v840 = vand.u32 2147483647, %v830
        %vm841 = vcmp.eq.f32.partialorder %v840, 8.507059e+37
        %v842 = vand.u32 %v830, 2147483648
        %v843 = vor.u32 1.1754944e-38, %v842
        %v844 = vsel %vm841, %v843, %v839
        %v845 = vmul.f32 1.0, %v844
        %v846 = vtanh.pop %v789
        %v847 = vmul.f32 %v845, 0.0
        %849 = vrot.lane.b32.xlu0 %v846, 64
        %v850 = vpop.permute.xlu0 %849
        %v852 = vmul.f32 %v845, %v850
        %854 = vrot.lane.b32.xlu0 %v852, 32
        %v855 = vpop.permute.xlu0 %854
        %v857 = vadd.f32 %v847, %v855
        %v858 = vtanh.pop %v857
        %860 = vrot.lane.b32.xlu0 %v858, 64
        %v861 = vpop.permute.xlu0 %860
        %v863 = vmul.f32 %v845, %v861
        %865 = vrot.lane.b32.xlu0 %v826, 32
        %v866 = vpop.permute.xlu0 %865
        %vm868 = vcmask 253952
        %869 = vst.msk [vmem:[#allocation3] sm:$0x1] %vm868, %v866
        %871 = vrot.lane.b32.xlu0 %v863, 32
        %v872 = vpop.permute.xlu0 %871
        %874 = vst.msk [vmem:[#allocation4 + $0x7] sm:$0x1] %vm868, %v872
        %875 = vrot.lane.b32.xlu0 %v863, 64
        %v876 = vpop.permute.xlu0 %875
        %v878 = vsel %vm680, %v866, %v876
        %880 = vrot.lane.b32.xlu0 %v820, 96
        %v881 = vpop.permute.xlu0 %880
        %v883 = vsel %vm680, %v881, %v857
        %v885 = vsel %vm742, %v878, 0
        %887 = vmatpush.msra.mxu0 0.0
        %888 = vmatpush.msra.mxu0 0.0
        %889 = vmatpush.msra.mxu0 0.0
        %890 = vmatpush.msra.mxu0 0.0
        %891 = vmatpush.msra.mxu0 0.0
        %892 = vmatpush.msra.mxu0 0.0
        %893 = vmatpush.msra.mxu0 0.0
        %894 = vmatpush.msra.mxu0 0.0
        %895 = vmatpush.msra.mxu0 %v740
        %896 = vmatpush.msra.mxu0 %v738
        %897 = vmatpush.msra.mxu0 %v736
        %898 = vmatpush.msra.mxu0 %v734
        %899 = vmatpush.msra.mxu0 %v732
        %900 = vmatpush.msra.mxu0 %v730
        %901 = vmatpush.msra.mxu0 %v728
        %902 = vmatpush.msra.mxu0 %v726
        %903 = vmatmul.f32.gmra.mxu0 %v885
        %v904 = vpop.f32.mrf.mxu0
        %v905 = vadd.f32 0.0, %v904
        %906 = vdwg.mxu0
        %907 = vmatpush.msra.mxu0 0.0
        %908 = vmatpush.msra.mxu0 0.0
        %909 = vmatpush.msra.mxu0 0.0
        %910 = vmatpush.msra.mxu0 0.0
        %911 = vmatpush.msra.mxu0 0.0
        %912 = vmatpush.msra.mxu0 0.0
        %913 = vmatpush.msra.mxu0 0.0
        %914 = vmatpush.msra.mxu0 0.0
        %915 = vmatpush.msra.mxu0 %v741
        %916 = vmatpush.msra.mxu0 %v739
        %917 = vmatpush.msra.mxu0 %v737
        %918 = vmatpush.msra.mxu0 %v735
        %919 = vmatpush.msra.mxu0 %v733
        %920 = vmatpush.msra.mxu0 %v731
        %921 = vmatpush.msra.mxu0 %v729
        %922 = vmatpush.msra.mxu0 %v727
        %923 = vmatmul.f32.gmra.mxu0 %v885
        %v924 = vpop.f32.mrf.mxu0
        %v925 = vadd.f32 0.0, %v924
        %926 = vdwg.mxu0
        %v927 = vld [vmem:[#allocation2 + $0x1] ss:$0 sm:$0xff]
        %v928 = vadd.f32 %v927, %v905
        %v929 = vld [vmem:[#allocation2 + $0xe] ss:$0 sm:$0xff]
        %v930 = vadd.f32 %v929, %v925
        %v931 = vxor.u32 %v928, 2147483648
        %v932 = vmul.f32 %v931, 1.442695
        %v933 = vpow.pop %v932
        %v934 = vadd.f32 %v933, 1.0
        %v935 = vrcp.pop %v934
        %v936 = vmul.f32 %v934, %v935
        %v937 = vsub.f32 1.0, %v936
        %v938 = vmul.f32 %v935, %v937
        %v939 = vadd.f32 %v935, %v938
        %vm940 = vweird.f32 %v934
        %vm941 = vweird.f32 %v935
        %vm942 = vmor %vm940, %vm941
        %v943 = vsel %vm942, %v935, %v939
        %v944 = vand.u32 2147483647, %v934
        %vm945 = vcmp.eq.f32.partialorder %v944, 8.507059e+37
        %v946 = vand.u32 %v934, 2147483648
        %v947 = vor.u32 1.1754944e-38, %v946
        %v948 = vsel %vm945, %v947, %v943
        %v949 = vmul.f32 1.0, %v948
        %v950 = vtanh.pop %v928
        %952 = vrot.lane.b32.xlu0 %v883, 32
        %v953 = vpop.permute.xlu0 %952
        %v955 = vmul.f32 %v949, %v953
        %957 = vrot.lane.b32.xlu0 %v950, 64
        %v958 = vpop.permute.xlu0 %957
        %v960 = vmul.f32 %v949, %v958
        %962 = vrot.lane.b32.xlu0 %v960, 32
        %v963 = vpop.permute.xlu0 %962
        %v965 = vadd.f32 %v955, %v963
        %v966 = vtanh.pop %v965
        %968 = vrot.lane.b32.xlu0 %v966, 64
        %v969 = vpop.permute.xlu0 %968
        %v971 = vmul.f32 %v949, %v969
        %v972 = vxor.u32 %v930, 2147483648
        %v973 = vmul.f32 %v972, 1.442695
        %v974 = vpow.pop %v973
        %v975 = vadd.f32 %v974, 1.0
        %v976 = vrcp.pop %v975
        %v977 = vmul.f32 %v975, %v976
        %v978 = vsub.f32 1.0, %v977
        %v979 = vmul.f32 %v976, %v978
        %v980 = vadd.f32 %v976, %v979
        %vm981 = vweird.f32 %v975
        %vm982 = vweird.f32 %v976
        %vm983 = vmor %vm981, %vm982
        %v984 = vsel %vm983, %v976, %v980
        %v985 = vand.u32 2147483647, %v975
        %vm986 = vcmp.eq.f32.partialorder %v985, 8.507059e+37
        %v987 = vand.u32 %v975, 2147483648
        %v988 = vor.u32 1.1754944e-38, %v987
        %v989 = vsel %vm986, %v988, %v984
        %v990 = vmul.f32 1.0, %v989
        %v991 = vtanh.pop %v930
        %v992 = vmul.f32 %v990, %v883
        %994 = vrot.lane.b32.xlu0 %v991, 64
        %v995 = vpop.permute.xlu0 %994
        %v997 = vmul.f32 %v990, %v995
        %999 = vrot.lane.b32.xlu0 %v997, 32
        %v1000 = vpop.permute.xlu0 %999
        %v1002 = vadd.f32 %v992, %v1000
        %v1003 = vtanh.pop %v1002
        %1005 = vrot.lane.b32.xlu0 %v1003, 64
        %v1006 = vpop.permute.xlu0 %1005
        %v1008 = vmul.f32 %v990, %v1006
        %1010 = vrot.lane.b32.xlu0 %v971, 32
        %v1011 = vpop.permute.xlu0 %1010
        %1013 = vst.msk [vmem:[#allocation3 + $0x1] sm:$0x1] %vm868, %v1011
        %1015 = vrot.lane.b32.xlu0 %v1008, 32
        %v1016 = vpop.permute.xlu0 %1015
        %1018 = vst.msk [vmem:[#allocation4 + $0x6] sm:$0x1] %vm868, %v1016
        %1019 = vrot.lane.b32.xlu0 %v1008, 64
        %v1020 = vpop.permute.xlu0 %1019
        %v1022 = vsel %vm680, %v1011, %v1020
        %1024 = vrot.lane.b32.xlu0 %v965, 96
        %v1025 = vpop.permute.xlu0 %1024
        %v1027 = vsel %vm680, %v1025, %v1002
        %v1029 = vsel %vm742, %v1022, 0
        %1031 = vmatpush.msra.mxu0 0.0
        %1032 = vmatpush.msra.mxu0 0.0
        %1033 = vmatpush.msra.mxu0 0.0
        %1034 = vmatpush.msra.mxu0 0.0
        %1035 = vmatpush.msra.mxu0 0.0
        %1036 = vmatpush.msra.mxu0 0.0
        %1037 = vmatpush.msra.mxu0 0.0
        %1038 = vmatpush.msra.mxu0 0.0
        %1039 = vmatpush.msra.mxu0 %v740
        %1040 = vmatpush.msra.mxu0 %v738
        %1041 = vmatpush.msra.mxu0 %v736
        %1042 = vmatpush.msra.mxu0 %v734
        %1043 = vmatpush.msra.mxu0 %v732
        %1044 = vmatpush.msra.mxu0 %v730
        %1045 = vmatpush.msra.mxu0 %v728
        %1046 = vmatpush.msra.mxu0 %v726
        %1047 = vmatmul.f32.gmra.mxu0 %v1029
        %v1048 = vpop.f32.mrf.mxu0
        %v1049 = vadd.f32 0.0, %v1048
        %1050 = vdwg.mxu0
        %1051 = vmatpush.msra.mxu0 0.0
        %1052 = vmatpush.msra.mxu0 0.0
        %1053 = vmatpush.msra.mxu0 0.0
        %1054 = vmatpush.msra.mxu0 0.0
        %1055 = vmatpush.msra.mxu0 0.0
        %1056 = vmatpush.msra.mxu0 0.0
        %1057 = vmatpush.msra.mxu0 0.0
        %1058 = vmatpush.msra.mxu0 0.0
        %1059 = vmatpush.msra.mxu0 %v741
        %1060 = vmatpush.msra.mxu0 %v739
        %1061 = vmatpush.msra.mxu0 %v737
        %1062 = vmatpush.msra.mxu0 %v735
        %1063 = vmatpush.msra.mxu0 %v733
        %1064 = vmatpush.msra.mxu0 %v731
        %1065 = vmatpush.msra.mxu0 %v729
        %1066 = vmatpush.msra.mxu0 %v727
        %1067 = vmatmul.f32.gmra.mxu0 %v1029
        %v1068 = vpop.f32.mrf.mxu0
        %v1069 = vadd.f32 0.0, %v1068
        %1070 = vdwg.mxu0
        %v1071 = vld [vmem:[#allocation2 + $0x2] ss:$0 sm:$0xff]
        %v1072 = vadd.f32 %v1071, %v1049
        %v1073 = vld [vmem:[#allocation2 + $0xd] ss:$0 sm:$0xff]
        %v1074 = vadd.f32 %v1073, %v1069
        %v1075 = vxor.u32 %v1072, 2147483648
        %v1076 = vmul.f32 %v1075, 1.442695
        %v1077 = vpow.pop %v1076
        %v1078 = vadd.f32 %v1077, 1.0
        %v1079 = vrcp.pop %v1078
        %v1080 = vmul.f32 %v1078, %v1079
        %v1081 = vsub.f32 1.0, %v1080
        %v1082 = vmul.f32 %v1079, %v1081
        %v1083 = vadd.f32 %v1079, %v1082
        %vm1084 = vweird.f32 %v1078
        %vm1085 = vweird.f32 %v1079
        %vm1086 = vmor %vm1084, %vm1085
        %v1087 = vsel %vm1086, %v1079, %v1083
        %v1088 = vand.u32 2147483647, %v1078
        %vm1089 = vcmp.eq.f32.partialorder %v1088, 8.507059e+37
        %v1090 = vand.u32 %v1078, 2147483648
        %v1091 = vor.u32 1.1754944e-38, %v1090
        %v1092 = vsel %vm1089, %v1091, %v1087
        %v1093 = vmul.f32 1.0, %v1092
        %v1094 = vtanh.pop %v1072
        %1096 = vrot.lane.b32.xlu0 %v1027, 32
        %v1097 = vpop.permute.xlu0 %1096
        %v1099 = vmul.f32 %v1093, %v1097
        %1101 = vrot.lane.b32.xlu0 %v1094, 64
        %v1102 = vpop.permute.xlu0 %1101
        %v1104 = vmul.f32 %v1093, %v1102
        %1106 = vrot.lane.b32.xlu0 %v1104, 32
        %v1107 = vpop.permute.xlu0 %1106
        %v1109 = vadd.f32 %v1099, %v1107
        %v1110 = vtanh.pop %v1109
        %1112 = vrot.lane.b32.xlu0 %v1110, 64
        %v1113 = vpop.permute.xlu0 %1112
        %v1115 = vmul.f32 %v1093, %v1113
        %v1116 = vxor.u32 %v1074, 2147483648
        %v1117 = vmul.f32 %v1116, 1.442695
        %v1118 = vpow.pop %v1117
        %v1119 = vadd.f32 %v1118, 1.0
        %v1120 = vrcp.pop %v1119
        %v1121 = vmul.f32 %v1119, %v1120
        %v1122 = vsub.f32 1.0, %v1121
        %v1123 = vmul.f32 %v1120, %v1122
        %v1124 = vadd.f32 %v1120, %v1123
        %vm1125 = vweird.f32 %v1119
        %vm1126 = vweird.f32 %v1120
        %vm1127 = vmor %vm1125, %vm1126
        %v1128 = vsel %vm1127, %v1120, %v1124
        %v1129 = vand.u32 2147483647, %v1119
        %vm1130 = vcmp.eq.f32.partialorder %v1129, 8.507059e+37
        %v1131 = vand.u32 %v1119, 2147483648
        %v1132 = vor.u32 1.1754944e-38, %v1131
        %v1133 = vsel %vm1130, %v1132, %v1128
        %v1134 = vmul.f32 1.0, %v1133
        %v1135 = vtanh.pop %v1074
        %v1136 = vmul.f32 %v1134, %v1027
        %1138 = vrot.lane.b32.xlu0 %v1135, 64
        %v1139 = vpop.permute.xlu0 %1138
        %v1141 = vmul.f32 %v1134, %v1139
        %1143 = vrot.lane.b32.xlu0 %v1141, 32
        %v1144 = vpop.permute.xlu0 %1143
        %v1146 = vadd.f32 %v1136, %v1144
        %v1147 = vtanh.pop %v1146
        %1149 = vrot.lane.b32.xlu0 %v1147, 64
        %v1150 = vpop.permute.xlu0 %1149
        %v1152 = vmul.f32 %v1134, %v1150
        %1154 = vrot.lane.b32.xlu0 %v1115, 32
        %v1155 = vpop.permute.xlu0 %1154
        %1157 = vst.msk [vmem:[#allocation3 + $0x2] sm:$0x1] %vm868, %v1155
        %1159 = vrot.lane.b32.xlu0 %v1152, 32
        %v1160 = vpop.permute.xlu0 %1159
        %1162 = vst.msk [vmem:[#allocation4 + $0x5] sm:$0x1] %vm868, %v1160
        %1163 = vrot.lane.b32.xlu0 %v1152, 64
        %v1164 = vpop.permute.xlu0 %1163
        %v1166 = vsel %vm680, %v1155, %v1164
        %1168 = vrot.lane.b32.xlu0 %v1109, 96
        %v1169 = vpop.permute.xlu0 %1168
        %v1171 = vsel %vm680, %v1169, %v1146
        %v1173 = vsel %vm742, %v1166, 0
        %1175 = vmatpush.msra.mxu0 0.0
        %1176 = vmatpush.msra.mxu0 0.0
        %1177 = vmatpush.msra.mxu0 0.0
        %1178 = vmatpush.msra.mxu0 0.0
        %1179 = vmatpush.msra.mxu0 0.0
        %1180 = vmatpush.msra.mxu0 0.0
        %1181 = vmatpush.msra.mxu0 0.0
        %1182 = vmatpush.msra.mxu0 0.0
        %1183 = vmatpush.msra.mxu0 %v740
        %1184 = vmatpush.msra.mxu0 %v738
        %1185 = vmatpush.msra.mxu0 %v736
        %1186 = vmatpush.msra.mxu0 %v734
        %1187 = vmatpush.msra.mxu0 %v732
        %1188 = vmatpush.msra.mxu0 %v730
        %1189 = vmatpush.msra.mxu0 %v728
        %1190 = vmatpush.msra.mxu0 %v726
        %1191 = vmatmul.f32.gmra.mxu0 %v1173
        %v1192 = vpop.f32.mrf.mxu0
        %v1193 = vadd.f32 0.0, %v1192
        %1194 = vdwg.mxu0
        %1195 = vmatpush.msra.mxu0 0.0
        %1196 = vmatpush.msra.mxu0 0.0
        %1197 = vmatpush.msra.mxu0 0.0
        %1198 = vmatpush.msra.mxu0 0.0
        %1199 = vmatpush.msra.mxu0 0.0
        %1200 = vmatpush.msra.mxu0 0.0
        %1201 = vmatpush.msra.mxu0 0.0
        %1202 = vmatpush.msra.mxu0 0.0
        %1203 = vmatpush.msra.mxu0 %v741
        %1204 = vmatpush.msra.mxu0 %v739
        %1205 = vmatpush.msra.mxu0 %v737
        %1206 = vmatpush.msra.mxu0 %v735
        %1207 = vmatpush.msra.mxu0 %v733
        %1208 = vmatpush.msra.mxu0 %v731
        %1209 = vmatpush.msra.mxu0 %v729
        %1210 = vmatpush.msra.mxu0 %v727
        %1211 = vmatmul.f32.gmra.mxu0 %v1173
        %v1212 = vpop.f32.mrf.mxu0
        %v1213 = vadd.f32 0.0, %v1212
        %1214 = vdwg.mxu0
        %v1215 = vld [vmem:[#allocation2 + $0x3] ss:$0 sm:$0xff]
        %v1216 = vadd.f32 %v1215, %v1193
        %v1217 = vld [vmem:[#allocation2 + $0xc] ss:$0 sm:$0xff]
        %v1218 = vadd.f32 %v1217, %v1213
        %v1219 = vxor.u32 %v1216, 2147483648
        %v1220 = vmul.f32 %v1219, 1.442695
        %v1221 = vpow.pop %v1220
        %v1222 = vadd.f32 %v1221, 1.0
        %v1223 = vrcp.pop %v1222
        %v1224 = vmul.f32 %v1222, %v1223
        %v1225 = vsub.f32 1.0, %v1224
        %v1226 = vmul.f32 %v1223, %v1225
        %v1227 = vadd.f32 %v1223, %v1226
        %vm1228 = vweird.f32 %v1222
        %vm1229 = vweird.f32 %v1223
        %vm1230 = vmor %vm1228, %vm1229
        %v1231 = vsel %vm1230, %v1223, %v1227
        %v1232 = vand.u32 2147483647, %v1222
        %vm1233 = vcmp.eq.f32.partialorder %v1232, 8.507059e+37
        %v1234 = vand.u32 %v1222, 2147483648
        %v1235 = vor.u32 1.1754944e-38, %v1234
        %v1236 = vsel %vm1233, %v1235, %v1231
        %v1237 = vmul.f32 1.0, %v1236
        %v1238 = vtanh.pop %v1216
        %1240 = vrot.lane.b32.xlu0 %v1171, 32
        %v1241 = vpop.permute.xlu0 %1240
        %v1243 = vmul.f32 %v1237, %v1241
        %1245 = vrot.lane.b32.xlu0 %v1238, 64
        %v1246 = vpop.permute.xlu0 %1245
        %v1248 = vmul.f32 %v1237, %v1246
        %1250 = vrot.lane.b32.xlu0 %v1248, 32
        %v1251 = vpop.permute.xlu0 %1250
        %v1253 = vadd.f32 %v1243, %v1251
        %v1254 = vtanh.pop %v1253
        %1256 = vrot.lane.b32.xlu0 %v1254, 64
        %v1257 = vpop.permute.xlu0 %1256
        %v1259 = vmul.f32 %v1237, %v1257
        %v1260 = vxor.u32 %v1218, 2147483648
        %v1261 = vmul.f32 %v1260, 1.442695
        %v1262 = vpow.pop %v1261
        %v1263 = vadd.f32 %v1262, 1.0
        %v1264 = vrcp.pop %v1263
        %v1265 = vmul.f32 %v1263, %v1264
        %v1266 = vsub.f32 1.0, %v1265
        %v1267 = vmul.f32 %v1264, %v1266
        %v1268 = vadd.f32 %v1264, %v1267
        %vm1269 = vweird.f32 %v1263
        %vm1270 = vweird.f32 %v1264
        %vm1271 = vmor %vm1269, %vm1270
        %v1272 = vsel %vm1271, %v1264, %v1268
        %v1273 = vand.u32 2147483647, %v1263
        %vm1274 = vcmp.eq.f32.partialorder %v1273, 8.507059e+37
        %v1275 = vand.u32 %v1263, 2147483648
        %v1276 = vor.u32 1.1754944e-38, %v1275
        %v1277 = vsel %vm1274, %v1276, %v1272
        %v1278 = vmul.f32 1.0, %v1277
        %v1279 = vtanh.pop %v1218
        %v1280 = vmul.f32 %v1278, %v1171
        %1282 = vrot.lane.b32.xlu0 %v1279, 64
        %v1283 = vpop.permute.xlu0 %1282
        %v1285 = vmul.f32 %v1278, %v1283
        %1287 = vrot.lane.b32.xlu0 %v1285, 32
        %v1288 = vpop.permute.xlu0 %1287
        %v1290 = vadd.f32 %v1280, %v1288
        %v1291 = vtanh.pop %v1290
        %1293 = vrot.lane.b32.xlu0 %v1291, 64
        %v1294 = vpop.permute.xlu0 %1293
        %v1296 = vmul.f32 %v1278, %v1294
        %1298 = vrot.lane.b32.xlu0 %v1259, 32
        %v1299 = vpop.permute.xlu0 %1298
        %1301 = vst.msk [vmem:[#allocation3 + $0x3] sm:$0x1] %vm868, %v1299
        %1303 = vrot.lane.b32.xlu0 %v1296, 32
        %v1304 = vpop.permute.xlu0 %1303
        %1306 = vst.msk [vmem:[#allocation4 + $0x4] sm:$0x1] %vm868, %v1304
        %1307 = vrot.lane.b32.xlu0 %v1296, 64
        %v1308 = vpop.permute.xlu0 %1307
        %v1310 = vsel %vm680, %v1299, %v1308
        %1312 = vrot.lane.b32.xlu0 %v1253, 96
        %v1313 = vpop.permute.xlu0 %1312
        %v1315 = vsel %vm680, %v1313, %v1290
        %v1317 = vsel %vm742, %v1310, 0
        %1319 = vmatpush.msra.mxu0 0.0
        %1320 = vmatpush.msra.mxu0 0.0
        %1321 = vmatpush.msra.mxu0 0.0
        %1322 = vmatpush.msra.mxu0 0.0
        %1323 = vmatpush.msra.mxu0 0.0
        %1324 = vmatpush.msra.mxu0 0.0
        %1325 = vmatpush.msra.mxu0 0.0
        %1326 = vmatpush.msra.mxu0 0.0
        %1327 = vmatpush.msra.mxu0 %v740
        %1328 = vmatpush.msra.mxu0 %v738
        %1329 = vmatpush.msra.mxu0 %v736
        %1330 = vmatpush.msra.mxu0 %v734
        %1331 = vmatpush.msra.mxu0 %v732
        %1332 = vmatpush.msra.mxu0 %v730
        %1333 = vmatpush.msra.mxu0 %v728
        %1334 = vmatpush.msra.mxu0 %v726
        %1335 = vmatmul.f32.gmra.mxu0 %v1317
        %v1336 = vpop.f32.mrf.mxu0
        %v1337 = vadd.f32 0.0, %v1336
        %1338 = vdwg.mxu0
        %1339 = vmatpush.msra.mxu0 0.0
        %1340 = vmatpush.msra.mxu0 0.0
        %1341 = vmatpush.msra.mxu0 0.0
        %1342 = vmatpush.msra.mxu0 0.0
        %1343 = vmatpush.msra.mxu0 0.0
        %1344 = vmatpush.msra.mxu0 0.0
        %1345 = vmatpush.msra.mxu0 0.0
        %1346 = vmatpush.msra.mxu0 0.0
        %1347 = vmatpush.msra.mxu0 %v741
        %1348 = vmatpush.msra.mxu0 %v739
        %1349 = vmatpush.msra.mxu0 %v737
        %1350 = vmatpush.msra.mxu0 %v735
        %1351 = vmatpush.msra.mxu0 %v733
        %1352 = vmatpush.msra.mxu0 %v731
        %1353 = vmatpush.msra.mxu0 %v729
        %1354 = vmatpush.msra.mxu0 %v727
        %1355 = vmatmul.f32.gmra.mxu0 %v1317
        %v1356 = vpop.f32.mrf.mxu0
        %v1357 = vadd.f32 0.0, %v1356
        %1358 = vdwg.mxu0
        %v1359 = vld [vmem:[#allocation2 + $0x4] ss:$0 sm:$0xff]
        %v1360 = vadd.f32 %v1359, %v1337
        %v1361 = vld [vmem:[#allocation2 + $0xb] ss:$0 sm:$0xff]
        %v1362 = vadd.f32 %v1361, %v1357
        %v1363 = vxor.u32 %v1360, 2147483648
        %v1364 = vmul.f32 %v1363, 1.442695
        %v1365 = vpow.pop %v1364
        %v1366 = vadd.f32 %v1365, 1.0
        %v1367 = vrcp.pop %v1366
        %v1368 = vmul.f32 %v1366, %v1367
        %v1369 = vsub.f32 1.0, %v1368
        %v1370 = vmul.f32 %v1367, %v1369
        %v1371 = vadd.f32 %v1367, %v1370
        %vm1372 = vweird.f32 %v1366
        %vm1373 = vweird.f32 %v1367
        %vm1374 = vmor %vm1372, %vm1373
        %v1375 = vsel %vm1374, %v1367, %v1371
        %v1376 = vand.u32 2147483647, %v1366
        %vm1377 = vcmp.eq.f32.partialorder %v1376, 8.507059e+37
        %v1378 = vand.u32 %v1366, 2147483648
        %v1379 = vor.u32 1.1754944e-38, %v1378
        %v1380 = vsel %vm1377, %v1379, %v1375
        %v1381 = vmul.f32 1.0, %v1380
        %v1382 = vtanh.pop %v1360
        %1384 = vrot.lane.b32.xlu0 %v1315, 32
        %v1385 = vpop.permute.xlu0 %1384
        %v1387 = vmul.f32 %v1381, %v1385
        %1389 = vrot.lane.b32.xlu0 %v1382, 64
        %v1390 = vpop.permute.xlu0 %1389
        %v1392 = vmul.f32 %v1381, %v1390
        %1394 = vrot.lane.b32.xlu0 %v1392, 32
        %v1395 = vpop.permute.xlu0 %1394
        %v1397 = vadd.f32 %v1387, %v1395
        %v1398 = vtanh.pop %v1397
        %1400 = vrot.lane.b32.xlu0 %v1398, 64
        %v1401 = vpop.permute.xlu0 %1400
        %v1403 = vmul.f32 %v1381, %v1401
        %v1404 = vxor.u32 %v1362, 2147483648
        %v1405 = vmul.f32 %v1404, 1.442695
        %v1406 = vpow.pop %v1405
        %v1407 = vadd.f32 %v1406, 1.0
        %v1408 = vrcp.pop %v1407
        %v1409 = vmul.f32 %v1407, %v1408
        %v1410 = vsub.f32 1.0, %v1409
        %v1411 = vmul.f32 %v1408, %v1410
        %v1412 = vadd.f32 %v1408, %v1411
        %vm1413 = vweird.f32 %v1407
        %vm1414 = vweird.f32 %v1408
        %vm1415 = vmor %vm1413, %vm1414
        %v1416 = vsel %vm1415, %v1408, %v1412
        %v1417 = vand.u32 2147483647, %v1407
        %vm1418 = vcmp.eq.f32.partialorder %v1417, 8.507059e+37
        %v1419 = vand.u32 %v1407, 2147483648
        %v1420 = vor.u32 1.1754944e-38, %v1419
        %v1421 = vsel %vm1418, %v1420, %v1416
        %v1422 = vmul.f32 1.0, %v1421
        %v1423 = vtanh.pop %v1362
        %v1424 = vmul.f32 %v1422, %v1315
        %1426 = vrot.lane.b32.xlu0 %v1423, 64
        %v1427 = vpop.permute.xlu0 %1426
        %v1429 = vmul.f32 %v1422, %v1427
        %1431 = vrot.lane.b32.xlu0 %v1429, 32
        %v1432 = vpop.permute.xlu0 %1431
        %v1434 = vadd.f32 %v1424, %v1432
        %v1435 = vtanh.pop %v1434
        %1437 = vrot.lane.b32.xlu0 %v1435, 64
        %v1438 = vpop.permute.xlu0 %1437
        %v1440 = vmul.f32 %v1422, %v1438
        %1442 = vrot.lane.b32.xlu0 %v1403, 32
        %v1443 = vpop.permute.xlu0 %1442
        %1445 = vst.msk [vmem:[#allocation3 + $0x4] sm:$0x1] %vm868, %v1443
        %1447 = vrot.lane.b32.xlu0 %v1440, 32
        %v1448 = vpop.permute.xlu0 %1447
        %1450 = vst.msk [vmem:[#allocation4 + $0x3] sm:$0x1] %vm868, %v1448
        %1451 = vrot.lane.b32.xlu0 %v1440, 64
        %v1452 = vpop.permute.xlu0 %1451
        %v1454 = vsel %vm680, %v1443, %v1452
        %1456 = vrot.lane.b32.xlu0 %v1397, 96
        %v1457 = vpop.permute.xlu0 %1456
        %v1459 = vsel %vm680, %v1457, %v1434
        %v1461 = vsel %vm742, %v1454, 0
        %1463 = vmatpush.msra.mxu0 0.0
        %1464 = vmatpush.msra.mxu0 0.0
        %1465 = vmatpush.msra.mxu0 0.0
        %1466 = vmatpush.msra.mxu0 0.0
        %1467 = vmatpush.msra.mxu0 0.0
        %1468 = vmatpush.msra.mxu0 0.0
        %1469 = vmatpush.msra.mxu0 0.0
        %1470 = vmatpush.msra.mxu0 0.0
        %1471 = vmatpush.msra.mxu0 %v740
        %1472 = vmatpush.msra.mxu0 %v738
        %1473 = vmatpush.msra.mxu0 %v736
        %1474 = vmatpush.msra.mxu0 %v734
        %1475 = vmatpush.msra.mxu0 %v732
        %1476 = vmatpush.msra.mxu0 %v730
        %1477 = vmatpush.msra.mxu0 %v728
        %1478 = vmatpush.msra.mxu0 %v726
        %1479 = vmatmul.f32.gmra.mxu0 %v1461
        %v1480 = vpop.f32.mrf.mxu0
        %v1481 = vadd.f32 0.0, %v1480
        %1482 = vdwg.mxu0
        %1483 = vmatpush.msra.mxu0 0.0
        %1484 = vmatpush.msra.mxu0 0.0
        %1485 = vmatpush.msra.mxu0 0.0
        %1486 = vmatpush.msra.mxu0 0.0
        %1487 = vmatpush.msra.mxu0 0.0
        %1488 = vmatpush.msra.mxu0 0.0
        %1489 = vmatpush.msra.mxu0 0.0
        %1490 = vmatpush.msra.mxu0 0.0
        %1491 = vmatpush.msra.mxu0 %v741
        %1492 = vmatpush.msra.mxu0 %v739
        %1493 = vmatpush.msra.mxu0 %v737
        %1494 = vmatpush.msra.mxu0 %v735
        %1495 = vmatpush.msra.mxu0 %v733
        %1496 = vmatpush.msra.mxu0 %v731
        %1497 = vmatpush.msra.mxu0 %v729
        %1498 = vmatpush.msra.mxu0 %v727
        %1499 = vmatmul.f32.gmra.mxu0 %v1461
        %v1500 = vpop.f32.mrf.mxu0
        %v1501 = vadd.f32 0.0, %v1500
        %1502 = vdwg.mxu0
        %v1503 = vld [vmem:[#allocation2 + $0x5] ss:$0 sm:$0xff]
        %v1504 = vadd.f32 %v1503, %v1481
        %v1505 = vld [vmem:[#allocation2 + $0xa] ss:$0 sm:$0xff]
        %v1506 = vadd.f32 %v1505, %v1501
        %v1507 = vxor.u32 %v1504, 2147483648
        %v1508 = vmul.f32 %v1507, 1.442695
        %v1509 = vpow.pop %v1508
        %v1510 = vadd.f32 %v1509, 1.0
        %v1511 = vrcp.pop %v1510
        %v1512 = vmul.f32 %v1510, %v1511
        %v1513 = vsub.f32 1.0, %v1512
        %v1514 = vmul.f32 %v1511, %v1513
        %v1515 = vadd.f32 %v1511, %v1514
        %vm1516 = vweird.f32 %v1510
        %vm1517 = vweird.f32 %v1511
        %vm1518 = vmor %vm1516, %vm1517
        %v1519 = vsel %vm1518, %v1511, %v1515
        %v1520 = vand.u32 2147483647, %v1510
        %vm1521 = vcmp.eq.f32.partialorder %v1520, 8.507059e+37
        %v1522 = vand.u32 %v1510, 2147483648
        %v1523 = vor.u32 1.1754944e-38, %v1522
        %v1524 = vsel %vm1521, %v1523, %v1519
        %v1525 = vmul.f32 1.0, %v1524
        %v1526 = vtanh.pop %v1504
        %1528 = vrot.lane.b32.xlu0 %v1459, 32
        %v1529 = vpop.permute.xlu0 %1528
        %v1531 = vmul.f32 %v1525, %v1529
        %1533 = vrot.lane.b32.xlu0 %v1526, 64
        %v1534 = vpop.permute.xlu0 %1533
        %v1536 = vmul.f32 %v1525, %v1534
        %1538 = vrot.lane.b32.xlu0 %v1536, 32
        %v1539 = vpop.permute.xlu0 %1538
        %v1541 = vadd.f32 %v1531, %v1539
        %v1542 = vtanh.pop %v1541
        %1544 = vrot.lane.b32.xlu0 %v1542, 64
        %v1545 = vpop.permute.xlu0 %1544
        %v1547 = vmul.f32 %v1525, %v1545
        %v1548 = vxor.u32 %v1506, 2147483648
        %v1549 = vmul.f32 %v1548, 1.442695
        %v1550 = vpow.pop %v1549
        %v1551 = vadd.f32 %v1550, 1.0
        %v1552 = vrcp.pop %v1551
        %v1553 = vmul.f32 %v1551, %v1552
        %v1554 = vsub.f32 1.0, %v1553
        %v1555 = vmul.f32 %v1552, %v1554
        %v1556 = vadd.f32 %v1552, %v1555
        %vm1557 = vweird.f32 %v1551
        %vm1558 = vweird.f32 %v1552
        %vm1559 = vmor %vm1557, %vm1558
        %v1560 = vsel %vm1559, %v1552, %v1556
        %v1561 = vand.u32 2147483647, %v1551
        %vm1562 = vcmp.eq.f32.partialorder %v1561, 8.507059e+37
        %v1563 = vand.u32 %v1551, 2147483648
        %v1564 = vor.u32 1.1754944e-38, %v1563
        %v1565 = vsel %vm1562, %v1564, %v1560
        %v1566 = vmul.f32 1.0, %v1565
        %v1567 = vtanh.pop %v1506
        %v1568 = vmul.f32 %v1566, %v1459
        %1570 = vrot.lane.b32.xlu0 %v1567, 64
        %v1571 = vpop.permute.xlu0 %1570
        %v1573 = vmul.f32 %v1566, %v1571
        %1575 = vrot.lane.b32.xlu0 %v1573, 32
        %v1576 = vpop.permute.xlu0 %1575
        %v1578 = vadd.f32 %v1568, %v1576
        %v1579 = vtanh.pop %v1578
        %1581 = vrot.lane.b32.xlu0 %v1579, 64
        %v1582 = vpop.permute.xlu0 %1581
        %v1584 = vmul.f32 %v1566, %v1582
        %1586 = vrot.lane.b32.xlu0 %v1547, 32
        %v1587 = vpop.permute.xlu0 %1586
        %1589 = vst.msk [vmem:[#allocation3 + $0x5] sm:$0x1] %vm868, %v1587
        %1591 = vrot.lane.b32.xlu0 %v1584, 32
        %v1592 = vpop.permute.xlu0 %1591
        %1594 = vst.msk [vmem:[#allocation4 + $0x2] sm:$0x1] %vm868, %v1592
        %1595 = vrot.lane.b32.xlu0 %v1584, 64
        %v1596 = vpop.permute.xlu0 %1595
        %v1598 = vsel %vm680, %v1587, %v1596
        %1600 = vrot.lane.b32.xlu0 %v1541, 96
        %v1601 = vpop.permute.xlu0 %1600
        %v1603 = vsel %vm680, %v1601, %v1578
        %v1605 = vsel %vm742, %v1598, 0
        %1607 = vmatpush.msra.mxu0 0.0
        %1608 = vmatpush.msra.mxu0 0.0
        %1609 = vmatpush.msra.mxu0 0.0
        %1610 = vmatpush.msra.mxu0 0.0
        %1611 = vmatpush.msra.mxu0 0.0
        %1612 = vmatpush.msra.mxu0 0.0
        %1613 = vmatpush.msra.mxu0 0.0
        %1614 = vmatpush.msra.mxu0 0.0
        %1615 = vmatpush.msra.mxu0 %v740
        %1616 = vmatpush.msra.mxu0 %v738
        %1617 = vmatpush.msra.mxu0 %v736
        %1618 = vmatpush.msra.mxu0 %v734
        %1619 = vmatpush.msra.mxu0 %v732
        %1620 = vmatpush.msra.mxu0 %v730
        %1621 = vmatpush.msra.mxu0 %v728
        %1622 = vmatpush.msra.mxu0 %v726
        %1623 = vmatmul.f32.gmra.mxu0 %v1605
        %v1624 = vpop.f32.mrf.mxu0
        %v1625 = vadd.f32 0.0, %v1624
        %1626 = vdwg.mxu0
        %1627 = vmatpush.msra.mxu0 0.0
        %1628 = vmatpush.msra.mxu0 0.0
        %1629 = vmatpush.msra.mxu0 0.0
        %1630 = vmatpush.msra.mxu0 0.0
        %1631 = vmatpush.msra.mxu0 0.0
        %1632 = vmatpush.msra.mxu0 0.0
        %1633 = vmatpush.msra.mxu0 0.0
        %1634 = vmatpush.msra.mxu0 0.0
        %1635 = vmatpush.msra.mxu0 %v741
        %1636 = vmatpush.msra.mxu0 %v739
        %1637 = vmatpush.msra.mxu0 %v737
        %1638 = vmatpush.msra.mxu0 %v735
        %1639 = vmatpush.msra.mxu0 %v733
        %1640 = vmatpush.msra.mxu0 %v731
        %1641 = vmatpush.msra.mxu0 %v729
        %1642 = vmatpush.msra.mxu0 %v727
        %1643 = vmatmul.f32.gmra.mxu0 %v1605
        %v1644 = vpop.f32.mrf.mxu0
        %v1645 = vadd.f32 0.0, %v1644
        %1646 = vdwg.mxu0
        %v1647 = vld [vmem:[#allocation2 + $0x6] ss:$0 sm:$0xff]
        %v1648 = vadd.f32 %v1647, %v1625
        %v1649 = vld [vmem:[#allocation2 + $0x9] ss:$0 sm:$0xff]
        %v1650 = vadd.f32 %v1649, %v1645
        %v1651 = vxor.u32 %v1648, 2147483648
        %v1652 = vmul.f32 %v1651, 1.442695
        %v1653 = vpow.pop %v1652
        %v1654 = vadd.f32 %v1653, 1.0
        %v1655 = vrcp.pop %v1654
        %v1656 = vmul.f32 %v1654, %v1655
        %v1657 = vsub.f32 1.0, %v1656
        %v1658 = vmul.f32 %v1655, %v1657
        %v1659 = vadd.f32 %v1655, %v1658
        %vm1660 = vweird.f32 %v1654
        %vm1661 = vweird.f32 %v1655
        %vm1662 = vmor %vm1660, %vm1661
        %v1663 = vsel %vm1662, %v1655, %v1659
        %v1664 = vand.u32 2147483647, %v1654
        %vm1665 = vcmp.eq.f32.partialorder %v1664, 8.507059e+37
        %v1666 = vand.u32 %v1654, 2147483648
        %v1667 = vor.u32 1.1754944e-38, %v1666
        %v1668 = vsel %vm1665, %v1667, %v1663
        %v1669 = vmul.f32 1.0, %v1668
        %v1670 = vtanh.pop %v1648
        %1672 = vrot.lane.b32.xlu0 %v1603, 32
        %v1673 = vpop.permute.xlu0 %1672
        %v1675 = vmul.f32 %v1669, %v1673
        %1677 = vrot.lane.b32.xlu0 %v1670, 64
        %v1678 = vpop.permute.xlu0 %1677
        %v1680 = vmul.f32 %v1669, %v1678
        %1682 = vrot.lane.b32.xlu0 %v1680, 32
        %v1683 = vpop.permute.xlu0 %1682
        %v1685 = vadd.f32 %v1675, %v1683
        %v1686 = vtanh.pop %v1685
        %1688 = vrot.lane.b32.xlu0 %v1686, 64
        %v1689 = vpop.permute.xlu0 %1688
        %v1691 = vmul.f32 %v1669, %v1689
        %v1692 = vxor.u32 %v1650, 2147483648
        %v1693 = vmul.f32 %v1692, 1.442695
        %v1694 = vpow.pop %v1693
        %v1695 = vadd.f32 %v1694, 1.0
        %v1696 = vrcp.pop %v1695
        %v1697 = vmul.f32 %v1695, %v1696
        %v1698 = vsub.f32 1.0, %v1697
        %v1699 = vmul.f32 %v1696, %v1698
        %v1700 = vadd.f32 %v1696, %v1699
        %vm1701 = vweird.f32 %v1695
        %vm1702 = vweird.f32 %v1696
        %vm1703 = vmor %vm1701, %vm1702
        %v1704 = vsel %vm1703, %v1696, %v1700
        %v1705 = vand.u32 2147483647, %v1695
        %vm1706 = vcmp.eq.f32.partialorder %v1705, 8.507059e+37
        %v1707 = vand.u32 %v1695, 2147483648
        %v1708 = vor.u32 1.1754944e-38, %v1707
        %v1709 = vsel %vm1706, %v1708, %v1704
        %v1710 = vmul.f32 1.0, %v1709
        %v1711 = vtanh.pop %v1650
        %v1712 = vmul.f32 %v1710, %v1603
        %1714 = vrot.lane.b32.xlu0 %v1711, 64
        %v1715 = vpop.permute.xlu0 %1714
        %v1717 = vmul.f32 %v1710, %v1715
        %1719 = vrot.lane.b32.xlu0 %v1717, 32
        %v1720 = vpop.permute.xlu0 %1719
        %v1722 = vadd.f32 %v1712, %v1720
        %v1723 = vtanh.pop %v1722
        %1725 = vrot.lane.b32.xlu0 %v1723, 64
        %v1726 = vpop.permute.xlu0 %1725
        %v1728 = vmul.f32 %v1710, %v1726
        %1730 = vrot.lane.b32.xlu0 %v1691, 32
        %v1731 = vpop.permute.xlu0 %1730
        %1733 = vst.msk [vmem:[#allocation3 + $0x6] sm:$0x1] %vm868, %v1731
        %1735 = vrot.lane.b32.xlu0 %v1728, 32
        %v1736 = vpop.permute.xlu0 %1735
        %1738 = vst.msk [vmem:[#allocation4 + $0x1] sm:$0x1] %vm868, %v1736
        %1739 = vrot.lane.b32.xlu0 %v1728, 64
        %v1740 = vpop.permute.xlu0 %1739
        %v1742 = vsel %vm680, %v1731, %v1740
        %1744 = vrot.lane.b32.xlu0 %v1685, 96
        %v1745 = vpop.permute.xlu0 %1744
        %v1747 = vsel %vm680, %v1745, %v1722
        %v1749 = vsel %vm742, %v1742, 0
        %1751 = vmatpush.msra.mxu0 0.0
        %1752 = vmatpush.msra.mxu0 0.0
        %1753 = vmatpush.msra.mxu0 0.0
        %1754 = vmatpush.msra.mxu0 0.0
        %1755 = vmatpush.msra.mxu0 0.0
        %1756 = vmatpush.msra.mxu0 0.0
        %1757 = vmatpush.msra.mxu0 0.0
        %1758 = vmatpush.msra.mxu0 0.0
        %1759 = vmatpush.msra.mxu0 %v740
        %1760 = vmatpush.msra.mxu0 %v738
        %1761 = vmatpush.msra.mxu0 %v736
        %1762 = vmatpush.msra.mxu0 %v734
        %1763 = vmatpush.msra.mxu0 %v732
        %1764 = vmatpush.msra.mxu0 %v730
        %1765 = vmatpush.msra.mxu0 %v728
        %1766 = vmatpush.msra.mxu0 %v726
        %1767 = vmatmul.f32.gmra.mxu0 %v1749
        %v1768 = vpop.f32.mrf.mxu0
        %v1769 = vadd.f32 0.0, %v1768
        %1770 = vdwg.mxu0
        %1771 = vmatpush.msra.mxu0 0.0
        %1772 = vmatpush.msra.mxu0 0.0
        %1773 = vmatpush.msra.mxu0 0.0
        %1774 = vmatpush.msra.mxu0 0.0
        %1775 = vmatpush.msra.mxu0 0.0
        %1776 = vmatpush.msra.mxu0 0.0
        %1777 = vmatpush.msra.mxu0 0.0
        %1778 = vmatpush.msra.mxu0 0.0
        %1779 = vmatpush.msra.mxu0 %v741
        %1780 = vmatpush.msra.mxu0 %v739
        %1781 = vmatpush.msra.mxu0 %v737
        %1782 = vmatpush.msra.mxu0 %v735
        %1783 = vmatpush.msra.mxu0 %v733
        %1784 = vmatpush.msra.mxu0 %v731
        %1785 = vmatpush.msra.mxu0 %v729
        %1786 = vmatpush.msra.mxu0 %v727
        %1787 = vmatmul.f32.gmra.mxu0 %v1749
        %v1788 = vpop.f32.mrf.mxu0
        %v1789 = vadd.f32 0.0, %v1788
        %1790 = vdwg.mxu0
        %v1791 = vld [vmem:[#allocation2 + $0x7] ss:$0 sm:$0xff]
        %v1792 = vadd.f32 %v1791, %v1769
        %v1793 = vld [vmem:[#allocation2 + $0x8] ss:$0 sm:$0xff]
        %v1794 = vadd.f32 %v1793, %v1789
        %v1795 = vxor.u32 %v1792, 2147483648
        %v1796 = vmul.f32 %v1795, 1.442695
        %v1797 = vpow.pop %v1796
        %v1798 = vadd.f32 %v1797, 1.0
        %v1799 = vrcp.pop %v1798
        %v1800 = vmul.f32 %v1798, %v1799
        %v1801 = vsub.f32 1.0, %v1800
        %v1802 = vmul.f32 %v1799, %v1801
        %v1803 = vadd.f32 %v1799, %v1802
        %vm1804 = vweird.f32 %v1798
        %vm1805 = vweird.f32 %v1799
        %vm1806 = vmor %vm1804, %vm1805
        %v1807 = vsel %vm1806, %v1799, %v1803
        %v1808 = vand.u32 2147483647, %v1798
        %vm1809 = vcmp.eq.f32.partialorder %v1808, 8.507059e+37
        %v1810 = vand.u32 %v1798, 2147483648
        %v1811 = vor.u32 1.1754944e-38, %v1810
        %v1812 = vsel %vm1809, %v1811, %v1807
        %v1813 = vmul.f32 1.0, %v1812
        %v1814 = vtanh.pop %v1792
        %1816 = vrot.lane.b32.xlu0 %v1747, 32
        %v1817 = vpop.permute.xlu0 %1816
        %v1819 = vmul.f32 %v1813, %v1817
        %1821 = vrot.lane.b32.xlu0 %v1814, 64
        %v1822 = vpop.permute.xlu0 %1821
        %v1824 = vmul.f32 %v1813, %v1822
        %1826 = vrot.lane.b32.xlu0 %v1824, 32
        %v1827 = vpop.permute.xlu0 %1826
        %v1829 = vadd.f32 %v1819, %v1827
        %v1830 = vtanh.pop %v1829
        %1832 = vrot.lane.b32.xlu0 %v1830, 64
        %v1833 = vpop.permute.xlu0 %1832
        %v1835 = vmul.f32 %v1813, %v1833
        %v1836 = vxor.u32 %v1794, 2147483648
        %v1837 = vmul.f32 %v1836, 1.442695
        %v1838 = vpow.pop %v1837
        %v1839 = vadd.f32 %v1838, 1.0
        %v1840 = vrcp.pop %v1839
        %v1841 = vmul.f32 %v1839, %v1840
        %v1842 = vsub.f32 1.0, %v1841
        %v1843 = vmul.f32 %v1840, %v1842
        %v1844 = vadd.f32 %v1840, %v1843
        %vm1845 = vweird.f32 %v1839
        %vm1846 = vweird.f32 %v1840
        %vm1847 = vmor %vm1845, %vm1846
        %v1848 = vsel %vm1847, %v1840, %v1844
        %v1849 = vand.u32 2147483647, %v1839
        %vm1850 = vcmp.eq.f32.partialorder %v1849, 8.507059e+37
        %v1851 = vand.u32 %v1839, 2147483648
        %v1852 = vor.u32 1.1754944e-38, %v1851
        %v1853 = vsel %vm1850, %v1852, %v1848
        %v1854 = vmul.f32 1.0, %v1853
        %v1855 = vtanh.pop %v1794
        %v1856 = vmul.f32 %v1854, %v1747
        %1858 = vrot.lane.b32.xlu0 %v1855, 64
        %v1859 = vpop.permute.xlu0 %1858
        %v1861 = vmul.f32 %v1854, %v1859
        %1863 = vrot.lane.b32.xlu0 %v1861, 32
        %v1864 = vpop.permute.xlu0 %1863
        %v1866 = vadd.f32 %v1856, %v1864
        %v1867 = vtanh.pop %v1866
        %1869 = vrot.lane.b32.xlu0 %v1867, 64
        %v1870 = vpop.permute.xlu0 %1869
        %v1872 = vmul.f32 %v1854, %v1870
        %1874 = vrot.lane.b32.xlu0 %v1835, 32
        %v1875 = vpop.permute.xlu0 %1874
        %1877 = vst.msk [vmem:[#allocation3 + $0x7] sm:$0x1] %vm868, %v1875
        %1879 = vrot.lane.b32.xlu0 %v1872, 32
        %v1880 = vpop.permute.xlu0 %1879
        %1882 = vst.msk [vmem:[#allocation4] sm:$0x1] %vm868, %v1880
        %v1883 = vld [vmem:[#allocation3] sm:$0xff]
        %v1884 = vld [vmem:[#allocation4] sm:$0xff]
        %1886 = vrot.lane.b32.xlu0 %v1884, 32
        %v1887 = vpop.permute.xlu0 %1886
        %v1889 = vsel %vm680, %v1883, %v1887
        %v1890 = vld [vmem:[%s6] sm:$0xff]
        %v1891 = vld [vmem:[%s6 + $0x8] sm:$0xff]
        %v1892 = vld [vmem:[%s6 + $0x10] sm:$0xff]
        %v1893 = vld [vmem:[%s6 + $0x18] sm:$0xff]
        %v1894 = vld [vmem:[%s6 + $0x20] sm:$0xff]
        %v1895 = vld [vmem:[%s6 + $0x28] sm:$0xff]
        %v1896 = vld [vmem:[%s6 + $0x30] sm:$0xff]
        %v1897 = vld [vmem:[%s6 + $0x38] sm:$0xff]
        %v1898 = vld [vmem:[%s6 + $0x40] sm:$0xff]
        %v1899 = vld [vmem:[%s6 + $0x48] sm:$0xff]
        %v1900 = vld [vmem:[%s6 + $0x50] sm:$0xff]
        %v1901 = vld [vmem:[%s6 + $0x58] sm:$0xff]
        %v1902 = vld [vmem:[%s6 + $0x60] sm:$0xff]
        %v1903 = vld [vmem:[%s6 + $0x68] sm:$0xff]
        %v1904 = vld [vmem:[%s6 + $0x70] sm:$0xff]
        %v1905 = vld [vmem:[%s6 + $0x78] sm:$0xff]
        %v1906 = vld [vmem:[%s8] sm:$0x3]
        %v1908 = vperm.slane %v1906, 0
        %v1909 = vperm.slane %v1906, 1
        %v1913 = vsel %vm742, %v1889, 0
        %1915 = vmatpush.msra.mxu0 0.0
        %1916 = vmatpush.msra.mxu0 0.0
        %1917 = vmatpush.msra.mxu0 0.0
        %1918 = vmatpush.msra.mxu0 0.0
        %1919 = vmatpush.msra.mxu0 0.0
        %1920 = vmatpush.msra.mxu0 0.0
        %1921 = vmatpush.msra.mxu0 0.0
        %1922 = vmatpush.msra.mxu0 0.0
        %1923 = vmatpush.msra.mxu0 %v1904
        %1924 = vmatpush.msra.mxu0 %v1902
        %1925 = vmatpush.msra.mxu0 %v1900
        %1926 = vmatpush.msra.mxu0 %v1898
        %1927 = vmatpush.msra.mxu0 %v1896
        %1928 = vmatpush.msra.mxu0 %v1894
        %1929 = vmatpush.msra.mxu0 %v1892
        %1930 = vmatpush.msra.mxu0 %v1890
        %1931 = vmatmul.f32.gmra.mxu0 %v1913
        %v1932 = vpop.f32.mrf.mxu0
        %v1933 = vadd.f32 %v1908, %v1932
        %1934 = vdwg.mxu0
        %1935 = vmatpush.msra.mxu0 0.0
        %1936 = vmatpush.msra.mxu0 0.0
        %1937 = vmatpush.msra.mxu0 0.0
        %1938 = vmatpush.msra.mxu0 0.0
        %1939 = vmatpush.msra.mxu0 0.0
        %1940 = vmatpush.msra.mxu0 0.0
        %1941 = vmatpush.msra.mxu0 0.0
        %1942 = vmatpush.msra.mxu0 0.0
        %1943 = vmatpush.msra.mxu0 %v1905
        %1944 = vmatpush.msra.mxu0 %v1903
        %1945 = vmatpush.msra.mxu0 %v1901
        %1946 = vmatpush.msra.mxu0 %v1899
        %1947 = vmatpush.msra.mxu0 %v1897
        %1948 = vmatpush.msra.mxu0 %v1895
        %1949 = vmatpush.msra.mxu0 %v1893
        %1950 = vmatpush.msra.mxu0 %v1891
        %1951 = vmatmul.f32.gmra.mxu0 %v1913
        %v1952 = vpop.f32.mrf.mxu0
        %v1953 = vadd.f32 %v1909, %v1952
        %1954 = vdwg.mxu0
        %1955 = vst [vmem:[#allocation2] sm:$0xff] %v1933
        %1956 = vst [vmem:[#allocation2 + $0x8] sm:$0xff] %v1953
        %v1957 = vld [vmem:[#allocation7] sm:$0xff]
        %v1958 = vld [vmem:[#allocation7 + $0x8] sm:$0xff]
        %v1959 = vld [vmem:[#allocation7 + $0x10] sm:$0xff]
        %v1960 = vld [vmem:[#allocation7 + $0x18] sm:$0xff]
        %v1961 = vld [vmem:[#allocation7 + $0x20] sm:$0xff]
        %v1962 = vld [vmem:[#allocation7 + $0x28] sm:$0xff]
        %v1963 = vld [vmem:[#allocation7 + $0x30] sm:$0xff]
        %v1964 = vld [vmem:[#allocation7 + $0x38] sm:$0xff]
        %v1965 = vld [vmem:[#allocation7 + $0x40] sm:$0xff]
        %v1966 = vld [vmem:[#allocation7 + $0x48] sm:$0xff]
        %v1967 = vld [vmem:[#allocation7 + $0x50] sm:$0xff]
        %v1968 = vld [vmem:[#allocation7 + $0x58] sm:$0xff]
        %v1969 = vld [vmem:[#allocation7 + $0x60] sm:$0xff]
        %v1970 = vld [vmem:[#allocation7 + $0x68] sm:$0xff]
        %v1971 = vld [vmem:[#allocation7 + $0x70] sm:$0xff]
        %v1972 = vld [vmem:[#allocation7 + $0x78] sm:$0xff]
        %1973 = vmatpush.msra.mxu0 0.0
        %1974 = vmatpush.msra.mxu0 0.0
        %1975 = vmatpush.msra.mxu0 0.0
        %1976 = vmatpush.msra.mxu0 0.0
        %1977 = vmatpush.msra.mxu0 0.0
        %1978 = vmatpush.msra.mxu0 0.0
        %1979 = vmatpush.msra.mxu0 0.0
        %1980 = vmatpush.msra.mxu0 0.0
        %1981 = vmatpush.msra.mxu0 %v1971
        %1982 = vmatpush.msra.mxu0 %v1969
        %1983 = vmatpush.msra.mxu0 %v1967
        %1984 = vmatpush.msra.mxu0 %v1965
        %1985 = vmatpush.msra.mxu0 %v1963
        %1986 = vmatpush.msra.mxu0 %v1961
        %1987 = vmatpush.msra.mxu0 %v1959
        %1988 = vmatpush.msra.mxu0 %v1957
        %1989 = vmatmul.f32.gmra.mxu0 %v744
        %v1990 = vpop.f32.mrf.mxu0
        %v1991 = vadd.f32 0.0, %v1990
        %1992 = vdwg.mxu0
        %1993 = vmatpush.msra.mxu0 0.0
        %1994 = vmatpush.msra.mxu0 0.0
        %1995 = vmatpush.msra.mxu0 0.0
        %1996 = vmatpush.msra.mxu0 0.0
        %1997 = vmatpush.msra.mxu0 0.0
        %1998 = vmatpush.msra.mxu0 0.0
        %1999 = vmatpush.msra.mxu0 0.0
        %2000 = vmatpush.msra.mxu0 0.0
        %2001 = vmatpush.msra.mxu0 %v1972
        %2002 = vmatpush.msra.mxu0 %v1970
        %2003 = vmatpush.msra.mxu0 %v1968
        %2004 = vmatpush.msra.mxu0 %v1966
        %2005 = vmatpush.msra.mxu0 %v1964
        %2006 = vmatpush.msra.mxu0 %v1962
        %2007 = vmatpush.msra.mxu0 %v1960
        %2008 = vmatpush.msra.mxu0 %v1958
        %2009 = vmatmul.f32.gmra.mxu0 %v744
        %v2010 = vpop.f32.mrf.mxu0
        %v2011 = vadd.f32 0.0, %v2010
        %2012 = vdwg.mxu0
        %v2013 = vld [vmem:[#allocation2] ss:$0 sm:$0xff]
        %v2014 = vadd.f32 %v2013, %v1991
        %v2015 = vld [vmem:[#allocation2 + $0xf] ss:$0 sm:$0xff]
        %v2016 = vadd.f32 %v2015, %v2011
        %v2017 = vxor.u32 %v2014, 2147483648
        %v2018 = vmul.f32 %v2017, 1.442695
        %v2019 = vpow.pop %v2018
        %v2020 = vadd.f32 %v2019, 1.0
        %v2021 = vrcp.pop %v2020
        %v2022 = vmul.f32 %v2020, %v2021
        %v2023 = vsub.f32 1.0, %v2022
        %v2024 = vmul.f32 %v2021, %v2023
        %v2025 = vadd.f32 %v2021, %v2024
        %vm2026 = vweird.f32 %v2020
        %vm2027 = vweird.f32 %v2021
        %vm2028 = vmor %vm2026, %vm2027
        %v2029 = vsel %vm2028, %v2021, %v2025
        %v2030 = vand.u32 2147483647, %v2020
        %vm2031 = vcmp.eq.f32.partialorder %v2030, 8.507059e+37
        %v2032 = vand.u32 %v2020, 2147483648
        %v2033 = vor.u32 1.1754944e-38, %v2032
        %v2034 = vsel %vm2031, %v2033, %v2029
        %v2035 = vmul.f32 1.0, %v2034
        %v2036 = vtanh.pop %v2014
        %v2037 = vmul.f32 %v2035, 0.0
        %2039 = vrot.lane.b32.xlu0 %v2036, 64
        %v2040 = vpop.permute.xlu0 %2039
        %v2042 = vmul.f32 %v2035, %v2040
        %2044 = vrot.lane.b32.xlu0 %v2042, 32
        %v2045 = vpop.permute.xlu0 %2044
        %v2047 = vadd.f32 %v2037, %v2045
        %v2048 = vtanh.pop %v2047
        %2050 = vrot.lane.b32.xlu0 %v2048, 64
        %v2051 = vpop.permute.xlu0 %2050
        %v2053 = vmul.f32 %v2035, %v2051
        %v2054 = vxor.u32 %v2016, 2147483648
        %v2055 = vmul.f32 %v2054, 1.442695
        %v2056 = vpow.pop %v2055
        %v2057 = vadd.f32 %v2056, 1.0
        %v2058 = vrcp.pop %v2057
        %v2059 = vmul.f32 %v2057, %v2058
        %v2060 = vsub.f32 1.0, %v2059
        %v2061 = vmul.f32 %v2058, %v2060
        %v2062 = vadd.f32 %v2058, %v2061
        %vm2063 = vweird.f32 %v2057
        %vm2064 = vweird.f32 %v2058
        %vm2065 = vmor %vm2063, %vm2064
        %v2066 = vsel %vm2065, %v2058, %v2062
        %v2067 = vand.u32 2147483647, %v2057
        %vm2068 = vcmp.eq.f32.partialorder %v2067, 8.507059e+37
        %v2069 = vand.u32 %v2057, 2147483648
        %v2070 = vor.u32 1.1754944e-38, %v2069
        %v2071 = vsel %vm2068, %v2070, %v2066
        %v2072 = vmul.f32 1.0, %v2071
        %v2073 = vtanh.pop %v2016
        %v2074 = vmul.f32 %v2072, 0.0
        %2076 = vrot.lane.b32.xlu0 %v2073, 64
        %v2077 = vpop.permute.xlu0 %2076
        %v2079 = vmul.f32 %v2072, %v2077
        %2081 = vrot.lane.b32.xlu0 %v2079, 32
        %v2082 = vpop.permute.xlu0 %2081
        %v2084 = vadd.f32 %v2074, %v2082
        %v2085 = vtanh.pop %v2084
        %2087 = vrot.lane.b32.xlu0 %v2085, 64
        %v2088 = vpop.permute.xlu0 %2087
        %v2090 = vmul.f32 %v2072, %v2088
        %2092 = vrot.lane.b32.xlu0 %v2053, 32
        %v2093 = vpop.permute.xlu0 %2092
        %2095 = vst.msk [vmem:[#allocation3] sm:$0x1] %vm868, %v2093
        %2097 = vrot.lane.b32.xlu0 %v2090, 32
        %v2098 = vpop.permute.xlu0 %2097
        %2100 = vst.msk [vmem:[#allocation4 + $0x7] sm:$0x1] %vm868, %v2098
        %2101 = vrot.lane.b32.xlu0 %v2090, 64
        %v2102 = vpop.permute.xlu0 %2101
        %v2104 = vsel %vm680, %v2093, %v2102
        %2106 = vrot.lane.b32.xlu0 %v2047, 96
        %v2107 = vpop.permute.xlu0 %2106
        %v2109 = vsel %vm680, %v2107, %v2084
        %v2111 = vsel %vm742, %v2104, 0
        %2113 = vmatpush.msra.mxu0 0.0
        %2114 = vmatpush.msra.mxu0 0.0
        %2115 = vmatpush.msra.mxu0 0.0
        %2116 = vmatpush.msra.mxu0 0.0
        %2117 = vmatpush.msra.mxu0 0.0
        %2118 = vmatpush.msra.mxu0 0.0
        %2119 = vmatpush.msra.mxu0 0.0
        %2120 = vmatpush.msra.mxu0 0.0
        %2121 = vmatpush.msra.mxu0 %v1971
        %2122 = vmatpush.msra.mxu0 %v1969
        %2123 = vmatpush.msra.mxu0 %v1967
        %2124 = vmatpush.msra.mxu0 %v1965
        %2125 = vmatpush.msra.mxu0 %v1963
        %2126 = vmatpush.msra.mxu0 %v1961
        %2127 = vmatpush.msra.mxu0 %v1959
        %2128 = vmatpush.msra.mxu0 %v1957
        %2129 = vmatmul.f32.gmra.mxu0 %v2111
        %v2130 = vpop.f32.mrf.mxu0
        %v2131 = vadd.f32 0.0, %v2130
        %2132 = vdwg.mxu0
        %2133 = vmatpush.msra.mxu0 0.0
        %2134 = vmatpush.msra.mxu0 0.0
        %2135 = vmatpush.msra.mxu0 0.0
        %2136 = vmatpush.msra.mxu0 0.0
        %2137 = vmatpush.msra.mxu0 0.0
        %2138 = vmatpush.msra.mxu0 0.0
        %2139 = vmatpush.msra.mxu0 0.0
        %2140 = vmatpush.msra.mxu0 0.0
        %2141 = vmatpush.msra.mxu0 %v1972
        %2142 = vmatpush.msra.mxu0 %v1970
        %2143 = vmatpush.msra.mxu0 %v1968
        %2144 = vmatpush.msra.mxu0 %v1966
        %2145 = vmatpush.msra.mxu0 %v1964
        %2146 = vmatpush.msra.mxu0 %v1962
        %2147 = vmatpush.msra.mxu0 %v1960
        %2148 = vmatpush.msra.mxu0 %v1958
        %2149 = vmatmul.f32.gmra.mxu0 %v2111
        %v2150 = vpop.f32.mrf.mxu0
        %v2151 = vadd.f32 0.0, %v2150
        %2152 = vdwg.mxu0
        %v2153 = vld [vmem:[#allocation2 + $0x1] ss:$0 sm:$0xff]
        %v2154 = vadd.f32 %v2153, %v2131
        %v2155 = vld [vmem:[#allocation2 + $0xe] ss:$0 sm:$0xff]
        %v2156 = vadd.f32 %v2155, %v2151
        %v2157 = vxor.u32 %v2154, 2147483648
        %v2158 = vmul.f32 %v2157, 1.442695
        %v2159 = vpow.pop %v2158
        %v2160 = vadd.f32 %v2159, 1.0
        %v2161 = vrcp.pop %v2160
        %v2162 = vmul.f32 %v2160, %v2161
        %v2163 = vsub.f32 1.0, %v2162
        %v2164 = vmul.f32 %v2161, %v2163
        %v2165 = vadd.f32 %v2161, %v2164
        %vm2166 = vweird.f32 %v2160
        %vm2167 = vweird.f32 %v2161
        %vm2168 = vmor %vm2166, %vm2167
        %v2169 = vsel %vm2168, %v2161, %v2165
        %v2170 = vand.u32 2147483647, %v2160
        %vm2171 = vcmp.eq.f32.partialorder %v2170, 8.507059e+37
        %v2172 = vand.u32 %v2160, 2147483648
        %v2173 = vor.u32 1.1754944e-38, %v2172
        %v2174 = vsel %vm2171, %v2173, %v2169
        %v2175 = vmul.f32 1.0, %v2174
        %v2176 = vtanh.pop %v2154
        %2178 = vrot.lane.b32.xlu0 %v2109, 32
        %v2179 = vpop.permute.xlu0 %2178
        %v2181 = vmul.f32 %v2175, %v2179
        %2183 = vrot.lane.b32.xlu0 %v2176, 64
        %v2184 = vpop.permute.xlu0 %2183
        %v2186 = vmul.f32 %v2175, %v2184
        %2188 = vrot.lane.b32.xlu0 %v2186, 32
        %v2189 = vpop.permute.xlu0 %2188
        %v2191 = vadd.f32 %v2181, %v2189
        %v2192 = vtanh.pop %v2191
        %2194 = vrot.lane.b32.xlu0 %v2192, 64
        %v2195 = vpop.permute.xlu0 %2194
        %v2197 = vmul.f32 %v2175, %v2195
        %v2198 = vxor.u32 %v2156, 2147483648
        %v2199 = vmul.f32 %v2198, 1.442695
        %v2200 = vpow.pop %v2199
        %v2201 = vadd.f32 %v2200, 1.0
        %v2202 = vrcp.pop %v2201
        %v2203 = vmul.f32 %v2201, %v2202
        %v2204 = vsub.f32 1.0, %v2203
        %v2205 = vmul.f32 %v2202, %v2204
        %v2206 = vadd.f32 %v2202, %v2205
        %vm2207 = vweird.f32 %v2201
        %vm2208 = vweird.f32 %v2202
        %vm2209 = vmor %vm2207, %vm2208
        %v2210 = vsel %vm2209, %v2202, %v2206
        %v2211 = vand.u32 2147483647, %v2201
        %vm2212 = vcmp.eq.f32.partialorder %v2211, 8.507059e+37
        %v2213 = vand.u32 %v2201, 2147483648
        %v2214 = vor.u32 1.1754944e-38, %v2213
        %v2215 = vsel %vm2212, %v2214, %v2210
        %v2216 = vmul.f32 1.0, %v2215
        %v2217 = vtanh.pop %v2156
        %v2218 = vmul.f32 %v2216, %v2109
        %2220 = vrot.lane.b32.xlu0 %v2217, 64
        %v2221 = vpop.permute.xlu0 %2220
        %v2223 = vmul.f32 %v2216, %v2221
        %2225 = vrot.lane.b32.xlu0 %v2223, 32
        %v2226 = vpop.permute.xlu0 %2225
        %v2228 = vadd.f32 %v2218, %v2226
        %v2229 = vtanh.pop %v2228
        %2231 = vrot.lane.b32.xlu0 %v2229, 64
        %v2232 = vpop.permute.xlu0 %2231
        %v2234 = vmul.f32 %v2216, %v2232
        %2236 = vrot.lane.b32.xlu0 %v2197, 32
        %v2237 = vpop.permute.xlu0 %2236
        %2239 = vst.msk [vmem:[#allocation3 + $0x1] sm:$0x1] %vm868, %v2237
        %2241 = vrot.lane.b32.xlu0 %v2234, 32
        %v2242 = vpop.permute.xlu0 %2241
        %2244 = vst.msk [vmem:[#allocation4 + $0x6] sm:$0x1] %vm868, %v2242
        %2245 = vrot.lane.b32.xlu0 %v2234, 64
        %v2246 = vpop.permute.xlu0 %2245
        %v2248 = vsel %vm680, %v2237, %v2246
        %2250 = vrot.lane.b32.xlu0 %v2191, 96
        %v2251 = vpop.permute.xlu0 %2250
        %v2253 = vsel %vm680, %v2251, %v2228
        %v2255 = vsel %vm742, %v2248, 0
        %2257 = vmatpush.msra.mxu0 0.0
        %2258 = vmatpush.msra.mxu0 0.0
        %2259 = vmatpush.msra.mxu0 0.0
        %2260 = vmatpush.msra.mxu0 0.0
        %2261 = vmatpush.msra.mxu0 0.0
        %2262 = vmatpush.msra.mxu0 0.0
        %2263 = vmatpush.msra.mxu0 0.0
        %2264 = vmatpush.msra.mxu0 0.0
        %2265 = vmatpush.msra.mxu0 %v1971
        %2266 = vmatpush.msra.mxu0 %v1969
        %2267 = vmatpush.msra.mxu0 %v1967
        %2268 = vmatpush.msra.mxu0 %v1965
        %2269 = vmatpush.msra.mxu0 %v1963
        %2270 = vmatpush.msra.mxu0 %v1961
        %2271 = vmatpush.msra.mxu0 %v1959
        %2272 = vmatpush.msra.mxu0 %v1957
        %2273 = vmatmul.f32.gmra.mxu0 %v2255
        %v2274 = vpop.f32.mrf.mxu0
        %v2275 = vadd.f32 0.0, %v2274
        %2276 = vdwg.mxu0
        %2277 = vmatpush.msra.mxu0 0.0
        %2278 = vmatpush.msra.mxu0 0.0
        %2279 = vmatpush.msra.mxu0 0.0
        %2280 = vmatpush.msra.mxu0 0.0
        %2281 = vmatpush.msra.mxu0 0.0
        %2282 = vmatpush.msra.mxu0 0.0
        %2283 = vmatpush.msra.mxu0 0.0
        %2284 = vmatpush.msra.mxu0 0.0
        %2285 = vmatpush.msra.mxu0 %v1972
        %2286 = vmatpush.msra.mxu0 %v1970
        %2287 = vmatpush.msra.mxu0 %v1968
        %2288 = vmatpush.msra.mxu0 %v1966
        %2289 = vmatpush.msra.mxu0 %v1964
        %2290 = vmatpush.msra.mxu0 %v1962
        %2291 = vmatpush.msra.mxu0 %v1960
        %2292 = vmatpush.msra.mxu0 %v1958
        %2293 = vmatmul.f32.gmra.mxu0 %v2255
        %v2294 = vpop.f32.mrf.mxu0
        %v2295 = vadd.f32 0.0, %v2294
        %2296 = vdwg.mxu0
        %v2297 = vld [vmem:[#allocation2 + $0x2] ss:$0 sm:$0xff]
        %v2298 = vadd.f32 %v2297, %v2275
        %v2299 = vld [vmem:[#allocation2 + $0xd] ss:$0 sm:$0xff]
        %v2300 = vadd.f32 %v2299, %v2295
        %v2301 = vxor.u32 %v2298, 2147483648
        %v2302 = vmul.f32 %v2301, 1.442695
        %v2303 = vpow.pop %v2302
        %v2304 = vadd.f32 %v2303, 1.0
        %v2305 = vrcp.pop %v2304
        %v2306 = vmul.f32 %v2304, %v2305
        %v2307 = vsub.f32 1.0, %v2306
        %v2308 = vmul.f32 %v2305, %v2307
        %v2309 = vadd.f32 %v2305, %v2308
        %vm2310 = vweird.f32 %v2304
        %vm2311 = vweird.f32 %v2305
        %vm2312 = vmor %vm2310, %vm2311
        %v2313 = vsel %vm2312, %v2305, %v2309
        %v2314 = vand.u32 2147483647, %v2304
        %vm2315 = vcmp.eq.f32.partialorder %v2314, 8.507059e+37
        %v2316 = vand.u32 %v2304, 2147483648
        %v2317 = vor.u32 1.1754944e-38, %v2316
        %v2318 = vsel %vm2315, %v2317, %v2313
        %v2319 = vmul.f32 1.0, %v2318
        %v2320 = vtanh.pop %v2298
        %2322 = vrot.lane.b32.xlu0 %v2253, 32
        %v2323 = vpop.permute.xlu0 %2322
        %v2325 = vmul.f32 %v2319, %v2323
        %2327 = vrot.lane.b32.xlu0 %v2320, 64
        %v2328 = vpop.permute.xlu0 %2327
        %v2330 = vmul.f32 %v2319, %v2328
        %2332 = vrot.lane.b32.xlu0 %v2330, 32
        %v2333 = vpop.permute.xlu0 %2332
        %v2335 = vadd.f32 %v2325, %v2333
        %v2336 = vtanh.pop %v2335
        %2338 = vrot.lane.b32.xlu0 %v2336, 64
        %v2339 = vpop.permute.xlu0 %2338
        %v2341 = vmul.f32 %v2319, %v2339
        %v2342 = vxor.u32 %v2300, 2147483648
        %v2343 = vmul.f32 %v2342, 1.442695
        %v2344 = vpow.pop %v2343
        %v2345 = vadd.f32 %v2344, 1.0
        %v2346 = vrcp.pop %v2345
        %v2347 = vmul.f32 %v2345, %v2346
        %v2348 = vsub.f32 1.0, %v2347
        %v2349 = vmul.f32 %v2346, %v2348
        %v2350 = vadd.f32 %v2346, %v2349
        %vm2351 = vweird.f32 %v2345
        %vm2352 = vweird.f32 %v2346
        %vm2353 = vmor %vm2351, %vm2352
        %v2354 = vsel %vm2353, %v2346, %v2350
        %v2355 = vand.u32 2147483647, %v2345
        %vm2356 = vcmp.eq.f32.partialorder %v2355, 8.507059e+37
        %v2357 = vand.u32 %v2345, 2147483648
        %v2358 = vor.u32 1.1754944e-38, %v2357
        %v2359 = vsel %vm2356, %v2358, %v2354
        %v2360 = vmul.f32 1.0, %v2359
        %v2361 = vtanh.pop %v2300
        %v2362 = vmul.f32 %v2360, %v2253
        %2364 = vrot.lane.b32.xlu0 %v2361, 64
        %v2365 = vpop.permute.xlu0 %2364
        %v2367 = vmul.f32 %v2360, %v2365
        %2369 = vrot.lane.b32.xlu0 %v2367, 32
        %v2370 = vpop.permute.xlu0 %2369
        %v2372 = vadd.f32 %v2362, %v2370
        %v2373 = vtanh.pop %v2372
        %2375 = vrot.lane.b32.xlu0 %v2373, 64
        %v2376 = vpop.permute.xlu0 %2375
        %v2378 = vmul.f32 %v2360, %v2376
        %2380 = vrot.lane.b32.xlu0 %v2341, 32
        %v2381 = vpop.permute.xlu0 %2380
        %2383 = vst.msk [vmem:[#allocation3 + $0x2] sm:$0x1] %vm868, %v2381
        %2385 = vrot.lane.b32.xlu0 %v2378, 32
        %v2386 = vpop.permute.xlu0 %2385
        %2388 = vst.msk [vmem:[#allocation4 + $0x5] sm:$0x1] %vm868, %v2386
        %2389 = vrot.lane.b32.xlu0 %v2378, 64
        %v2390 = vpop.permute.xlu0 %2389
        %v2392 = vsel %vm680, %v2381, %v2390
        %2394 = vrot.lane.b32.xlu0 %v2335, 96
        %v2395 = vpop.permute.xlu0 %2394
        %v2397 = vsel %vm680, %v2395, %v2372
        %v2399 = vsel %vm742, %v2392, 0
        %2401 = vmatpush.msra.mxu0 0.0
        %2402 = vmatpush.msra.mxu0 0.0
        %2403 = vmatpush.msra.mxu0 0.0
        %2404 = vmatpush.msra.mxu0 0.0
        %2405 = vmatpush.msra.mxu0 0.0
        %2406 = vmatpush.msra.mxu0 0.0
        %2407 = vmatpush.msra.mxu0 0.0
        %2408 = vmatpush.msra.mxu0 0.0
        %2409 = vmatpush.msra.mxu0 %v1971
        %2410 = vmatpush.msra.mxu0 %v1969
        %2411 = vmatpush.msra.mxu0 %v1967
        %2412 = vmatpush.msra.mxu0 %v1965
        %2413 = vmatpush.msra.mxu0 %v1963
        %2414 = vmatpush.msra.mxu0 %v1961
        %2415 = vmatpush.msra.mxu0 %v1959
        %2416 = vmatpush.msra.mxu0 %v1957
        %2417 = vmatmul.f32.gmra.mxu0 %v2399
        %v2418 = vpop.f32.mrf.mxu0
        %v2419 = vadd.f32 0.0, %v2418
        %2420 = vdwg.mxu0
        %2421 = vmatpush.msra.mxu0 0.0
        %2422 = vmatpush.msra.mxu0 0.0
        %2423 = vmatpush.msra.mxu0 0.0
        %2424 = vmatpush.msra.mxu0 0.0
        %2425 = vmatpush.msra.mxu0 0.0
        %2426 = vmatpush.msra.mxu0 0.0
        %2427 = vmatpush.msra.mxu0 0.0
        %2428 = vmatpush.msra.mxu0 0.0
        %2429 = vmatpush.msra.mxu0 %v1972
        %2430 = vmatpush.msra.mxu0 %v1970
        %2431 = vmatpush.msra.mxu0 %v1968
        %2432 = vmatpush.msra.mxu0 %v1966
        %2433 = vmatpush.msra.mxu0 %v1964
        %2434 = vmatpush.msra.mxu0 %v1962
        %2435 = vmatpush.msra.mxu0 %v1960
        %2436 = vmatpush.msra.mxu0 %v1958
        %2437 = vmatmul.f32.gmra.mxu0 %v2399
        %v2438 = vpop.f32.mrf.mxu0
        %v2439 = vadd.f32 0.0, %v2438
        %2440 = vdwg.mxu0
        %v2441 = vld [vmem:[#allocation2 + $0x3] ss:$0 sm:$0xff]
        %v2442 = vadd.f32 %v2441, %v2419
        %v2443 = vld [vmem:[#allocation2 + $0xc] ss:$0 sm:$0xff]
        %v2444 = vadd.f32 %v2443, %v2439
        %v2445 = vxor.u32 %v2442, 2147483648
        %v2446 = vmul.f32 %v2445, 1.442695
        %v2447 = vpow.pop %v2446
        %v2448 = vadd.f32 %v2447, 1.0
        %v2449 = vrcp.pop %v2448
        %v2450 = vmul.f32 %v2448, %v2449
        %v2451 = vsub.f32 1.0, %v2450
        %v2452 = vmul.f32 %v2449, %v2451
        %v2453 = vadd.f32 %v2449, %v2452
        %vm2454 = vweird.f32 %v2448
        %vm2455 = vweird.f32 %v2449
        %vm2456 = vmor %vm2454, %vm2455
        %v2457 = vsel %vm2456, %v2449, %v2453
        %v2458 = vand.u32 2147483647, %v2448
        %vm2459 = vcmp.eq.f32.partialorder %v2458, 8.507059e+37
        %v2460 = vand.u32 %v2448, 2147483648
        %v2461 = vor.u32 1.1754944e-38, %v2460
        %v2462 = vsel %vm2459, %v2461, %v2457
        %v2463 = vmul.f32 1.0, %v2462
        %v2464 = vtanh.pop %v2442
        %2466 = vrot.lane.b32.xlu0 %v2397, 32
        %v2467 = vpop.permute.xlu0 %2466
        %v2469 = vmul.f32 %v2463, %v2467
        %2471 = vrot.lane.b32.xlu0 %v2464, 64
        %v2472 = vpop.permute.xlu0 %2471
        %v2474 = vmul.f32 %v2463, %v2472
        %2476 = vrot.lane.b32.xlu0 %v2474, 32
        %v2477 = vpop.permute.xlu0 %2476
        %v2479 = vadd.f32 %v2469, %v2477
        %v2480 = vtanh.pop %v2479
        %2482 = vrot.lane.b32.xlu0 %v2480, 64
        %v2483 = vpop.permute.xlu0 %2482
        %v2485 = vmul.f32 %v2463, %v2483
        %v2486 = vxor.u32 %v2444, 2147483648
        %v2487 = vmul.f32 %v2486, 1.442695
        %v2488 = vpow.pop %v2487
        %v2489 = vadd.f32 %v2488, 1.0
        %v2490 = vrcp.pop %v2489
        %v2491 = vmul.f32 %v2489, %v2490
        %v2492 = vsub.f32 1.0, %v2491
        %v2493 = vmul.f32 %v2490, %v2492
        %v2494 = vadd.f32 %v2490, %v2493
        %vm2495 = vweird.f32 %v2489
        %vm2496 = vweird.f32 %v2490
        %vm2497 = vmor %vm2495, %vm2496
        %v2498 = vsel %vm2497, %v2490, %v2494
        %v2499 = vand.u32 2147483647, %v2489
        %vm2500 = vcmp.eq.f32.partialorder %v2499, 8.507059e+37
        %v2501 = vand.u32 %v2489, 2147483648
        %v2502 = vor.u32 1.1754944e-38, %v2501
        %v2503 = vsel %vm2500, %v2502, %v2498
        %v2504 = vmul.f32 1.0, %v2503
        %v2505 = vtanh.pop %v2444
        %v2506 = vmul.f32 %v2504, %v2397
        %2508 = vrot.lane.b32.xlu0 %v2505, 64
        %v2509 = vpop.permute.xlu0 %2508
        %v2511 = vmul.f32 %v2504, %v2509
        %2513 = vrot.lane.b32.xlu0 %v2511, 32
        %v2514 = vpop.permute.xlu0 %2513
        %v2516 = vadd.f32 %v2506, %v2514
        %v2517 = vtanh.pop %v2516
        %2519 = vrot.lane.b32.xlu0 %v2517, 64
        %v2520 = vpop.permute.xlu0 %2519
        %v2522 = vmul.f32 %v2504, %v2520
        %2524 = vrot.lane.b32.xlu0 %v2485, 32
        %v2525 = vpop.permute.xlu0 %2524
        %2527 = vst.msk [vmem:[#allocation3 + $0x3] sm:$0x1] %vm868, %v2525
        %2529 = vrot.lane.b32.xlu0 %v2522, 32
        %v2530 = vpop.permute.xlu0 %2529
        %2532 = vst.msk [vmem:[#allocation4 + $0x4] sm:$0x1] %vm868, %v2530
        %2533 = vrot.lane.b32.xlu0 %v2522, 64
        %v2534 = vpop.permute.xlu0 %2533
        %v2536 = vsel %vm680, %v2525, %v2534
        %2538 = vrot.lane.b32.xlu0 %v2479, 96
        %v2539 = vpop.permute.xlu0 %2538
        %v2541 = vsel %vm680, %v2539, %v2516
        %v2543 = vsel %vm742, %v2536, 0
        %2545 = vmatpush.msra.mxu0 0.0
        %2546 = vmatpush.msra.mxu0 0.0
        %2547 = vmatpush.msra.mxu0 0.0
        %2548 = vmatpush.msra.mxu0 0.0
        %2549 = vmatpush.msra.mxu0 0.0
        %2550 = vmatpush.msra.mxu0 0.0
        %2551 = vmatpush.msra.mxu0 0.0
        %2552 = vmatpush.msra.mxu0 0.0
        %2553 = vmatpush.msra.mxu0 %v1971
        %2554 = vmatpush.msra.mxu0 %v1969
        %2555 = vmatpush.msra.mxu0 %v1967
        %2556 = vmatpush.msra.mxu0 %v1965
        %2557 = vmatpush.msra.mxu0 %v1963
        %2558 = vmatpush.msra.mxu0 %v1961
        %2559 = vmatpush.msra.mxu0 %v1959
        %2560 = vmatpush.msra.mxu0 %v1957
        %2561 = vmatmul.f32.gmra.mxu0 %v2543
        %v2562 = vpop.f32.mrf.mxu0
        %v2563 = vadd.f32 0.0, %v2562
        %2564 = vdwg.mxu0
        %2565 = vmatpush.msra.mxu0 0.0
        %2566 = vmatpush.msra.mxu0 0.0
        %2567 = vmatpush.msra.mxu0 0.0
        %2568 = vmatpush.msra.mxu0 0.0
        %2569 = vmatpush.msra.mxu0 0.0
        %2570 = vmatpush.msra.mxu0 0.0
        %2571 = vmatpush.msra.mxu0 0.0
        %2572 = vmatpush.msra.mxu0 0.0
        %2573 = vmatpush.msra.mxu0 %v1972
        %2574 = vmatpush.msra.mxu0 %v1970
        %2575 = vmatpush.msra.mxu0 %v1968
        %2576 = vmatpush.msra.mxu0 %v1966
        %2577 = vmatpush.msra.mxu0 %v1964
        %2578 = vmatpush.msra.mxu0 %v1962
        %2579 = vmatpush.msra.mxu0 %v1960
        %2580 = vmatpush.msra.mxu0 %v1958
        %2581 = vmatmul.f32.gmra.mxu0 %v2543
        %v2582 = vpop.f32.mrf.mxu0
        %v2583 = vadd.f32 0.0, %v2582
        %2584 = vdwg.mxu0
        %v2585 = vld [vmem:[#allocation2 + $0x4] ss:$0 sm:$0xff]
        %v2586 = vadd.f32 %v2585, %v2563
        %v2587 = vld [vmem:[#allocation2 + $0xb] ss:$0 sm:$0xff]
        %v2588 = vadd.f32 %v2587, %v2583
        %v2589 = vxor.u32 %v2586, 2147483648
        %v2590 = vmul.f32 %v2589, 1.442695
        %v2591 = vpow.pop %v2590
        %v2592 = vadd.f32 %v2591, 1.0
        %v2593 = vrcp.pop %v2592
        %v2594 = vmul.f32 %v2592, %v2593
        %v2595 = vsub.f32 1.0, %v2594
        %v2596 = vmul.f32 %v2593, %v2595
        %v2597 = vadd.f32 %v2593, %v2596
        %vm2598 = vweird.f32 %v2592
        %vm2599 = vweird.f32 %v2593
        %vm2600 = vmor %vm2598, %vm2599
        %v2601 = vsel %vm2600, %v2593, %v2597
        %v2602 = vand.u32 2147483647, %v2592
        %vm2603 = vcmp.eq.f32.partialorder %v2602, 8.507059e+37
        %v2604 = vand.u32 %v2592, 2147483648
        %v2605 = vor.u32 1.1754944e-38, %v2604
        %v2606 = vsel %vm2603, %v2605, %v2601
        %v2607 = vmul.f32 1.0, %v2606
        %v2608 = vtanh.pop %v2586
        %2610 = vrot.lane.b32.xlu0 %v2541, 32
        %v2611 = vpop.permute.xlu0 %2610
        %v2613 = vmul.f32 %v2607, %v2611
        %2615 = vrot.lane.b32.xlu0 %v2608, 64
        %v2616 = vpop.permute.xlu0 %2615
        %v2618 = vmul.f32 %v2607, %v2616
        %2620 = vrot.lane.b32.xlu0 %v2618, 32
        %v2621 = vpop.permute.xlu0 %2620
        %v2623 = vadd.f32 %v2613, %v2621
        %v2624 = vtanh.pop %v2623
        %2626 = vrot.lane.b32.xlu0 %v2624, 64
        %v2627 = vpop.permute.xlu0 %2626
        %v2629 = vmul.f32 %v2607, %v2627
        %v2630 = vxor.u32 %v2588, 2147483648
        %v2631 = vmul.f32 %v2630, 1.442695
        %v2632 = vpow.pop %v2631
        %v2633 = vadd.f32 %v2632, 1.0
        %v2634 = vrcp.pop %v2633
        %v2635 = vmul.f32 %v2633, %v2634
        %v2636 = vsub.f32 1.0, %v2635
        %v2637 = vmul.f32 %v2634, %v2636
        %v2638 = vadd.f32 %v2634, %v2637
        %vm2639 = vweird.f32 %v2633
        %vm2640 = vweird.f32 %v2634
        %vm2641 = vmor %vm2639, %vm2640
        %v2642 = vsel %vm2641, %v2634, %v2638
        %v2643 = vand.u32 2147483647, %v2633
        %vm2644 = vcmp.eq.f32.partialorder %v2643, 8.507059e+37
        %v2645 = vand.u32 %v2633, 2147483648
        %v2646 = vor.u32 1.1754944e-38, %v2645
        %v2647 = vsel %vm2644, %v2646, %v2642
        %v2648 = vmul.f32 1.0, %v2647
        %v2649 = vtanh.pop %v2588
        %v2650 = vmul.f32 %v2648, %v2541
        %2652 = vrot.lane.b32.xlu0 %v2649, 64
        %v2653 = vpop.permute.xlu0 %2652
        %v2655 = vmul.f32 %v2648, %v2653
        %2657 = vrot.lane.b32.xlu0 %v2655, 32
        %v2658 = vpop.permute.xlu0 %2657
        %v2660 = vadd.f32 %v2650, %v2658
        %v2661 = vtanh.pop %v2660
        %2663 = vrot.lane.b32.xlu0 %v2661, 64
        %v2664 = vpop.permute.xlu0 %2663
        %v2666 = vmul.f32 %v2648, %v2664
        %2668 = vrot.lane.b32.xlu0 %v2629, 32
        %v2669 = vpop.permute.xlu0 %2668
        %2671 = vst.msk [vmem:[#allocation3 + $0x4] sm:$0x1] %vm868, %v2669
        %2673 = vrot.lane.b32.xlu0 %v2666, 32
        %v2674 = vpop.permute.xlu0 %2673
        %2676 = vst.msk [vmem:[#allocation4 + $0x3] sm:$0x1] %vm868, %v2674
        %2677 = vrot.lane.b32.xlu0 %v2666, 64
        %v2678 = vpop.permute.xlu0 %2677
        %v2680 = vsel %vm680, %v2669, %v2678
        %2682 = vrot.lane.b32.xlu0 %v2623, 96
        %v2683 = vpop.permute.xlu0 %2682
        %v2685 = vsel %vm680, %v2683, %v2660
        %v2687 = vsel %vm742, %v2680, 0
        %2689 = vmatpush.msra.mxu0 0.0
        %2690 = vmatpush.msra.mxu0 0.0
        %2691 = vmatpush.msra.mxu0 0.0
        %2692 = vmatpush.msra.mxu0 0.0
        %2693 = vmatpush.msra.mxu0 0.0
        %2694 = vmatpush.msra.mxu0 0.0
        %2695 = vmatpush.msra.mxu0 0.0
        %2696 = vmatpush.msra.mxu0 0.0
        %2697 = vmatpush.msra.mxu0 %v1971
        %2698 = vmatpush.msra.mxu0 %v1969
        %2699 = vmatpush.msra.mxu0 %v1967
        %2700 = vmatpush.msra.mxu0 %v1965
        %2701 = vmatpush.msra.mxu0 %v1963
        %2702 = vmatpush.msra.mxu0 %v1961
        %2703 = vmatpush.msra.mxu0 %v1959
        %2704 = vmatpush.msra.mxu0 %v1957
        %2705 = vmatmul.f32.gmra.mxu0 %v2687
        %v2706 = vpop.f32.mrf.mxu0
        %v2707 = vadd.f32 0.0, %v2706
        %2708 = vdwg.mxu0
        %2709 = vmatpush.msra.mxu0 0.0
        %2710 = vmatpush.msra.mxu0 0.0
        %2711 = vmatpush.msra.mxu0 0.0
        %2712 = vmatpush.msra.mxu0 0.0
        %2713 = vmatpush.msra.mxu0 0.0
        %2714 = vmatpush.msra.mxu0 0.0
        %2715 = vmatpush.msra.mxu0 0.0
        %2716 = vmatpush.msra.mxu0 0.0
        %2717 = vmatpush.msra.mxu0 %v1972
        %2718 = vmatpush.msra.mxu0 %v1970
        %2719 = vmatpush.msra.mxu0 %v1968
        %2720 = vmatpush.msra.mxu0 %v1966
        %2721 = vmatpush.msra.mxu0 %v1964
        %2722 = vmatpush.msra.mxu0 %v1962
        %2723 = vmatpush.msra.mxu0 %v1960
        %2724 = vmatpush.msra.mxu0 %v1958
        %2725 = vmatmul.f32.gmra.mxu0 %v2687
        %v2726 = vpop.f32.mrf.mxu0
        %v2727 = vadd.f32 0.0, %v2726
        %2728 = vdwg.mxu0
        %v2729 = vld [vmem:[#allocation2 + $0x5] ss:$0 sm:$0xff]
        %v2730 = vadd.f32 %v2729, %v2707
        %v2731 = vld [vmem:[#allocation2 + $0xa] ss:$0 sm:$0xff]
        %v2732 = vadd.f32 %v2731, %v2727
        %v2733 = vxor.u32 %v2730, 2147483648
        %v2734 = vmul.f32 %v2733, 1.442695
        %v2735 = vpow.pop %v2734
        %v2736 = vadd.f32 %v2735, 1.0
        %v2737 = vrcp.pop %v2736
        %v2738 = vmul.f32 %v2736, %v2737
        %v2739 = vsub.f32 1.0, %v2738
        %v2740 = vmul.f32 %v2737, %v2739
        %v2741 = vadd.f32 %v2737, %v2740
        %vm2742 = vweird.f32 %v2736
        %vm2743 = vweird.f32 %v2737
        %vm2744 = vmor %vm2742, %vm2743
        %v2745 = vsel %vm2744, %v2737, %v2741
        %v2746 = vand.u32 2147483647, %v2736
        %vm2747 = vcmp.eq.f32.partialorder %v2746, 8.507059e+37
        %v2748 = vand.u32 %v2736, 2147483648
        %v2749 = vor.u32 1.1754944e-38, %v2748
        %v2750 = vsel %vm2747, %v2749, %v2745
        %v2751 = vmul.f32 1.0, %v2750
        %v2752 = vtanh.pop %v2730
        %2754 = vrot.lane.b32.xlu0 %v2685, 32
        %v2755 = vpop.permute.xlu0 %2754
        %v2757 = vmul.f32 %v2751, %v2755
        %2759 = vrot.lane.b32.xlu0 %v2752, 64
        %v2760 = vpop.permute.xlu0 %2759
        %v2762 = vmul.f32 %v2751, %v2760
        %2764 = vrot.lane.b32.xlu0 %v2762, 32
        %v2765 = vpop.permute.xlu0 %2764
        %v2767 = vadd.f32 %v2757, %v2765
        %v2768 = vtanh.pop %v2767
        %2770 = vrot.lane.b32.xlu0 %v2768, 64
        %v2771 = vpop.permute.xlu0 %2770
        %v2773 = vmul.f32 %v2751, %v2771
        %v2774 = vxor.u32 %v2732, 2147483648
        %v2775 = vmul.f32 %v2774, 1.442695
        %v2776 = vpow.pop %v2775
        %v2777 = vadd.f32 %v2776, 1.0
        %v2778 = vrcp.pop %v2777
        %v2779 = vmul.f32 %v2777, %v2778
        %v2780 = vsub.f32 1.0, %v2779
        %v2781 = vmul.f32 %v2778, %v2780
        %v2782 = vadd.f32 %v2778, %v2781
        %vm2783 = vweird.f32 %v2777
        %vm2784 = vweird.f32 %v2778
        %vm2785 = vmor %vm2783, %vm2784
        %v2786 = vsel %vm2785, %v2778, %v2782
        %v2787 = vand.u32 2147483647, %v2777
        %vm2788 = vcmp.eq.f32.partialorder %v2787, 8.507059e+37
        %v2789 = vand.u32 %v2777, 2147483648
        %v2790 = vor.u32 1.1754944e-38, %v2789
        %v2791 = vsel %vm2788, %v2790, %v2786
        %v2792 = vmul.f32 1.0, %v2791
        %v2793 = vtanh.pop %v2732
        %v2794 = vmul.f32 %v2792, %v2685
        %2796 = vrot.lane.b32.xlu0 %v2793, 64
        %v2797 = vpop.permute.xlu0 %2796
        %v2799 = vmul.f32 %v2792, %v2797
        %2801 = vrot.lane.b32.xlu0 %v2799, 32
        %v2802 = vpop.permute.xlu0 %2801
        %v2804 = vadd.f32 %v2794, %v2802
        %v2805 = vtanh.pop %v2804
        %2807 = vrot.lane.b32.xlu0 %v2805, 64
        %v2808 = vpop.permute.xlu0 %2807
        %v2810 = vmul.f32 %v2792, %v2808
        %2812 = vrot.lane.b32.xlu0 %v2773, 32
        %v2813 = vpop.permute.xlu0 %2812
        %2815 = vst.msk [vmem:[#allocation3 + $0x5] sm:$0x1] %vm868, %v2813
        %2817 = vrot.lane.b32.xlu0 %v2810, 32
        %v2818 = vpop.permute.xlu0 %2817
        %2820 = vst.msk [vmem:[#allocation4 + $0x2] sm:$0x1] %vm868, %v2818
        %2821 = vrot.lane.b32.xlu0 %v2810, 64
        %v2822 = vpop.permute.xlu0 %2821
        %v2824 = vsel %vm680, %v2813, %v2822
        %2826 = vrot.lane.b32.xlu0 %v2767, 96
        %v2827 = vpop.permute.xlu0 %2826
        %v2829 = vsel %vm680, %v2827, %v2804
        %v2831 = vsel %vm742, %v2824, 0
        %2833 = vmatpush.msra.mxu0 0.0
        %2834 = vmatpush.msra.mxu0 0.0
        %2835 = vmatpush.msra.mxu0 0.0
        %2836 = vmatpush.msra.mxu0 0.0
        %2837 = vmatpush.msra.mxu0 0.0
        %2838 = vmatpush.msra.mxu0 0.0
        %2839 = vmatpush.msra.mxu0 0.0
        %2840 = vmatpush.msra.mxu0 0.0
        %2841 = vmatpush.msra.mxu0 %v1971
        %2842 = vmatpush.msra.mxu0 %v1969
        %2843 = vmatpush.msra.mxu0 %v1967
        %2844 = vmatpush.msra.mxu0 %v1965
        %2845 = vmatpush.msra.mxu0 %v1963
        %2846 = vmatpush.msra.mxu0 %v1961
        %2847 = vmatpush.msra.mxu0 %v1959
        %2848 = vmatpush.msra.mxu0 %v1957
        %2849 = vmatmul.f32.gmra.mxu0 %v2831
        %v2850 = vpop.f32.mrf.mxu0
        %v2851 = vadd.f32 0.0, %v2850
        %2852 = vdwg.mxu0
        %2853 = vmatpush.msra.mxu0 0.0
        %2854 = vmatpush.msra.mxu0 0.0
        %2855 = vmatpush.msra.mxu0 0.0
        %2856 = vmatpush.msra.mxu0 0.0
        %2857 = vmatpush.msra.mxu0 0.0
        %2858 = vmatpush.msra.mxu0 0.0
        %2859 = vmatpush.msra.mxu0 0.0
        %2860 = vmatpush.msra.mxu0 0.0
        %2861 = vmatpush.msra.mxu0 %v1972
        %2862 = vmatpush.msra.mxu0 %v1970
        %2863 = vmatpush.msra.mxu0 %v1968
        %2864 = vmatpush.msra.mxu0 %v1966
        %2865 = vmatpush.msra.mxu0 %v1964
        %2866 = vmatpush.msra.mxu0 %v1962
        %2867 = vmatpush.msra.mxu0 %v1960
        %2868 = vmatpush.msra.mxu0 %v1958
        %2869 = vmatmul.f32.gmra.mxu0 %v2831
        %v2870 = vpop.f32.mrf.mxu0
        %v2871 = vadd.f32 0.0, %v2870
        %2872 = vdwg.mxu0
        %v2873 = vld [vmem:[#allocation2 + $0x6] ss:$0 sm:$0xff]
        %v2874 = vadd.f32 %v2873, %v2851
        %v2875 = vld [vmem:[#allocation2 + $0x9] ss:$0 sm:$0xff]
        %v2876 = vadd.f32 %v2875, %v2871
        %v2877 = vxor.u32 %v2874, 2147483648
        %v2878 = vmul.f32 %v2877, 1.442695
        %v2879 = vpow.pop %v2878
        %v2880 = vadd.f32 %v2879, 1.0
        %v2881 = vrcp.pop %v2880
        %v2882 = vmul.f32 %v2880, %v2881
        %v2883 = vsub.f32 1.0, %v2882
        %v2884 = vmul.f32 %v2881, %v2883
        %v2885 = vadd.f32 %v2881, %v2884
        %vm2886 = vweird.f32 %v2880
        %vm2887 = vweird.f32 %v2881
        %vm2888 = vmor %vm2886, %vm2887
        %v2889 = vsel %vm2888, %v2881, %v2885
        %v2890 = vand.u32 2147483647, %v2880
        %vm2891 = vcmp.eq.f32.partialorder %v2890, 8.507059e+37
        %v2892 = vand.u32 %v2880, 2147483648
        %v2893 = vor.u32 1.1754944e-38, %v2892
        %v2894 = vsel %vm2891, %v2893, %v2889
        %v2895 = vmul.f32 1.0, %v2894
        %v2896 = vtanh.pop %v2874
        %2898 = vrot.lane.b32.xlu0 %v2829, 32
        %v2899 = vpop.permute.xlu0 %2898
        %v2901 = vmul.f32 %v2895, %v2899
        %2903 = vrot.lane.b32.xlu0 %v2896, 64
        %v2904 = vpop.permute.xlu0 %2903
        %v2906 = vmul.f32 %v2895, %v2904
        %2908 = vrot.lane.b32.xlu0 %v2906, 32
        %v2909 = vpop.permute.xlu0 %2908
        %v2911 = vadd.f32 %v2901, %v2909
        %v2912 = vtanh.pop %v2911
        %2914 = vrot.lane.b32.xlu0 %v2912, 64
        %v2915 = vpop.permute.xlu0 %2914
        %v2917 = vmul.f32 %v2895, %v2915
        %v2918 = vxor.u32 %v2876, 2147483648
        %v2919 = vmul.f32 %v2918, 1.442695
        %v2920 = vpow.pop %v2919
        %v2921 = vadd.f32 %v2920, 1.0
        %v2922 = vrcp.pop %v2921
        %v2923 = vmul.f32 %v2921, %v2922
        %v2924 = vsub.f32 1.0, %v2923
        %v2925 = vmul.f32 %v2922, %v2924
        %v2926 = vadd.f32 %v2922, %v2925
        %vm2927 = vweird.f32 %v2921
        %vm2928 = vweird.f32 %v2922
        %vm2929 = vmor %vm2927, %vm2928
        %v2930 = vsel %vm2929, %v2922, %v2926
        %v2931 = vand.u32 2147483647, %v2921
        %vm2932 = vcmp.eq.f32.partialorder %v2931, 8.507059e+37
        %v2933 = vand.u32 %v2921, 2147483648
        %v2934 = vor.u32 1.1754944e-38, %v2933
        %v2935 = vsel %vm2932, %v2934, %v2930
        %v2936 = vmul.f32 1.0, %v2935
        %v2937 = vtanh.pop %v2876
        %v2938 = vmul.f32 %v2936, %v2829
        %2940 = vrot.lane.b32.xlu0 %v2937, 64
        %v2941 = vpop.permute.xlu0 %2940
        %v2943 = vmul.f32 %v2936, %v2941
        %2945 = vrot.lane.b32.xlu0 %v2943, 32
        %v2946 = vpop.permute.xlu0 %2945
        %v2948 = vadd.f32 %v2938, %v2946
        %v2949 = vtanh.pop %v2948
        %2951 = vrot.lane.b32.xlu0 %v2949, 64
        %v2952 = vpop.permute.xlu0 %2951
        %v2954 = vmul.f32 %v2936, %v2952
        %2956 = vrot.lane.b32.xlu0 %v2917, 32
        %v2957 = vpop.permute.xlu0 %2956
        %2959 = vst.msk [vmem:[#allocation3 + $0x6] sm:$0x1] %vm868, %v2957
        %2961 = vrot.lane.b32.xlu0 %v2954, 32
        %v2962 = vpop.permute.xlu0 %2961
        %2964 = vst.msk [vmem:[#allocation4 + $0x1] sm:$0x1] %vm868, %v2962
        %2965 = vrot.lane.b32.xlu0 %v2954, 64
        %v2966 = vpop.permute.xlu0 %2965
        %v2968 = vsel %vm680, %v2957, %v2966
        %2970 = vrot.lane.b32.xlu0 %v2911, 96
        %v2971 = vpop.permute.xlu0 %2970
        %v2973 = vsel %vm680, %v2971, %v2948
        %v2975 = vsel %vm742, %v2968, 0
        %2977 = vmatpush.msra.mxu0 0.0
        %2978 = vmatpush.msra.mxu0 0.0
        %2979 = vmatpush.msra.mxu0 0.0
        %2980 = vmatpush.msra.mxu0 0.0
        %2981 = vmatpush.msra.mxu0 0.0
        %2982 = vmatpush.msra.mxu0 0.0
        %2983 = vmatpush.msra.mxu0 0.0
        %2984 = vmatpush.msra.mxu0 0.0
        %2985 = vmatpush.msra.mxu0 %v1971
        %2986 = vmatpush.msra.mxu0 %v1969
        %2987 = vmatpush.msra.mxu0 %v1967
        %2988 = vmatpush.msra.mxu0 %v1965
        %2989 = vmatpush.msra.mxu0 %v1963
        %2990 = vmatpush.msra.mxu0 %v1961
        %2991 = vmatpush.msra.mxu0 %v1959
        %2992 = vmatpush.msra.mxu0 %v1957
        %2993 = vmatmul.f32.gmra.mxu0 %v2975
        %v2994 = vpop.f32.mrf.mxu0
        %v2995 = vadd.f32 0.0, %v2994
        %2996 = vdwg.mxu0
        %2997 = vmatpush.msra.mxu0 0.0
        %2998 = vmatpush.msra.mxu0 0.0
        %2999 = vmatpush.msra.mxu0 0.0
        %3000 = vmatpush.msra.mxu0 0.0
        %3001 = vmatpush.msra.mxu0 0.0
        %3002 = vmatpush.msra.mxu0 0.0
        %3003 = vmatpush.msra.mxu0 0.0
        %3004 = vmatpush.msra.mxu0 0.0
        %3005 = vmatpush.msra.mxu0 %v1972
        %3006 = vmatpush.msra.mxu0 %v1970
        %3007 = vmatpush.msra.mxu0 %v1968
        %3008 = vmatpush.msra.mxu0 %v1966
        %3009 = vmatpush.msra.mxu0 %v1964
        %3010 = vmatpush.msra.mxu0 %v1962
        %3011 = vmatpush.msra.mxu0 %v1960
        %3012 = vmatpush.msra.mxu0 %v1958
        %3013 = vmatmul.f32.gmra.mxu0 %v2975
        %v3014 = vpop.f32.mrf.mxu0
        %v3015 = vadd.f32 0.0, %v3014
        %3016 = vdwg.mxu0
        %v3017 = vld [vmem:[#allocation2 + $0x7] ss:$0 sm:$0xff]
        %v3018 = vadd.f32 %v3017, %v2995
        %v3019 = vld [vmem:[#allocation2 + $0x8] ss:$0 sm:$0xff]
        %v3020 = vadd.f32 %v3019, %v3015
        %v3021 = vxor.u32 %v3018, 2147483648
        %v3022 = vmul.f32 %v3021, 1.442695
        %v3023 = vpow.pop %v3022
        %v3024 = vadd.f32 %v3023, 1.0
        %v3025 = vrcp.pop %v3024
        %v3026 = vmul.f32 %v3024, %v3025
        %v3027 = vsub.f32 1.0, %v3026
        %v3028 = vmul.f32 %v3025, %v3027
        %v3029 = vadd.f32 %v3025, %v3028
        %vm3030 = vweird.f32 %v3024
        %vm3031 = vweird.f32 %v3025
        %vm3032 = vmor %vm3030, %vm3031
        %v3033 = vsel %vm3032, %v3025, %v3029
        %v3034 = vand.u32 2147483647, %v3024
        %vm3035 = vcmp.eq.f32.partialorder %v3034, 8.507059e+37
        %v3036 = vand.u32 %v3024, 2147483648
        %v3037 = vor.u32 1.1754944e-38, %v3036
        %v3038 = vsel %vm3035, %v3037, %v3033
        %v3039 = vmul.f32 1.0, %v3038
        %v3040 = vtanh.pop %v3018
        %3042 = vrot.lane.b32.xlu0 %v2973, 32
        %v3043 = vpop.permute.xlu0 %3042
        %v3045 = vmul.f32 %v3039, %v3043
        %3047 = vrot.lane.b32.xlu0 %v3040, 64
        %v3048 = vpop.permute.xlu0 %3047
        %v3050 = vmul.f32 %v3039, %v3048
        %3052 = vrot.lane.b32.xlu0 %v3050, 32
        %v3053 = vpop.permute.xlu0 %3052
        %v3055 = vadd.f32 %v3045, %v3053
        %v3056 = vtanh.pop %v3055
        %3058 = vrot.lane.b32.xlu0 %v3056, 64
        %v3059 = vpop.permute.xlu0 %3058
        %v3061 = vmul.f32 %v3039, %v3059
        %v3062 = vxor.u32 %v3020, 2147483648
        %v3063 = vmul.f32 %v3062, 1.442695
        %v3064 = vpow.pop %v3063
        %v3065 = vadd.f32 %v3064, 1.0
        %v3066 = vrcp.pop %v3065
        %v3067 = vmul.f32 %v3065, %v3066
        %v3068 = vsub.f32 1.0, %v3067
        %v3069 = vmul.f32 %v3066, %v3068
        %v3070 = vadd.f32 %v3066, %v3069
        %vm3071 = vweird.f32 %v3065
        %vm3072 = vweird.f32 %v3066
        %vm3073 = vmor %vm3071, %vm3072
        %v3074 = vsel %vm3073, %v3066, %v3070
        %v3075 = vand.u32 2147483647, %v3065
        %vm3076 = vcmp.eq.f32.partialorder %v3075, 8.507059e+37
        %v3077 = vand.u32 %v3065, 2147483648
        %v3078 = vor.u32 1.1754944e-38, %v3077
        %v3079 = vsel %vm3076, %v3078, %v3074
        %v3080 = vmul.f32 1.0, %v3079
        %v3081 = vtanh.pop %v3020
        %v3082 = vmul.f32 %v3080, %v2973
        %3084 = vrot.lane.b32.xlu0 %v3081, 64
        %v3085 = vpop.permute.xlu0 %3084
        %v3087 = vmul.f32 %v3080, %v3085
        %3089 = vrot.lane.b32.xlu0 %v3087, 32
        %v3090 = vpop.permute.xlu0 %3089
        %v3092 = vadd.f32 %v3082, %v3090
        %v3093 = vtanh.pop %v3092
        %3095 = vrot.lane.b32.xlu0 %v3093, 64
        %v3096 = vpop.permute.xlu0 %3095
        %v3098 = vmul.f32 %v3080, %v3096
        %3100 = vrot.lane.b32.xlu0 %v3061, 32
        %v3101 = vpop.permute.xlu0 %3100
        %3103 = vst.msk [vmem:[#allocation3 + $0x7] sm:$0x1] %vm868, %v3101
        %3105 = vrot.lane.b32.xlu0 %v3098, 32
        %v3106 = vpop.permute.xlu0 %3105
        %3108 = vst.msk [vmem:[#allocation4] sm:$0x1] %vm868, %v3106
        %v3109 = vld [vmem:[#allocation3] sm:$0xff]
        %v3110 = vld [vmem:[#allocation4] sm:$0xff]
        %3112 = vrot.lane.b32.xlu0 %v3110, 32
        %v3113 = vpop.permute.xlu0 %3112
        %v3115 = vsel %vm680, %v3109, %v3113
        %v3116 = vld [vmem:[#allocation9] sm:$0xff]
        %v3117 = vld [vmem:[#allocation9 + $0x8] sm:$0xff]
        %v3118 = vld [vmem:[#allocation9 + $0x10] sm:$0xff]
        %v3119 = vld [vmem:[#allocation9 + $0x18] sm:$0xff]
        %v3120 = vld [vmem:[#allocation9 + $0x20] sm:$0xff]
        %v3121 = vld [vmem:[#allocation9 + $0x28] sm:$0xff]
        %v3122 = vld [vmem:[#allocation9 + $0x30] sm:$0xff]
        %v3123 = vld [vmem:[#allocation9 + $0x38] sm:$0xff]
        %v3124 = vld [vmem:[#allocation9 + $0x40] sm:$0xff]
        %v3125 = vld [vmem:[#allocation9 + $0x48] sm:$0xff]
        %v3126 = vld [vmem:[#allocation9 + $0x50] sm:$0xff]
        %v3127 = vld [vmem:[#allocation9 + $0x58] sm:$0xff]
        %v3128 = vld [vmem:[#allocation9 + $0x60] sm:$0xff]
        %v3129 = vld [vmem:[#allocation9 + $0x68] sm:$0xff]
        %v3130 = vld [vmem:[#allocation9 + $0x70] sm:$0xff]
        %v3131 = vld [vmem:[#allocation9 + $0x78] sm:$0xff]
        %v3132 = vld [vmem:[%s10] sm:$0x3]
        %v3134 = vperm.slane %v3132, 0
        %v3135 = vperm.slane %v3132, 1
        %v3139 = vsel %vm742, %v3115, 0
        %3141 = vmatpush.msra.mxu0 0.0
        %3142 = vmatpush.msra.mxu0 0.0
        %3143 = vmatpush.msra.mxu0 0.0
        %3144 = vmatpush.msra.mxu0 0.0
        %3145 = vmatpush.msra.mxu0 0.0
        %3146 = vmatpush.msra.mxu0 0.0
        %3147 = vmatpush.msra.mxu0 0.0
        %3148 = vmatpush.msra.mxu0 0.0
        %3149 = vmatpush.msra.mxu0 %v3130
        %3150 = vmatpush.msra.mxu0 %v3128
        %3151 = vmatpush.msra.mxu0 %v3126
        %3152 = vmatpush.msra.mxu0 %v3124
        %3153 = vmatpush.msra.mxu0 %v3122
        %3154 = vmatpush.msra.mxu0 %v3120
        %3155 = vmatpush.msra.mxu0 %v3118
        %3156 = vmatpush.msra.mxu0 %v3116
        %3157 = vmatmul.f32.gmra.mxu0 %v3139
        %v3158 = vpop.f32.mrf.mxu0
        %v3159 = vadd.f32 %v3134, %v3158
        %3160 = vdwg.mxu0
        %3161 = vmatpush.msra.mxu0 0.0
        %3162 = vmatpush.msra.mxu0 0.0
        %3163 = vmatpush.msra.mxu0 0.0
        %3164 = vmatpush.msra.mxu0 0.0
        %3165 = vmatpush.msra.mxu0 0.0
        %3166 = vmatpush.msra.mxu0 0.0
        %3167 = vmatpush.msra.mxu0 0.0
        %3168 = vmatpush.msra.mxu0 0.0
        %3169 = vmatpush.msra.mxu0 %v3131
        %3170 = vmatpush.msra.mxu0 %v3129
        %3171 = vmatpush.msra.mxu0 %v3127
        %3172 = vmatpush.msra.mxu0 %v3125
        %3173 = vmatpush.msra.mxu0 %v3123
        %3174 = vmatpush.msra.mxu0 %v3121
        %3175 = vmatpush.msra.mxu0 %v3119
        %3176 = vmatpush.msra.mxu0 %v3117
        %3177 = vmatmul.f32.gmra.mxu0 %v3139
        %v3178 = vpop.f32.mrf.mxu0
        %v3179 = vadd.f32 %v3135, %v3178
        %3180 = vdwg.mxu0
        %3182 = vrot.lane.b32.xlu0 %v3159, 120
        %v3183 = vpop.permute.xlu0 %3182
        %3184 = vrot.lane.b32.xlu0 %v3159, 112
        %v3185 = vpop.permute.xlu0 %3184
        %3186 = vrot.lane.b32.xlu0 %v3159, 104
        %v3187 = vpop.permute.xlu0 %3186
        %3188 = vrot.lane.b32.xlu0 %v3159, 96
        %v3189 = vpop.permute.xlu0 %3188
        %3190 = vrot.lane.b32.xlu0 %v3159, 88
        %v3191 = vpop.permute.xlu0 %3190
        %3192 = vrot.lane.b32.xlu0 %v3159, 80
        %v3193 = vpop.permute.xlu0 %3192
        %3194 = vrot.lane.b32.xlu0 %v3159, 72
        %v3195 = vpop.permute.xlu0 %3194
        %3197 = vrot.lane.b32.xlu0 %v3179, 120
        %v3198 = vpop.permute.xlu0 %3197
        %3200 = vrot.lane.b32.xlu0 %v3179, 112
        %v3201 = vpop.permute.xlu0 %3200
        %3203 = vrot.lane.b32.xlu0 %v3179, 104
        %v3204 = vpop.permute.xlu0 %3203
        %3206 = vrot.lane.b32.xlu0 %v3179, 96
        %v3207 = vpop.permute.xlu0 %3206
        %3209 = vrot.lane.b32.xlu0 %v3179, 88
        %v3210 = vpop.permute.xlu0 %3209
        %3212 = vrot.lane.b32.xlu0 %v3179, 80
        %v3213 = vpop.permute.xlu0 %3212
        %3215 = vrot.lane.b32.xlu0 %v3179, 72
        %v3216 = vpop.permute.xlu0 %3215
        %v3218 = vld [vmem:[%s653] sm:$0x1]
        %v3220 = vperm.slane %v3218, 0
        %3222 = vrot.lane.b32.xlu0 %v3159, 64
        %v3223 = vpop.permute.xlu0 %3222
        %vm3224 = vcmask 64512
        %v3225 = vsel %vm3224, %v3159, 0
        %v3227 = vsel %vm3224, %v3223, 0
        %3229 = vmatpush.xpose.msra.mxu0 0.0
        %3230 = vmatpush.xpose.msra.mxu0 0.0
        %3231 = vmatpush.xpose.msra.mxu0 0.0
        %3232 = vmatpush.xpose.msra.mxu0 0.0
        %3233 = vmatpush.xpose.msra.mxu0 0.0
        %3234 = vmatpush.xpose.msra.mxu0 0.0
        %3235 = vmatpush.xpose.msra.mxu0 0.0
        %3236 = vmatpush.xpose.msra.mxu0 0.0
        %3237 = vmatpush.xpose.msra.mxu0 0.0
        %3238 = vmatpush.xpose.msra.mxu0 0.0
        %3239 = vmatpush.xpose.msra.mxu0 0.0
        %3240 = vmatpush.xpose.msra.mxu0 0.0
        %3241 = vmatpush.xpose.msra.mxu0 0.0
        %3242 = vmatpush.xpose.msra.mxu0 0.0
        %3243 = vmatpush.xpose.msra.mxu0 0.0
        %3244 = vmatpush.xpose.msra.mxu0 %v3227
        %3245 = vmatmul.f32.gmra.mxu0 %v3225
        %v3246 = vpop.f32.mrf.mxu0
        %v3247 = vadd.f32 %v3220, %v3246
        %3248 = vdwg.mxu0
        %3249 = vrot.lane.b32.xlu0 %v3183, 64
        %v3250 = vpop.permute.xlu0 %3249
        %v3251 = vsel %vm3224, %v3183, 0
        %v3253 = vsel %vm3224, %v3250, 0
        %3255 = vmatpush.xpose.msra.mxu0 0.0
        %3256 = vmatpush.xpose.msra.mxu0 0.0
        %3257 = vmatpush.xpose.msra.mxu0 0.0
        %3258 = vmatpush.xpose.msra.mxu0 0.0
        %3259 = vmatpush.xpose.msra.mxu0 0.0
        %3260 = vmatpush.xpose.msra.mxu0 0.0
        %3261 = vmatpush.xpose.msra.mxu0 0.0
        %3262 = vmatpush.xpose.msra.mxu0 0.0
        %3263 = vmatpush.xpose.msra.mxu0 0.0
        %3264 = vmatpush.xpose.msra.mxu0 0.0
        %3265 = vmatpush.xpose.msra.mxu0 0.0
        %3266 = vmatpush.xpose.msra.mxu0 0.0
        %3267 = vmatpush.xpose.msra.mxu0 0.0
        %3268 = vmatpush.xpose.msra.mxu0 0.0
        %3269 = vmatpush.xpose.msra.mxu0 0.0
        %3270 = vmatpush.xpose.msra.mxu0 %v3253
        %3271 = vmatmul.f32.gmra.mxu0 %v3251
        %v3272 = vpop.f32.mrf.mxu0
        %v3273 = vadd.f32 %v3220, %v3272
        %3274 = vdwg.mxu0
        %3275 = vrot.lane.b32.xlu0 %v3185, 64
        %v3276 = vpop.permute.xlu0 %3275
        %v3277 = vsel %vm3224, %v3185, 0
        %v3279 = vsel %vm3224, %v3276, 0
        %3281 = vmatpush.xpose.msra.mxu0 0.0
        %3282 = vmatpush.xpose.msra.mxu0 0.0
        %3283 = vmatpush.xpose.msra.mxu0 0.0
        %3284 = vmatpush.xpose.msra.mxu0 0.0
        %3285 = vmatpush.xpose.msra.mxu0 0.0
        %3286 = vmatpush.xpose.msra.mxu0 0.0
        %3287 = vmatpush.xpose.msra.mxu0 0.0
        %3288 = vmatpush.xpose.msra.mxu0 0.0
        %3289 = vmatpush.xpose.msra.mxu0 0.0
        %3290 = vmatpush.xpose.msra.mxu0 0.0
        %3291 = vmatpush.xpose.msra.mxu0 0.0
        %3292 = vmatpush.xpose.msra.mxu0 0.0
        %3293 = vmatpush.xpose.msra.mxu0 0.0
        %3294 = vmatpush.xpose.msra.mxu0 0.0
        %3295 = vmatpush.xpose.msra.mxu0 0.0
        %3296 = vmatpush.xpose.msra.mxu0 %v3279
        %3297 = vmatmul.f32.gmra.mxu0 %v3277
        %v3298 = vpop.f32.mrf.mxu0
        %v3299 = vadd.f32 %v3220, %v3298
        %3300 = vdwg.mxu0
        %3301 = vrot.lane.b32.xlu0 %v3187, 64
        %v3302 = vpop.permute.xlu0 %3301
        %v3303 = vsel %vm3224, %v3187, 0
        %v3305 = vsel %vm3224, %v3302, 0
        %3307 = vmatpush.xpose.msra.mxu0 0.0
        %3308 = vmatpush.xpose.msra.mxu0 0.0
        %3309 = vmatpush.xpose.msra.mxu0 0.0
        %3310 = vmatpush.xpose.msra.mxu0 0.0
        %3311 = vmatpush.xpose.msra.mxu0 0.0
        %3312 = vmatpush.xpose.msra.mxu0 0.0
        %3313 = vmatpush.xpose.msra.mxu0 0.0
        %3314 = vmatpush.xpose.msra.mxu0 0.0
        %3315 = vmatpush.xpose.msra.mxu0 0.0
        %3316 = vmatpush.xpose.msra.mxu0 0.0
        %3317 = vmatpush.xpose.msra.mxu0 0.0
        %3318 = vmatpush.xpose.msra.mxu0 0.0
        %3319 = vmatpush.xpose.msra.mxu0 0.0
        %3320 = vmatpush.xpose.msra.mxu0 0.0
        %3321 = vmatpush.xpose.msra.mxu0 0.0
        %3322 = vmatpush.xpose.msra.mxu0 %v3305
        %3323 = vmatmul.f32.gmra.mxu0 %v3303
        %v3324 = vpop.f32.mrf.mxu0
        %v3325 = vadd.f32 %v3220, %v3324
        %3326 = vdwg.mxu0
        %3327 = vrot.lane.b32.xlu0 %v3189, 64
        %v3328 = vpop.permute.xlu0 %3327
        %v3329 = vsel %vm3224, %v3189, 0
        %v3331 = vsel %vm3224, %v3328, 0
        %3333 = vmatpush.xpose.msra.mxu0 0.0
        %3334 = vmatpush.xpose.msra.mxu0 0.0
        %3335 = vmatpush.xpose.msra.mxu0 0.0
        %3336 = vmatpush.xpose.msra.mxu0 0.0
        %3337 = vmatpush.xpose.msra.mxu0 0.0
        %3338 = vmatpush.xpose.msra.mxu0 0.0
        %3339 = vmatpush.xpose.msra.mxu0 0.0
        %3340 = vmatpush.xpose.msra.mxu0 0.0
        %3341 = vmatpush.xpose.msra.mxu0 0.0
        %3342 = vmatpush.xpose.msra.mxu0 0.0
        %3343 = vmatpush.xpose.msra.mxu0 0.0
        %3344 = vmatpush.xpose.msra.mxu0 0.0
        %3345 = vmatpush.xpose.msra.mxu0 0.0
        %3346 = vmatpush.xpose.msra.mxu0 0.0
        %3347 = vmatpush.xpose.msra.mxu0 0.0
        %3348 = vmatpush.xpose.msra.mxu0 %v3331
        %3349 = vmatmul.f32.gmra.mxu0 %v3329
        %v3350 = vpop.f32.mrf.mxu0
        %v3351 = vadd.f32 %v3220, %v3350
        %3352 = vdwg.mxu0
        %3353 = vrot.lane.b32.xlu0 %v3191, 64
        %v3354 = vpop.permute.xlu0 %3353
        %v3355 = vsel %vm3224, %v3191, 0
        %v3357 = vsel %vm3224, %v3354, 0
        %3359 = vmatpush.xpose.msra.mxu0 0.0
        %3360 = vmatpush.xpose.msra.mxu0 0.0
        %3361 = vmatpush.xpose.msra.mxu0 0.0
        %3362 = vmatpush.xpose.msra.mxu0 0.0
        %3363 = vmatpush.xpose.msra.mxu0 0.0
        %3364 = vmatpush.xpose.msra.mxu0 0.0
        %3365 = vmatpush.xpose.msra.mxu0 0.0
        %3366 = vmatpush.xpose.msra.mxu0 0.0
        %3367 = vmatpush.xpose.msra.mxu0 0.0
        %3368 = vmatpush.xpose.msra.mxu0 0.0
        %3369 = vmatpush.xpose.msra.mxu0 0.0
        %3370 = vmatpush.xpose.msra.mxu0 0.0
        %3371 = vmatpush.xpose.msra.mxu0 0.0
        %3372 = vmatpush.xpose.msra.mxu0 0.0
        %3373 = vmatpush.xpose.msra.mxu0 0.0
        %3374 = vmatpush.xpose.msra.mxu0 %v3357
        %3375 = vmatmul.f32.gmra.mxu0 %v3355
        %v3376 = vpop.f32.mrf.mxu0
        %v3377 = vadd.f32 %v3220, %v3376
        %3378 = vdwg.mxu0
        %3379 = vrot.lane.b32.xlu0 %v3193, 64
        %v3380 = vpop.permute.xlu0 %3379
        %v3381 = vsel %vm3224, %v3193, 0
        %v3383 = vsel %vm3224, %v3380, 0
        %3385 = vmatpush.xpose.msra.mxu0 0.0
        %3386 = vmatpush.xpose.msra.mxu0 0.0
        %3387 = vmatpush.xpose.msra.mxu0 0.0
        %3388 = vmatpush.xpose.msra.mxu0 0.0
        %3389 = vmatpush.xpose.msra.mxu0 0.0
        %3390 = vmatpush.xpose.msra.mxu0 0.0
        %3391 = vmatpush.xpose.msra.mxu0 0.0
        %3392 = vmatpush.xpose.msra.mxu0 0.0
        %3393 = vmatpush.xpose.msra.mxu0 0.0
        %3394 = vmatpush.xpose.msra.mxu0 0.0
        %3395 = vmatpush.xpose.msra.mxu0 0.0
        %3396 = vmatpush.xpose.msra.mxu0 0.0
        %3397 = vmatpush.xpose.msra.mxu0 0.0
        %3398 = vmatpush.xpose.msra.mxu0 0.0
        %3399 = vmatpush.xpose.msra.mxu0 0.0
        %3400 = vmatpush.xpose.msra.mxu0 %v3383
        %3401 = vmatmul.f32.gmra.mxu0 %v3381
        %v3402 = vpop.f32.mrf.mxu0
        %v3403 = vadd.f32 %v3220, %v3402
        %3404 = vdwg.mxu0
        %3405 = vrot.lane.b32.xlu0 %v3195, 64
        %v3406 = vpop.permute.xlu0 %3405
        %v3407 = vsel %vm3224, %v3195, 0
        %v3409 = vsel %vm3224, %v3406, 0
        %3411 = vmatpush.xpose.msra.mxu0 0.0
        %3412 = vmatpush.xpose.msra.mxu0 0.0
        %3413 = vmatpush.xpose.msra.mxu0 0.0
        %3414 = vmatpush.xpose.msra.mxu0 0.0
        %3415 = vmatpush.xpose.msra.mxu0 0.0
        %3416 = vmatpush.xpose.msra.mxu0 0.0
        %3417 = vmatpush.xpose.msra.mxu0 0.0
        %3418 = vmatpush.xpose.msra.mxu0 0.0
        %3419 = vmatpush.xpose.msra.mxu0 0.0
        %3420 = vmatpush.xpose.msra.mxu0 0.0
        %3421 = vmatpush.xpose.msra.mxu0 0.0
        %3422 = vmatpush.xpose.msra.mxu0 0.0
        %3423 = vmatpush.xpose.msra.mxu0 0.0
        %3424 = vmatpush.xpose.msra.mxu0 0.0
        %3425 = vmatpush.xpose.msra.mxu0 0.0
        %3426 = vmatpush.xpose.msra.mxu0 %v3409
        %3427 = vmatmul.f32.gmra.mxu0 %v3407
        %v3428 = vpop.f32.mrf.mxu0
        %v3429 = vadd.f32 %v3220, %v3428
        %3430 = vdwg.mxu0
        %v3431 = vsel %vm3224, %v3247, -inf
        %3432 = vmax.xlane.f32.xlu0 %v3431
        %v3433 = vpop.xlane.xlu0 %3432
        %v3434 = vsel %vm3224, %v3273, -inf
        %3435 = vmax.xlane.f32.xlu0 %v3434
        %v3436 = vpop.xlane.xlu0 %3435
        %v3437 = vsel %vm3224, %v3299, -inf
        %3438 = vmax.xlane.f32.xlu0 %v3437
        %v3439 = vpop.xlane.xlu0 %3438
        %v3440 = vsel %vm3224, %v3325, -inf
        %3441 = vmax.xlane.f32.xlu0 %v3440
        %v3442 = vpop.xlane.xlu0 %3441
        %v3443 = vsel %vm3224, %v3351, -inf
        %3444 = vmax.xlane.f32.xlu0 %v3443
        %v3445 = vpop.xlane.xlu0 %3444
        %v3446 = vsel %vm3224, %v3377, -inf
        %3447 = vmax.xlane.f32.xlu0 %v3446
        %v3448 = vpop.xlane.xlu0 %3447
        %v3449 = vsel %vm3224, %v3403, -inf
        %3450 = vmax.xlane.f32.xlu0 %v3449
        %v3451 = vpop.xlane.xlu0 %3450
        %v3452 = vsel %vm3224, %v3429, -inf
        %3453 = vmax.xlane.f32.xlu0 %v3452
        %v3454 = vpop.xlane.xlu0 %3453
        %v3455 = vsub.f32 %v3247, %v3433
        %v3456 = vsub.f32 %v3273, %v3436
        %v3457 = vsub.f32 %v3299, %v3439
        %v3458 = vsub.f32 %v3325, %v3442
        %v3459 = vsub.f32 %v3351, %v3445
        %v3460 = vsub.f32 %v3377, %v3448
        %v3461 = vsub.f32 %v3403, %v3451
        %v3462 = vsub.f32 %v3429, %v3454
        %v3463 = vmul.f32 %v3455, 1.442695
        %v3464 = vpow.pop %v3463
        %v3465 = vmul.f32 %v3456, 1.442695
        %v3466 = vpow.pop %v3465
        %v3467 = vmul.f32 %v3457, 1.442695
        %v3468 = vpow.pop %v3467
        %v3469 = vmul.f32 %v3458, 1.442695
        %v3470 = vpow.pop %v3469
        %v3471 = vmul.f32 %v3459, 1.442695
        %v3472 = vpow.pop %v3471
        %v3473 = vmul.f32 %v3460, 1.442695
        %v3474 = vpow.pop %v3473
        %v3475 = vmul.f32 %v3461, 1.442695
        %v3476 = vpow.pop %v3475
        %v3477 = vmul.f32 %v3462, 1.442695
        %v3478 = vpow.pop %v3477
        %v3479 = vsel %vm3224, %v3464, 0.0
        %3480 = vadd.xlane.f32.xlu0 %v3479
        %v3481 = vpop.xlane.xlu0 %3480
        %v3482 = vsel %vm3224, %v3466, 0.0
        %3483 = vadd.xlane.f32.xlu0 %v3482
        %v3484 = vpop.xlane.xlu0 %3483
        %v3485 = vsel %vm3224, %v3468, 0.0
        %3486 = vadd.xlane.f32.xlu0 %v3485
        %v3487 = vpop.xlane.xlu0 %3486
        %v3488 = vsel %vm3224, %v3470, 0.0
        %3489 = vadd.xlane.f32.xlu0 %v3488
        %v3490 = vpop.xlane.xlu0 %3489
        %v3491 = vsel %vm3224, %v3472, 0.0
        %3492 = vadd.xlane.f32.xlu0 %v3491
        %v3493 = vpop.xlane.xlu0 %3492
        %v3494 = vsel %vm3224, %v3474, 0.0
        %3495 = vadd.xlane.f32.xlu0 %v3494
        %v3496 = vpop.xlane.xlu0 %3495
        %v3497 = vsel %vm3224, %v3476, 0.0
        %3498 = vadd.xlane.f32.xlu0 %v3497
        %v3499 = vpop.xlane.xlu0 %3498
        %v3500 = vsel %vm3224, %v3478, 0.0
        %3501 = vadd.xlane.f32.xlu0 %v3500
        %v3502 = vpop.xlane.xlu0 %3501
        %v3503 = vrcp.pop %v3481
        %v3504 = vrcp.pop %v3484
        %v3505 = vrcp.pop %v3487
        %v3506 = vrcp.pop %v3490
        %v3507 = vrcp.pop %v3493
        %v3508 = vrcp.pop %v3496
        %v3509 = vrcp.pop %v3499
        %v3510 = vrcp.pop %v3502
        %v3511 = vmul.f32 %v3464, %v3503
        %v3512 = vmul.f32 %v3466, %v3504
        %v3513 = vmul.f32 %v3468, %v3505
        %v3514 = vmul.f32 %v3470, %v3506
        %v3515 = vmul.f32 %v3472, %v3507
        %v3516 = vmul.f32 %v3474, %v3508
        %v3517 = vmul.f32 %v3476, %v3509
        %v3518 = vmul.f32 %v3478, %v3510
        %v3520 = vsel %vm3224, %v3511, 0
        %3522 = vmatpush.msra.mxu0 0.0
        %3523 = vmatpush.msra.mxu0 0.0
        %3524 = vmatpush.msra.mxu0 0.0
        %3525 = vmatpush.msra.mxu0 0.0
        %3526 = vmatpush.msra.mxu0 0.0
        %3527 = vmatpush.msra.mxu0 0.0
        %3528 = vmatpush.msra.mxu0 0.0
        %3529 = vmatpush.msra.mxu0 0.0
        %3530 = vmatpush.msra.mxu0 0.0
        %3531 = vmatpush.msra.mxu0 0.0
        %3532 = vmatpush.msra.mxu0 0.0
        %3533 = vmatpush.msra.mxu0 0.0
        %3534 = vmatpush.msra.mxu0 0.0
        %3535 = vmatpush.msra.mxu0 0.0
        %3536 = vmatpush.msra.mxu0 0.0
        %3537 = vmatpush.msra.mxu0 %v3179
        %3538 = vmatmul.f32.gmra.mxu0 %v3520
        %v3539 = vpop.f32.mrf.mxu0
        %v3540 = vadd.f32 0.0, %v3539
        %3541 = vdwg.mxu0
        %v3543 = vsel %vm3224, %v3512, 0
        %3545 = vmatpush.msra.mxu0 0.0
        %3546 = vmatpush.msra.mxu0 0.0
        %3547 = vmatpush.msra.mxu0 0.0
        %3548 = vmatpush.msra.mxu0 0.0
        %3549 = vmatpush.msra.mxu0 0.0
        %3550 = vmatpush.msra.mxu0 0.0
        %3551 = vmatpush.msra.mxu0 0.0
        %3552 = vmatpush.msra.mxu0 0.0
        %3553 = vmatpush.msra.mxu0 0.0
        %3554 = vmatpush.msra.mxu0 0.0
        %3555 = vmatpush.msra.mxu0 0.0
        %3556 = vmatpush.msra.mxu0 0.0
        %3557 = vmatpush.msra.mxu0 0.0
        %3558 = vmatpush.msra.mxu0 0.0
        %3559 = vmatpush.msra.mxu0 0.0
        %3560 = vmatpush.msra.mxu0 %v3198
        %3561 = vmatmul.f32.gmra.mxu0 %v3543
        %v3562 = vpop.f32.mrf.mxu0
        %v3563 = vadd.f32 0.0, %v3562
        %3564 = vdwg.mxu0
        %v3566 = vsel %vm3224, %v3513, 0
        %3568 = vmatpush.msra.mxu0 0.0
        %3569 = vmatpush.msra.mxu0 0.0
        %3570 = vmatpush.msra.mxu0 0.0
        %3571 = vmatpush.msra.mxu0 0.0
        %3572 = vmatpush.msra.mxu0 0.0
        %3573 = vmatpush.msra.mxu0 0.0
        %3574 = vmatpush.msra.mxu0 0.0
        %3575 = vmatpush.msra.mxu0 0.0
        %3576 = vmatpush.msra.mxu0 0.0
        %3577 = vmatpush.msra.mxu0 0.0
        %3578 = vmatpush.msra.mxu0 0.0
        %3579 = vmatpush.msra.mxu0 0.0
        %3580 = vmatpush.msra.mxu0 0.0
        %3581 = vmatpush.msra.mxu0 0.0
        %3582 = vmatpush.msra.mxu0 0.0
        %3583 = vmatpush.msra.mxu0 %v3201
        %3584 = vmatmul.f32.gmra.mxu0 %v3566
        %v3585 = vpop.f32.mrf.mxu0
        %v3586 = vadd.f32 0.0, %v3585
        %3587 = vdwg.mxu0
        %v3589 = vsel %vm3224, %v3514, 0
        %3591 = vmatpush.msra.mxu0 0.0
        %3592 = vmatpush.msra.mxu0 0.0
        %3593 = vmatpush.msra.mxu0 0.0
        %3594 = vmatpush.msra.mxu0 0.0
        %3595 = vmatpush.msra.mxu0 0.0
        %3596 = vmatpush.msra.mxu0 0.0
        %3597 = vmatpush.msra.mxu0 0.0
        %3598 = vmatpush.msra.mxu0 0.0
        %3599 = vmatpush.msra.mxu0 0.0
        %3600 = vmatpush.msra.mxu0 0.0
        %3601 = vmatpush.msra.mxu0 0.0
        %3602 = vmatpush.msra.mxu0 0.0
        %3603 = vmatpush.msra.mxu0 0.0
        %3604 = vmatpush.msra.mxu0 0.0
        %3605 = vmatpush.msra.mxu0 0.0
        %3606 = vmatpush.msra.mxu0 %v3204
        %3607 = vmatmul.f32.gmra.mxu0 %v3589
        %v3608 = vpop.f32.mrf.mxu0
        %v3609 = vadd.f32 0.0, %v3608
        %3610 = vdwg.mxu0
        %v3612 = vsel %vm3224, %v3515, 0
        %3614 = vmatpush.msra.mxu0 0.0
        %3615 = vmatpush.msra.mxu0 0.0
        %3616 = vmatpush.msra.mxu0 0.0
        %3617 = vmatpush.msra.mxu0 0.0
        %3618 = vmatpush.msra.mxu0 0.0
        %3619 = vmatpush.msra.mxu0 0.0
        %3620 = vmatpush.msra.mxu0 0.0
        %3621 = vmatpush.msra.mxu0 0.0
        %3622 = vmatpush.msra.mxu0 0.0
        %3623 = vmatpush.msra.mxu0 0.0
        %3624 = vmatpush.msra.mxu0 0.0
        %3625 = vmatpush.msra.mxu0 0.0
        %3626 = vmatpush.msra.mxu0 0.0
        %3627 = vmatpush.msra.mxu0 0.0
        %3628 = vmatpush.msra.mxu0 0.0
        %3629 = vmatpush.msra.mxu0 %v3207
        %3630 = vmatmul.f32.gmra.mxu0 %v3612
        %v3631 = vpop.f32.mrf.mxu0
        %v3632 = vadd.f32 0.0, %v3631
        %3633 = vdwg.mxu0
        %v3635 = vsel %vm3224, %v3516, 0
        %3637 = vmatpush.msra.mxu0 0.0
        %3638 = vmatpush.msra.mxu0 0.0
        %3639 = vmatpush.msra.mxu0 0.0
        %3640 = vmatpush.msra.mxu0 0.0
        %3641 = vmatpush.msra.mxu0 0.0
        %3642 = vmatpush.msra.mxu0 0.0
        %3643 = vmatpush.msra.mxu0 0.0
        %3644 = vmatpush.msra.mxu0 0.0
        %3645 = vmatpush.msra.mxu0 0.0
        %3646 = vmatpush.msra.mxu0 0.0
        %3647 = vmatpush.msra.mxu0 0.0
        %3648 = vmatpush.msra.mxu0 0.0
        %3649 = vmatpush.msra.mxu0 0.0
        %3650 = vmatpush.msra.mxu0 0.0
        %3651 = vmatpush.msra.mxu0 0.0
        %3652 = vmatpush.msra.mxu0 %v3210
        %3653 = vmatmul.f32.gmra.mxu0 %v3635
        %v3654 = vpop.f32.mrf.mxu0
        %v3655 = vadd.f32 0.0, %v3654
        %3656 = vdwg.mxu0
        %v3658 = vsel %vm3224, %v3517, 0
        %3660 = vmatpush.msra.mxu0 0.0
        %3661 = vmatpush.msra.mxu0 0.0
        %3662 = vmatpush.msra.mxu0 0.0
        %3663 = vmatpush.msra.mxu0 0.0
        %3664 = vmatpush.msra.mxu0 0.0
        %3665 = vmatpush.msra.mxu0 0.0
        %3666 = vmatpush.msra.mxu0 0.0
        %3667 = vmatpush.msra.mxu0 0.0
        %3668 = vmatpush.msra.mxu0 0.0
        %3669 = vmatpush.msra.mxu0 0.0
        %3670 = vmatpush.msra.mxu0 0.0
        %3671 = vmatpush.msra.mxu0 0.0
        %3672 = vmatpush.msra.mxu0 0.0
        %3673 = vmatpush.msra.mxu0 0.0
        %3674 = vmatpush.msra.mxu0 0.0
        %3675 = vmatpush.msra.mxu0 %v3213
        %3676 = vmatmul.f32.gmra.mxu0 %v3658
        %v3677 = vpop.f32.mrf.mxu0
        %v3678 = vadd.f32 0.0, %v3677
        %3679 = vdwg.mxu0
        %v3681 = vsel %vm3224, %v3518, 0
        %3683 = vmatpush.msra.mxu0 0.0
        %3684 = vmatpush.msra.mxu0 0.0
        %3685 = vmatpush.msra.mxu0 0.0
        %3686 = vmatpush.msra.mxu0 0.0
        %3687 = vmatpush.msra.mxu0 0.0
        %3688 = vmatpush.msra.mxu0 0.0
        %3689 = vmatpush.msra.mxu0 0.0
        %3690 = vmatpush.msra.mxu0 0.0
        %3691 = vmatpush.msra.mxu0 0.0
        %3692 = vmatpush.msra.mxu0 0.0
        %3693 = vmatpush.msra.mxu0 0.0
        %3694 = vmatpush.msra.mxu0 0.0
        %3695 = vmatpush.msra.mxu0 0.0
        %3696 = vmatpush.msra.mxu0 0.0
        %3697 = vmatpush.msra.mxu0 0.0
        %3698 = vmatpush.msra.mxu0 %v3216
        %3699 = vmatmul.f32.gmra.mxu0 %v3681
        %v3700 = vpop.f32.mrf.mxu0
        %v3701 = vadd.f32 0.0, %v3700
        %3702 = vdwg.mxu0
        %3704 = vrot.lane.b32.xlu0 %v3563, 8
        %v3705 = vpop.permute.xlu0 %3704
        %3708 = vrot.lane.b32.xlu0 %v3586, 16
        %v3709 = vpop.permute.xlu0 %3708
        %3712 = vrot.lane.b32.xlu0 %v3609, 24
        %v3713 = vpop.permute.xlu0 %3712
        %3716 = vrot.lane.b32.xlu0 %v3632, 32
        %v3717 = vpop.permute.xlu0 %3716
        %3720 = vrot.lane.b32.xlu0 %v3655, 40
        %v3721 = vpop.permute.xlu0 %3720
        %3724 = vrot.lane.b32.xlu0 %v3678, 48
        %v3725 = vpop.permute.xlu0 %3724
        %3728 = vrot.lane.b32.xlu0 %v3701, 56
        %v3729 = vpop.permute.xlu0 %3728
        %v3731 = vsel %vm3224, %v3540, %v3705
        %vm3732 = vcmask 130048
        %v3733 = vsel %vm3732, %v3731, %v3709
        %vm3734 = vcmask 195584
        %v3735 = vsel %vm3734, %v3733, %v3713
        %v3736 = vsel %vm680, %v3735, %v3717
        %vm3737 = vcmask 326656
        %v3738 = vsel %vm3737, %v3736, %v3721
        %vm3739 = vcmask 392192
        %v3740 = vsel %vm3739, %v3738, %v3725
        %vm3741 = vcmask 457728
        %v3742 = vsel %vm3741, %v3740, %v3729
        %v3743 = vld [vmem:[#allocation10] sm:$0xff]
        %v3744 = vld [vmem:[#allocation10 + $0x8] sm:$0xff]
        %v3745 = vld [vmem:[#allocation10 + $0x10] sm:$0xff]
        %v3746 = vld [vmem:[#allocation10 + $0x18] sm:$0xff]
        %v3747 = vld [vmem:[#allocation10 + $0x20] sm:$0xff]
        %v3748 = vld [vmem:[#allocation10 + $0x28] sm:$0xff]
        %v3749 = vld [vmem:[#allocation10 + $0x30] sm:$0xff]
        %v3750 = vld [vmem:[#allocation10 + $0x38] sm:$0xff]
        %v3751 = vld [vmem:[%s12] sm:$0x1]
        %v3753 = vperm.slane %v3751, 0
        %v3756 = vsel %vm742, %v3742, 0
        %3758 = vmatpush.msra.mxu0 0.0
        %3759 = vmatpush.msra.mxu0 0.0
        %3760 = vmatpush.msra.mxu0 0.0
        %3761 = vmatpush.msra.mxu0 0.0
        %3762 = vmatpush.msra.mxu0 0.0
        %3763 = vmatpush.msra.mxu0 0.0
        %3764 = vmatpush.msra.mxu0 0.0
        %3765 = vmatpush.msra.mxu0 0.0
        %3766 = vmatpush.msra.mxu0 %v3750
        %3767 = vmatpush.msra.mxu0 %v3749
        %3768 = vmatpush.msra.mxu0 %v3748
        %3769 = vmatpush.msra.mxu0 %v3747
        %3770 = vmatpush.msra.mxu0 %v3746
        %3771 = vmatpush.msra.mxu0 %v3745
        %3772 = vmatpush.msra.mxu0 %v3744
        %3773 = vmatpush.msra.mxu0 %v3743
        %3774 = vmatmul.f32.gmra.mxu0 %v3756
        %v3775 = vpop.f32.mrf.mxu0
        %v3776 = vadd.f32 %v3753, %v3775
        %3777 = vdwg.mxu0
        %v3778 = vsel %vm742, %v3776, 0.0
        %3779 = vadd.xlane.f32.xlu0 %v3778
        %v3780 = vpop.xlane.xlu0 %3779
        %v3781 = vrcp.pop 64.0
        %v3782 = vmul.f32 64.0, %v3781
        %v3783 = vsub.f32 1.0, %v3782
        %v3784 = vmul.f32 %v3781, %v3783
        %v3785 = vadd.f32 %v3781, %v3784
        %vm3786 = vweird.f32 %v3781
        %v3787 = vsel %vm3786, %v3781, %v3785
        %v3788 = vmul.f32 %v3780, %v3787
        %v3789 = vsub.f32 %v3776, %v3788
        %v3790 = vmul.f32 %v3789, %v3789
        %v3791 = vsel %vm742, %v3790, 0.0
        %3792 = vadd.xlane.f32.xlu0 %v3791
        %v3793 = vpop.xlane.xlu0 %3792
        %v3794 = vmul.f32 %v3793, %v3787
        %v3795 = vadd.f32 %v3794, 1e-05
        %v3796 = vrsqrt.pop %v3795
        %v3797 = vmul.f32 %v3796, %v3795
        %v3798 = vmul.f32 %v3797, %v3796
        %v3799 = vmul.f32 0.5, %v3798
        %v3800 = vsub.f32 1.5, %v3799
        %v3801 = vmul.f32 %v3796, %v3800
        %vm3802 = vweird.f32 %v3795
        %vm3803 = vweird.f32 %v3796
        %vm3804 = vmor %vm3802, %vm3803
        %v3805 = vsel %vm3804, %v3796, %v3801
        %v3806 = vmul.f32 %v3789, %v3805
        %v3807 = vld [vmem:[%s13] sm:$0x1]
        %v3809 = vperm.slane %v3807, 0
        %v3811 = vmul.f32 %v3806, %v3809
        %v3812 = vld [vmem:[%s14] sm:$0x1]
        %v3814 = vperm.slane %v3812, 0
        %v3816 = vadd.f32 %v3811, %v3814
        %v3817 = vld [vmem:[#allocation12] sm:$0xff]
        %v3818 = vld [vmem:[#allocation12 + $0x8] sm:$0xff]
        %v3819 = vld [vmem:[#allocation12 + $0x10] sm:$0xff]
        %v3820 = vld [vmem:[#allocation12 + $0x18] sm:$0xff]
        %v3821 = vld [vmem:[#allocation12 + $0x20] sm:$0xff]
        %v3822 = vld [vmem:[#allocation12 + $0x28] sm:$0xff]
        %v3823 = vld [vmem:[#allocation12 + $0x30] sm:$0xff]
        %v3824 = vld [vmem:[#allocation12 + $0x38] sm:$0xff]
        %v3825 = vld [vmem:[%s16] sm:$0x1]
        %v3827 = vperm.slane %v3825, 0
        %v3830 = vsel %vm742, %v3816, 0
        %3832 = vmatpush.msra.mxu0 0.0
        %3833 = vmatpush.msra.mxu0 0.0
        %3834 = vmatpush.msra.mxu0 0.0
        %3835 = vmatpush.msra.mxu0 0.0
        %3836 = vmatpush.msra.mxu0 0.0
        %3837 = vmatpush.msra.mxu0 0.0
        %3838 = vmatpush.msra.mxu0 0.0
        %3839 = vmatpush.msra.mxu0 0.0
        %3840 = vmatpush.msra.mxu0 %v3824
        %3841 = vmatpush.msra.mxu0 %v3823
        %3842 = vmatpush.msra.mxu0 %v3822
        %3843 = vmatpush.msra.mxu0 %v3821
        %3844 = vmatpush.msra.mxu0 %v3820
        %3845 = vmatpush.msra.mxu0 %v3819
        %3846 = vmatpush.msra.mxu0 %v3818
        %3847 = vmatpush.msra.mxu0 %v3817
        %3848 = vmatmul.f32.gmra.mxu0 %v3830
        %v3849 = vpop.f32.mrf.mxu0
        %v3850 = vadd.f32 %v3827, %v3849
        %3851 = vdwg.mxu0
        %3852 = vst [vmem:[%s657] sm:$0xff] %v3850
        %p3853 = scmp.lt.s32.totalorder %s31, 1
        %s3854 = scalar_select %p3853, %s31, 1
        %s3855 = smul.addr %s3854, 8
        %s3856 = scalar_lea.vmem %s17, %s3855
        // Predicated region
        $region109: #{forward.1} parent=87 // pred_check
          %p3857 = pneg %p421
        $region110: #{forward.1} parent=87 // pred_check_branch
          %3859 = sbr.rel (%p3857) target = $region112
        $region111: #{forward.1} parent=87 // pred_region
          _
        $region112: #{forward.1} parent=87 // pred_fallthru
          _
      $region88: #{forward.1} parent=5 // pred_fallthru
        _
      %p3860 = scmp.le.s32.totalorder 2, %s26
      // Predicated region
      $region113: #{forward.1} parent=5 // pred_check
        %p3861 = pneg %p3860
      $region114: #{forward.1} parent=5 // pred_check_branch
        %3863 = sbr.rel (%p3861) target = $region116
      $region115: #{forward.1} parent=5 // pred_region
        %s3864 = ssub.s32 %s26, 2
        // Predicated region
        $region117: #{forward.1} parent=115 // pred_check
          %p3865 = pneg %p427
        $region118: #{forward.1} parent=115 // pred_check_branch
          %3867 = sbr.rel (%p3865) target = $region120
        $region119: #{forward.1} parent=115 // pred_region
          %p3868 = scmp.lt.s32.totalorder %s32, 1
          %s3869 = scalar_select %p3868, %s32, 1
          %s3870 = smul.addr %s3869, 8
          %s3871 = scalar_lea.vmem %s17, %s3870
        $region120: #{forward.1} parent=115 // pred_fallthru
          _
      $region116: #{forward.1} parent=5 // pred_fallthru
        _
    $region6: #{forward.1} parent=1 // loop_footer
      %s30 = sadd.s32 1, %s26
    $region7: #{forward.1} parent=1 // loop_footer_branch
      %25 = sbr.rel target = $region3
    $region8: #{forward.1} parent=1 // loop_exit
      _
    %3872 = vsyncpa [#allocation6], 1
    %s3873 = scalar_lea.sflag [#allocation6], 1
    %3874 = vsyncpa %s3873, 1
    %3875 = vsyncpa [#allocation8], 1
    %3876 = vsyncpa [#allocation11], 1

</llo_original>
